<compile_context>
chip_gen: v7x
topology: tpu7x:2x2x1
jax: 0.10.0
libtpu: 0.0.40
codegen_flags: <defaults>
</compile_context>

<pallas_src>
import jax
import jax.numpy as jnp
from jax.experimental import pallas as pl
from jax.experimental.pallas import tpu as pltpu


# ----------------------------------------------------------------------------
# Pallas kernel (batch on the lane axis)
# ----------------------------------------------------------------------------
def _encdec_kernel(seqs_ref, mask_ref,
                   e_wih_ref, e_whh_ref, e_bgi_ref, e_bhhn_ref,
                   attn_w_ref, attn_b_ref,
                   d_wih_ref, d_whh_ref, d_bgi_ref, d_bhhn_ref,
                   out_w_ref, out_b_ref,
                   pred_ref, e_out_ref, alpha_out_ref):
    T, D, BB = seqs_ref.shape          # seqs block: (T, D, block_b)
    ThreeH, H = e_whh_ref.shape        # fused recurrent weights: (3H, H)
    WK = pred_ref.shape[0]             # pred block: (WK, block_b)
    f32 = jnp.float32

    # ---------------- hoisted weights / broadcast constants -------------------
    e_wih = e_wih_ref[...]                                     # (3H, D)
    e_whh = e_whh_ref[...]                                     # (3H, H) fused r|z|n
    e_bgi_b = jnp.broadcast_to(e_bgi_ref[...], (ThreeH, BB))   # combined gi biases
    e_bhhn_b = jnp.broadcast_to(e_bhhn_ref[...], (H, BB))      # b_hh (n gate)
    attn_w_b = jnp.broadcast_to(attn_w_ref[...], (H, BB))
    attn_b = attn_b_ref[0]                                     # scalar from SMEM

    # ---------------- encoder input projection (off the serial chain) ---------
    # One (3H, D) @ (D, BB) matmul per time step, biases pre-added.  The trace is
    # fully unrolled, so these have no dependence on the recurrence and overlap.
    gi_list = [jnp.dot(e_wih, seqs_ref[t], preferred_element_type=f32) + e_bgi_b
               for t in range(T)]                              # T x (3H, BB)

    # ---------------- encoder GRU, fully unrolled (T static & small) ----------
    h = jnp.zeros((H, BB), f32)
    hs = []
    es = []
    for t in range(T):
        gi = gi_list[t]
        # single fused recurrent matmul: 1 MXU push per serial step
        gh = jnp.dot(e_whh, h, preferred_element_type=f32)     # (3H, BB)
        r = jax.nn.sigmoid(gi[0:H] + gh[0:H])
        z = jax.nn.sigmoid(gi[H:2 * H] + gh[H:2 * H])
        n = jnp.tanh(gi[2 * H:3 * H] + r * (gh[2 * H:3 * H] + e_bhhn_b))
        h = (1.0 - z) * n + z * h
        hs.append(h)
        # per-step attention energy: VPU multiply + XLU sublane reduce
        es.append(jnp.sum(h * attn_w_b, axis=0, keepdims=True))   # (1, BB)

    # ---------------- attention: masked softmax over time (sublane axis) ------
    e_tb = jnp.concatenate(es, axis=0) + attn_b                # (T, BB), lane-dense
    e_out_ref[...] = e_tb

    mask = mask_ref[...]                                       # (T, BB)
    logits = jnp.where(mask > 0, e_tb, f32(-1e30))
    m = jnp.max(logits, axis=0, keepdims=True)
    p = jnp.exp(logits - m)
    alpha = p / jnp.sum(p, axis=0, keepdims=True)              # (T, BB)
    alpha_out_ref[...] = alpha

    # context vector: alpha-weighted sum of encoder hidden states
    c = jnp.zeros((H, BB), f32)
    for t in range(T):
        c = c + alpha[t:t + 1, :] * hs[t]                      # sublane-broadcast row

    # ---------------- decoder GRU, fully unrolled (WK static & small) ---------
    d_wih_b = jnp.broadcast_to(d_wih_ref[...], (ThreeH, BB))   # (3H, BB) (input dim = 1)
    d_whh = d_whh_ref[...]                                     # (3H, H) fused r|z|n
    d_bgi_b = jnp.broadcast_to(d_bgi_ref[...], (ThreeH, BB))
    d_bhhn_b = jnp.broadcast_to(d_bhhn_ref[...], (H, BB))
    out_w_b = jnp.broadcast_to(out_w_ref[...], (H, BB))
    out_b = out_b_ref[0]                                       # scalar from SMEM

    dh = c
    dx = jnp.zeros((1, BB), f32)
    preds = []
    # TODO(synk): teacher forcing with `ys` not implemented; free-running feedback only.
    for _ in range(WK):
        # rank-1 input projection on the VPU (no MXU push on the serial chain)
        gi = d_wih_b * dx + d_bgi_b                            # (3H, BB)
        # single fused recurrent matmul per step
        gh = jnp.dot(d_whh, dh, preferred_element_type=f32)    # (3H, BB)
        r = jax.nn.sigmoid(gi[0:H] + gh[0:H])
        z = jax.nn.sigmoid(gi[H:2 * H] + gh[H:2 * H])
        n = jnp.tanh(gi[2 * H:3 * H] + r * (gh[2 * H:3 * H] + d_bhhn_b))
        dh = (1.0 - z) * n + z * dh
        # output projection on VPU/XLU instead of a 1-row matmul
        y = jnp.sum(dh * out_w_b, axis=0, keepdims=True) + out_b   # (1, BB)
        preds.append(y)
        dx = y

    # single lane-dense store of all predictions
    pred_ref[...] = jnp.concatenate(preds, axis=0)             # (WK, BB)


# ----------------------------------------------------------------------------
# Wrapper
# ----------------------------------------------------------------------------
def input_encoder_decoder(params, seqs, mask_seq, wk_ahead, get_att=False, block_b=None):
    """seqs: (B, T, n_signals) float32, mask_seq: (B, T) float32 of 0/1."""
    B, T, D = seqs.shape
    H = params["enc_w_hh"].shape[1]
    f32 = jnp.float32

    # Default: whole batch in one grid step (best for single-TC v5e/v6e).
    # On v7x with large B, pass block_b = B//2 (a multiple of 128) so the
    # "parallel" grid axis can shard across both TensorCores and the per-block
    # VMEM working set stays bounded.
    if block_b is None:
        block_b = B
    assert B % block_b == 0, "batch must be divisible by the batch block"
    if block_b != B:
        assert block_b % 128 == 0, \
            "batch block is the lane axis; it must be a multiple of 128 when splitting"
    nb = B // block_b

    # batch-last (lane-dense) input layouts
    seqs_tdb = jnp.transpose(seqs, (1, 2, 0)).astype(f32)      # (T, D, B)
    mask_tb = jnp.transpose(mask_seq, (1, 0)).astype(f32)      # (T, B)

    def gi_bias(b_ih, b_hh):
        # combined input-side gate biases: [bih_r+bhh_r | bih_z+bhh_z | bih_n]
        b_ih = b_ih.astype(f32)
        b_hh = b_hh.astype(f32)
        return jnp.concatenate([b_ih[:H] + b_hh[:H],
                                b_ih[H:2 * H] + b_hh[H:2 * H],
                                b_ih[2 * H:]]).reshape(3 * H, 1)

    # weights stay in PyTorch (3H, in) orientation: gates fused on sublanes
    e_wih = params["enc_w_ih"].astype(f32)                     # (3H, D)
    e_whh = params["enc_w_hh"].astype(f32)                     # (3H, H)
    e_bgi = gi_bias(params["enc_b_ih"], params["enc_b_hh"])    # (3H, 1)
    e_bhhn = params["enc_b_hh"].astype(f32)[2 * H:].reshape(H, 1)

    d_wih = params["dec_w_ih"].astype(f32).reshape(3 * H, 1)   # (3H, 1) (input dim = 1)
    d_whh = params["dec_w_hh"].astype(f32)                     # (3H, H)
    d_bgi = gi_bias(params["dec_b_ih"], params["dec_b_hh"])    # (3H, 1)
    d_bhhn = params["dec_b_hh"].astype(f32)[2 * H:].reshape(H, 1)

    attn_w = params["attn_w"].astype(f32).reshape(H, 1)        # (H, 1)
    attn_b = params["attn_b"].astype(f32).reshape(1)           # (1,)
    out_w = params["out_w"].astype(f32).reshape(H, 1)          # (H, 1)
    out_b = params["out_b"].astype(f32).reshape(1)             # (1,)

    def rep(shape):   # whole-array, grid-invariant VMEM block
        return pl.BlockSpec(shape, lambda i, _n=len(shape): (0,) * _n)

    def smem():
        return pl.BlockSpec(memory_space=pltpu.MemorySpace.SMEM)

    pred_tb, e_tb, alpha_tb = pl.pallas_call(
        _encdec_kernel,
        grid=(nb,),
        out_shape=(
            jax.ShapeDtypeStruct((wk_ahead, B), f32),
            jax.ShapeDtypeStruct((T, B), f32),
            jax.ShapeDtypeStruct((T, B), f32),
        ),
        in_specs=[
            pl.BlockSpec((T, D, block_b), lambda i: (0, 0, i)),   # seqs (batch on lanes)
            pl.BlockSpec((T, block_b), lambda i: (0, i)),         # mask (batch on lanes)
            rep((3 * H, D)),       # encoder W_ih (gates fused on sublanes)
            rep((3 * H, H)),       # encoder W_hh (gates fused on sublanes)
            rep((3 * H, 1)),       # encoder combined gi biases
            rep((H, 1)),           # encoder b_hh (n gate)
            rep((H, 1)),           # attention weight (column)
            smem(),                # attention bias (scalar, SMEM)
            rep((3 * H, 1)),       # decoder W_ih column (input dim 1)
            rep((3 * H, H)),       # decoder W_hh (gates fused on sublanes)
            rep((3 * H, 1)),       # decoder combined gi biases
            rep((H, 1)),           # decoder b_hh (n gate)
            rep((H, 1)),           # output weight (column)
            smem(),                # output bias (scalar, SMEM)
        ],
        out_specs=(
            pl.BlockSpec((wk_ahead, block_b), lambda i: (0, i)),
            pl.BlockSpec((T, block_b), lambda i: (0, i)),
            pl.BlockSpec((T, block_b), lambda i: (0, i)),
        ),
        compiler_params=pltpu.CompilerParams(
            dimension_semantics=("parallel",)),
    )(seqs_tdb, mask_tb, e_wih, e_whh, e_bgi, e_bhhn, attn_w, attn_b,
      d_wih, d_whh, d_bgi, d_bhhn, out_w, out_b)

    # back to batch-major for the caller
    preds = jnp.transpose(pred_tb, (1, 0))                     # (B, WK)
    e_vals = jnp.transpose(e_tb, (1, 0))                       # (B, T)
    alphas = jnp.transpose(alpha_tb, (1, 0))                   # (B, T)

    if get_att:
        return preds, e_vals, alphas
    return preds


# ----------------------------------------------------------------------------
# Pure-JAX reference (for correctness check)
# ----------------------------------------------------------------------------
def _reference(params, seqs, mask, wk_ahead):
    B, T, D = seqs.shape
    H = params["enc_w_hh"].shape[1]

    def gru_cell(x, h, w_ih, w_hh, b_ih, b_hh):
        gi = x @ w_ih.T + b_ih
        gh = h @ w_hh.T + b_hh
        r = jax.nn.sigmoid(gi[:, :H] + gh[:, :H])
        z = jax.nn.sigmoid(gi[:, H:2 * H] + gh[:, H:2 * H])
        n = jnp.tanh(gi[:, 2 * H:] + r * gh[:, 2 * H:])
        return (1.0 - z) * n + z * h

    h = jnp.zeros((B, H), jnp.float32)
    hs = []
    for t in range(T):
        h = gru_cell(seqs[:, t, :], h, params["enc_w_ih"], params["enc_w_hh"],
                     params["enc_b_ih"], params["enc_b_hh"])
        hs.append(h)
    hs = jnp.stack(hs, axis=1)                                     # (B, T, H)

    e = jnp.einsum("bth,h->bt", hs, params["attn_w"][0]) + params["attn_b"][0]
    logits = jnp.where(mask > 0, e, -1e30)
    alpha = jax.nn.softmax(logits, axis=1)
    c = jnp.einsum("bt,bth->bh", alpha, hs)

    dh = c
    dx = jnp.zeros((B, 1), jnp.float32)
    preds = []
    for _ in range(wk_ahead):
        dh = gru_cell(dx, dh, params["dec_w_ih"], params["dec_w_hh"],
                      params["dec_b_ih"], params["dec_b_hh"])
        y = dh @ params["out_w"].T + params["out_b"]
        preds.append(y[:, 0])
        dx = y
    return jnp.stack(preds, axis=1), e, alpha


# ----------------------------------------------------------------------------
def _init_params(key, n_signals, rnn_dim):
    H = rnn_dim
    k = 1.0 / jnp.sqrt(jnp.float32(H))
    names_shapes = [
        ("enc_w_ih", (3 * H, n_signals)), ("enc_w_hh", (3 * H, H)),
        ("enc_b_ih", (3 * H,)), ("enc_b_hh", (3 * H,)),
        ("attn_w", (1, H)), ("attn_b", (1,)),
        ("dec_w_ih", (3 * H, 1)), ("dec_w_hh", (3 * H, H)),
        ("dec_b_ih", (3 * H,)), ("dec_b_hh", (3 * H,)),
        ("out_w", (1, H)), ("out_b", (1,)),
    ]
    params = {}
    keys = jax.random.split(key, len(names_shapes))
    for kk, (name, shape) in zip(keys, names_shapes):
        params[name] = jax.random.uniform(kk, shape, jnp.float32, -k, k)
    return params


if __name__ == "__main__":
    # Small shapes consistent with the module: size_seq=8, n_signals=4,
    # rnn_dim=32, wk_ahead=4, batch=2.
    B, T, D, H, WK = 2, 8, 4, 32, 4

    key = jax.random.PRNGKey(0)
    k_param, k_seq = jax.random.split(key)
    params = _init_params(k_param, D, H)

    seqs = jax.random.normal(k_seq, (B, T, D), jnp.float32)
    # mask: first sequence fully valid, second padded after 5 steps
    mask_seq = jnp.array(
        [[1.0] * T,
         [1.0] * 5 + [0.0] * (T - 5)], dtype=jnp.float32)

    preds, e_vals, alphas = input_encoder_decoder(params, seqs, mask_seq, WK,
                                                  get_att=True)
    jax.block_until_ready(preds)

    ref_preds, ref_e, ref_alpha = _reference(params, seqs, mask_seq, WK)

    assert jnp.allclose(preds, ref_preds, atol=1e-4, rtol=1e-4), "predictions mismatch"
    assert jnp.allclose(e_vals, ref_e, atol=1e-4, rtol=1e-4), "energy mismatch"
    assert jnp.allclose(alphas, ref_alpha, atol=1e-4, rtol=1e-4), "attention mismatch"
    assert preds.shape == (B, WK)

    print("KERNEL_OK")
</pallas_src>

<mosaic_0001>
module attributes {stable_mosaic.version = 11 : i64} {
  func.func @_encdec_kernel(%arg0: i32, %arg1: memref<8x4x2xf32, #tpu.memory_space<vmem>>, %arg2: memref<8x2xf32, #tpu.memory_space<vmem>>, %arg3: memref<96x4xf32, #tpu.memory_space<vmem>>, %arg4: memref<96x32xf32, #tpu.memory_space<vmem>>, %arg5: memref<96x1xf32, #tpu.memory_space<vmem>>, %arg6: memref<32x1xf32, #tpu.memory_space<vmem>>, %arg7: memref<32x1xf32, #tpu.memory_space<vmem>>, %arg8: memref<1xf32, #tpu.memory_space<smem>>, %arg9: memref<96x1xf32, #tpu.memory_space<vmem>>, %arg10: memref<96x32xf32, #tpu.memory_space<vmem>>, %arg11: memref<96x1xf32, #tpu.memory_space<vmem>>, %arg12: memref<32x1xf32, #tpu.memory_space<vmem>>, %arg13: memref<32x1xf32, #tpu.memory_space<vmem>>, %arg14: memref<1xf32, #tpu.memory_space<smem>>, %arg15: memref<4x2xf32, #tpu.memory_space<vmem>>, %arg16: memref<8x2xf32, #tpu.memory_space<vmem>>, %arg17: memref<8x2xf32, #tpu.memory_space<vmem>>) attributes {dimension_semantics = [#tpu.dimension_semantics<parallel>], iteration_bounds = array<i64: 1>, scalar_prefetch = 0 : i64, scratch_operands = 0 : i64, tpu.core_type = #tpu.core_type<tc>, window_params = [{transform_indices = @transform_0, window_bounds = array<i64: 8, 4, 2>}, {transform_indices = @transform_1, window_bounds = array<i64: 8, 2>}, {pipeline_mode = #tpu.pipeline_mode<synchronous>, transform_indices = @transform_2, window_bounds = array<i64: 96, 4>}, {pipeline_mode = #tpu.pipeline_mode<synchronous>, transform_indices = @transform_3, window_bounds = array<i64: 96, 32>}, {pipeline_mode = #tpu.pipeline_mode<synchronous>, transform_indices = @transform_4, window_bounds = array<i64: 96, 1>}, {pipeline_mode = #tpu.pipeline_mode<synchronous>, transform_indices = @transform_5, window_bounds = array<i64: 32, 1>}, {pipeline_mode = #tpu.pipeline_mode<synchronous>, transform_indices = @transform_6, window_bounds = array<i64: 32, 1>}, {transform_indices = @transform_7, window_bounds = array<i64: 1>}, {pipeline_mode = #tpu.pipeline_mode<synchronous>, transform_indices = @transform_8, window_bounds = array<i64: 96, 1>}, {pipeline_mode = #tpu.pipeline_mode<synchronous>, transform_indices = @transform_9, window_bounds = array<i64: 96, 32>}, {pipeline_mode = #tpu.pipeline_mode<synchronous>, transform_indices = @transform_10, window_bounds = array<i64: 96, 1>}, {pipeline_mode = #tpu.pipeline_mode<synchronous>, transform_indices = @transform_11, window_bounds = array<i64: 32, 1>}, {pipeline_mode = #tpu.pipeline_mode<synchronous>, transform_indices = @transform_12, window_bounds = array<i64: 32, 1>}, {transform_indices = @transform_13, window_bounds = array<i64: 1>}, {transform_indices = @transform_14, window_bounds = array<i64: 4, 2>}, {transform_indices = @transform_15, window_bounds = array<i64: 8, 2>}, {transform_indices = @transform_16, window_bounds = array<i64: 8, 2>}]} {
    %c0 = arith.constant 0 : index
    %c0_0 = arith.constant 0 : index
    %0 = vector.load %arg3[%c0, %c0_0] : memref<96x4xf32, #tpu.memory_space<vmem>>, vector<96x4xf32>
    %c0_1 = arith.constant 0 : index
    %c0_2 = arith.constant 0 : index
    %1 = vector.load %arg4[%c0_1, %c0_2] : memref<96x32xf32, #tpu.memory_space<vmem>>, vector<96x32xf32>
    %c0_3 = arith.constant 0 : index
    %c0_4 = arith.constant 0 : index
    %2 = vector.load %arg5[%c0_3, %c0_4] : memref<96x1xf32, #tpu.memory_space<vmem>>, vector<96x1xf32>
    %3 = vector.shape_cast %2 : vector<96x1xf32> to vector<96x1xf32>
    %4 = vector.broadcast %3 : vector<96x1xf32> to vector<96x2xf32>
    %c0_5 = arith.constant 0 : index
    %c0_6 = arith.constant 0 : index
    %5 = vector.load %arg6[%c0_5, %c0_6] : memref<32x1xf32, #tpu.memory_space<vmem>>, vector<32x1xf32>
    %6 = vector.shape_cast %5 : vector<32x1xf32> to vector<32x1xf32>
    %7 = vector.broadcast %6 : vector<32x1xf32> to vector<32x2xf32>
    %c0_7 = arith.constant 0 : index
    %c0_8 = arith.constant 0 : index
    %8 = vector.load %arg7[%c0_7, %c0_8] : memref<32x1xf32, #tpu.memory_space<vmem>>, vector<32x1xf32>
    %9 = vector.shape_cast %8 : vector<32x1xf32> to vector<32x1xf32>
    %10 = vector.broadcast %9 : vector<32x1xf32> to vector<32x2xf32>
    %c0_9 = arith.constant 0 : index
    %11 = memref.load %arg8[%c0_9] : memref<1xf32, #tpu.memory_space<smem>>
    %c0_10 = arith.constant 0 : index
    %c0_11 = arith.constant 0 : index
    %c0_12 = arith.constant 0 : index
    %12 = vector.load %arg1[%c0_10, %c0_11, %c0_12] : memref<8x4x2xf32, #tpu.memory_space<vmem>>, vector<1x4x2xf32>
    %13 = vector.shape_cast %12 : vector<1x4x2xf32> to vector<4x2xf32>
    %cst = arith.constant dense<0.000000e+00> : vector<96x2xf32>
    %14 = tpu.matmul %0, %13, %cst {dimension_numbers = #tpu.dot_dimension_numbers<[1], [0], [0], [1], [0, 0, 1, 1], [], []>} : vector<96x4xf32>, vector<4x2xf32>, vector<96x2xf32> -> vector<96x2xf32>
    %15 = arith.addf %14, %4 : vector<96x2xf32>
    %c1 = arith.constant 1 : index
    %c0_13 = arith.constant 0 : index
    %c0_14 = arith.constant 0 : index
    %16 = vector.load %arg1[%c1, %c0_13, %c0_14] : memref<8x4x2xf32, #tpu.memory_space<vmem>>, vector<1x4x2xf32>
    %17 = vector.shape_cast %16 : vector<1x4x2xf32> to vector<4x2xf32>
    %cst_15 = arith.constant dense<0.000000e+00> : vector<96x2xf32>
    %18 = tpu.matmul %0, %17, %cst_15 {dimension_numbers = #tpu.dot_dimension_numbers<[1], [0], [0], [1], [0, 0, 1, 1], [], []>} : vector<96x4xf32>, vector<4x2xf32>, vector<96x2xf32> -> vector<96x2xf32>
    %19 = arith.addf %18, %4 : vector<96x2xf32>
    %c2 = arith.constant 2 : index
    %c0_16 = arith.constant 0 : index
    %c0_17 = arith.constant 0 : index
    %20 = vector.load %arg1[%c2, %c0_16, %c0_17] : memref<8x4x2xf32, #tpu.memory_space<vmem>>, vector<1x4x2xf32>
    %21 = vector.shape_cast %20 : vector<1x4x2xf32> to vector<4x2xf32>
    %cst_18 = arith.constant dense<0.000000e+00> : vector<96x2xf32>
    %22 = tpu.matmul %0, %21, %cst_18 {dimension_numbers = #tpu.dot_dimension_numbers<[1], [0], [0], [1], [0, 0, 1, 1], [], []>} : vector<96x4xf32>, vector<4x2xf32>, vector<96x2xf32> -> vector<96x2xf32>
    %23 = arith.addf %22, %4 : vector<96x2xf32>
    %c3 = arith.constant 3 : index
    %c0_19 = arith.constant 0 : index
    %c0_20 = arith.constant 0 : index
    %24 = vector.load %arg1[%c3, %c0_19, %c0_20] : memref<8x4x2xf32, #tpu.memory_space<vmem>>, vector<1x4x2xf32>
    %25 = vector.shape_cast %24 : vector<1x4x2xf32> to vector<4x2xf32>
    %cst_21 = arith.constant dense<0.000000e+00> : vector<96x2xf32>
    %26 = tpu.matmul %0, %25, %cst_21 {dimension_numbers = #tpu.dot_dimension_numbers<[1], [0], [0], [1], [0, 0, 1, 1], [], []>} : vector<96x4xf32>, vector<4x2xf32>, vector<96x2xf32> -> vector<96x2xf32>
    %27 = arith.addf %26, %4 : vector<96x2xf32>
    %c4 = arith.constant 4 : index
    %c0_22 = arith.constant 0 : index
    %c0_23 = arith.constant 0 : index
    %28 = vector.load %arg1[%c4, %c0_22, %c0_23] : memref<8x4x2xf32, #tpu.memory_space<vmem>>, vector<1x4x2xf32>
    %29 = vector.shape_cast %28 : vector<1x4x2xf32> to vector<4x2xf32>
    %cst_24 = arith.constant dense<0.000000e+00> : vector<96x2xf32>
    %30 = tpu.matmul %0, %29, %cst_24 {dimension_numbers = #tpu.dot_dimension_numbers<[1], [0], [0], [1], [0, 0, 1, 1], [], []>} : vector<96x4xf32>, vector<4x2xf32>, vector<96x2xf32> -> vector<96x2xf32>
    %31 = arith.addf %30, %4 : vector<96x2xf32>
    %c5 = arith.constant 5 : index
    %c0_25 = arith.constant 0 : index
    %c0_26 = arith.constant 0 : index
    %32 = vector.load %arg1[%c5, %c0_25, %c0_26] : memref<8x4x2xf32, #tpu.memory_space<vmem>>, vector<1x4x2xf32>
    %33 = vector.shape_cast %32 : vector<1x4x2xf32> to vector<4x2xf32>
    %cst_27 = arith.constant dense<0.000000e+00> : vector<96x2xf32>
    %34 = tpu.matmul %0, %33, %cst_27 {dimension_numbers = #tpu.dot_dimension_numbers<[1], [0], [0], [1], [0, 0, 1, 1], [], []>} : vector<96x4xf32>, vector<4x2xf32>, vector<96x2xf32> -> vector<96x2xf32>
    %35 = arith.addf %34, %4 : vector<96x2xf32>
    %c6 = arith.constant 6 : index
    %c0_28 = arith.constant 0 : index
    %c0_29 = arith.constant 0 : index
    %36 = vector.load %arg1[%c6, %c0_28, %c0_29] : memref<8x4x2xf32, #tpu.memory_space<vmem>>, vector<1x4x2xf32>
    %37 = vector.shape_cast %36 : vector<1x4x2xf32> to vector<4x2xf32>
    %cst_30 = arith.constant dense<0.000000e+00> : vector<96x2xf32>
    %38 = tpu.matmul %0, %37, %cst_30 {dimension_numbers = #tpu.dot_dimension_numbers<[1], [0], [0], [1], [0, 0, 1, 1], [], []>} : vector<96x4xf32>, vector<4x2xf32>, vector<96x2xf32> -> vector<96x2xf32>
    %39 = arith.addf %38, %4 : vector<96x2xf32>
    %c7 = arith.constant 7 : index
    %c0_31 = arith.constant 0 : index
    %c0_32 = arith.constant 0 : index
    %40 = vector.load %arg1[%c7, %c0_31, %c0_32] : memref<8x4x2xf32, #tpu.memory_space<vmem>>, vector<1x4x2xf32>
    %41 = vector.shape_cast %40 : vector<1x4x2xf32> to vector<4x2xf32>
    %cst_33 = arith.constant dense<0.000000e+00> : vector<96x2xf32>
    %42 = tpu.matmul %0, %41, %cst_33 {dimension_numbers = #tpu.dot_dimension_numbers<[1], [0], [0], [1], [0, 0, 1, 1], [], []>} : vector<96x4xf32>, vector<4x2xf32>, vector<96x2xf32> -> vector<96x2xf32>
    %43 = arith.addf %42, %4 : vector<96x2xf32>
    %cst_34 = arith.constant 0.000000e+00 : f32
    %44 = vector.broadcast %cst_34 : f32 to vector<32x2xf32>
    %cst_35 = arith.constant dense<0.000000e+00> : vector<96x2xf32>
    %45 = tpu.matmul %1, %44, %cst_35 {dimension_numbers = #tpu.dot_dimension_numbers<[1], [0], [0], [1], [0, 0, 1, 1], [], []>} : vector<96x32xf32>, vector<32x2xf32>, vector<96x2xf32> -> vector<96x2xf32>
    %46 = vector.extract_strided_slice %15 {offsets = [0, 0], sizes = [32, 2], strides = [1, 1]} : vector<96x2xf32> to vector<32x2xf32>
    %47 = vector.extract_strided_slice %45 {offsets = [0, 0], sizes = [32, 2], strides = [1, 1]} : vector<96x2xf32> to vector<32x2xf32>
    %48 = arith.addf %46, %47 : vector<32x2xf32>
    %49 = arith.negf %48 : vector<32x2xf32>
    %50 = math.exp %49 : vector<32x2xf32>
    %cst_36 = arith.constant 1.000000e+00 : f32
    %51 = vector.broadcast %cst_36 : f32 to vector<32x2xf32>
    %52 = arith.addf %51, %50 : vector<32x2xf32>
    %53 = arith.divf %51, %52 : vector<32x2xf32>
    %54 = vector.extract_strided_slice %15 {offsets = [32, 0], sizes = [32, 2], strides = [1, 1]} : vector<96x2xf32> to vector<32x2xf32>
    %55 = vector.extract_strided_slice %45 {offsets = [32, 0], sizes = [32, 2], strides = [1, 1]} : vector<96x2xf32> to vector<32x2xf32>
    %56 = arith.addf %54, %55 : vector<32x2xf32>
    %57 = arith.negf %56 : vector<32x2xf32>
    %58 = math.exp %57 : vector<32x2xf32>
    %cst_37 = arith.constant 1.000000e+00 : f32
    %59 = vector.broadcast %cst_37 : f32 to vector<32x2xf32>
    %60 = arith.addf %59, %58 : vector<32x2xf32>
    %61 = arith.divf %59, %60 : vector<32x2xf32>
    %62 = vector.extract_strided_slice %15 {offsets = [64, 0], sizes = [32, 2], strides = [1, 1]} : vector<96x2xf32> to vector<32x2xf32>
    %63 = vector.extract_strided_slice %45 {offsets = [64, 0], sizes = [32, 2], strides = [1, 1]} : vector<96x2xf32> to vector<32x2xf32>
    %64 = arith.addf %63, %7 : vector<32x2xf32>
    %65 = arith.mulf %53, %64 : vector<32x2xf32>
    %66 = arith.addf %62, %65 : vector<32x2xf32>
    %67 = math.tanh %66 : vector<32x2xf32>
    %cst_38 = arith.constant 1.000000e+00 : f32
    %68 = vector.broadcast %cst_38 : f32 to vector<32x2xf32>
    %69 = arith.subf %68, %61 : vector<32x2xf32>
    %70 = arith.mulf %69, %67 : vector<32x2xf32>
    %71 = arith.mulf %61, %44 : vector<32x2xf32>
    %72 = arith.addf %70, %71 : vector<32x2xf32>
    %73 = arith.mulf %72, %10 : vector<32x2xf32>
    %cst_39 = arith.constant dense<0.000000e+00> : vector<2xf32>
    %74 = vector.multi_reduction <add>, %73, %cst_39 [0] : vector<32x2xf32> to vector<2xf32>
    %75 = vector.shape_cast %74 : vector<2xf32> to vector<1x2xf32>
    %cst_40 = arith.constant dense<0.000000e+00> : vector<96x2xf32>
    %76 = tpu.matmul %1, %72, %cst_40 {dimension_numbers = #tpu.dot_dimension_numbers<[1], [0], [0], [1], [0, 0, 1, 1], [], []>} : vector<96x32xf32>, vector<32x2xf32>, vector<96x2xf32> -> vector<96x2xf32>
    %77 = vector.extract_strided_slice %19 {offsets = [0, 0], sizes = [32, 2], strides = [1, 1]} : vector<96x2xf32> to vector<32x2xf32>
    %78 = vector.extract_strided_slice %76 {offsets = [0, 0], sizes = [32, 2], strides = [1, 1]} : vector<96x2xf32> to vector<32x2xf32>
    %79 = arith.addf %77, %78 : vector<32x2xf32>
    %80 = arith.negf %79 : vector<32x2xf32>
    %81 = math.exp %80 : vector<32x2xf32>
    %cst_41 = arith.constant 1.000000e+00 : f32
    %82 = vector.broadcast %cst_41 : f32 to vector<32x2xf32>
    %83 = arith.addf %82, %81 : vector<32x2xf32>
    %84 = arith.divf %82, %83 : vector<32x2xf32>
    %85 = vector.extract_strided_slice %19 {offsets = [32, 0], sizes = [32, 2], strides = [1, 1]} : vector<96x2xf32> to vector<32x2xf32>
    %86 = vector.extract_strided_slice %76 {offsets = [32, 0], sizes = [32, 2], strides = [1, 1]} : vector<96x2xf32> to vector<32x2xf32>
    %87 = arith.addf %85, %86 : vector<32x2xf32>
    %88 = arith.negf %87 : vector<32x2xf32>
    %89 = math.exp %88 : vector<32x2xf32>
    %cst_42 = arith.constant 1.000000e+00 : f32
    %90 = vector.broadcast %cst_42 : f32 to vector<32x2xf32>
    %91 = arith.addf %90, %89 : vector<32x2xf32>
    %92 = arith.divf %90, %91 : vector<32x2xf32>
    %93 = vector.extract_strided_slice %19 {offsets = [64, 0], sizes = [32, 2], strides = [1, 1]} : vector<96x2xf32> to vector<32x2xf32>
    %94 = vector.extract_strided_slice %76 {offsets = [64, 0], sizes = [32, 2], strides = [1, 1]} : vector<96x2xf32> to vector<32x2xf32>
    %95 = arith.addf %94, %7 : vector<32x2xf32>
    %96 = arith.mulf %84, %95 : vector<32x2xf32>
    %97 = arith.addf %93, %96 : vector<32x2xf32>
    %98 = math.tanh %97 : vector<32x2xf32>
    %cst_43 = arith.constant 1.000000e+00 : f32
    %99 = vector.broadcast %cst_43 : f32 to vector<32x2xf32>
    %100 = arith.subf %99, %92 : vector<32x2xf32>
    %101 = arith.mulf %100, %98 : vector<32x2xf32>
    %102 = arith.mulf %92, %72 : vector<32x2xf32>
    %103 = arith.addf %101, %102 : vector<32x2xf32>
    %104 = arith.mulf %103, %10 : vector<32x2xf32>
    %cst_44 = arith.constant dense<0.000000e+00> : vector<2xf32>
    %105 = vector.multi_reduction <add>, %104, %cst_44 [0] : vector<32x2xf32> to vector<2xf32>
    %106 = vector.shape_cast %105 : vector<2xf32> to vector<1x2xf32>
    %cst_45 = arith.constant dense<0.000000e+00> : vector<96x2xf32>
    %107 = tpu.matmul %1, %103, %cst_45 {dimension_numbers = #tpu.dot_dimension_numbers<[1], [0], [0], [1], [0, 0, 1, 1], [], []>} : vector<96x32xf32>, vector<32x2xf32>, vector<96x2xf32> -> vector<96x2xf32>
    %108 = vector.extract_strided_slice %23 {offsets = [0, 0], sizes = [32, 2], strides = [1, 1]} : vector<96x2xf32> to vector<32x2xf32>
    %109 = vector.extract_strided_slice %107 {offsets = [0, 0], sizes = [32, 2], strides = [1, 1]} : vector<96x2xf32> to vector<32x2xf32>
    %110 = arith.addf %108, %109 : vector<32x2xf32>
    %111 = arith.negf %110 : vector<32x2xf32>
    %112 = math.exp %111 : vector<32x2xf32>
    %cst_46 = arith.constant 1.000000e+00 : f32
    %113 = vector.broadcast %cst_46 : f32 to vector<32x2xf32>
    %114 = arith.addf %113, %112 : vector<32x2xf32>
    %115 = arith.divf %113, %114 : vector<32x2xf32>
    %116 = vector.extract_strided_slice %23 {offsets = [32, 0], sizes = [32, 2], strides = [1, 1]} : vector<96x2xf32> to vector<32x2xf32>
    %117 = vector.extract_strided_slice %107 {offsets = [32, 0], sizes = [32, 2], strides = [1, 1]} : vector<96x2xf32> to vector<32x2xf32>
    %118 = arith.addf %116, %117 : vector<32x2xf32>
    %119 = arith.negf %118 : vector<32x2xf32>
    %120 = math.exp %119 : vector<32x2xf32>
    %cst_47 = arith.constant 1.000000e+00 : f32
    %121 = vector.broadcast %cst_47 : f32 to vector<32x2xf32>
    %122 = arith.addf %121, %120 : vector<32x2xf32>
    %123 = arith.divf %121, %122 : vector<32x2xf32>
    %124 = vector.extract_strided_slice %23 {offsets = [64, 0], sizes = [32, 2], strides = [1, 1]} : vector<96x2xf32> to vector<32x2xf32>
    %125 = vector.extract_strided_slice %107 {offsets = [64, 0], sizes = [32, 2], strides = [1, 1]} : vector<96x2xf32> to vector<32x2xf32>
    %126 = arith.addf %125, %7 : vector<32x2xf32>
    %127 = arith.mulf %115, %126 : vector<32x2xf32>
    %128 = arith.addf %124, %127 : vector<32x2xf32>
    %129 = math.tanh %128 : vector<32x2xf32>
    %cst_48 = arith.constant 1.000000e+00 : f32
    %130 = vector.broadcast %cst_48 : f32 to vector<32x2xf32>
    %131 = arith.subf %130, %123 : vector<32x2xf32>
    %132 = arith.mulf %131, %129 : vector<32x2xf32>
    %133 = arith.mulf %123, %103 : vector<32x2xf32>
    %134 = arith.addf %132, %133 : vector<32x2xf32>
    %135 = arith.mulf %134, %10 : vector<32x2xf32>
    %cst_49 = arith.constant dense<0.000000e+00> : vector<2xf32>
    %136 = vector.multi_reduction <add>, %135, %cst_49 [0] : vector<32x2xf32> to vector<2xf32>
    %137 = vector.shape_cast %136 : vector<2xf32> to vector<1x2xf32>
    %cst_50 = arith.constant dense<0.000000e+00> : vector<96x2xf32>
    %138 = tpu.matmul %1, %134, %cst_50 {dimension_numbers = #tpu.dot_dimension_numbers<[1], [0], [0], [1], [0, 0, 1, 1], [], []>} : vector<96x32xf32>, vector<32x2xf32>, vector<96x2xf32> -> vector<96x2xf32>
    %139 = vector.extract_strided_slice %27 {offsets = [0, 0], sizes = [32, 2], strides = [1, 1]} : vector<96x2xf32> to vector<32x2xf32>
    %140 = vector.extract_strided_slice %138 {offsets = [0, 0], sizes = [32, 2], strides = [1, 1]} : vector<96x2xf32> to vector<32x2xf32>
    %141 = arith.addf %139, %140 : vector<32x2xf32>
    %142 = arith.negf %141 : vector<32x2xf32>
    %143 = math.exp %142 : vector<32x2xf32>
    %cst_51 = arith.constant 1.000000e+00 : f32
    %144 = vector.broadcast %cst_51 : f32 to vector<32x2xf32>
    %145 = arith.addf %144, %143 : vector<32x2xf32>
    %146 = arith.divf %144, %145 : vector<32x2xf32>
    %147 = vector.extract_strided_slice %27 {offsets = [32, 0], sizes = [32, 2], strides = [1, 1]} : vector<96x2xf32> to vector<32x2xf32>
    %148 = vector.extract_strided_slice %138 {offsets = [32, 0], sizes = [32, 2], strides = [1, 1]} : vector<96x2xf32> to vector<32x2xf32>
    %149 = arith.addf %147, %148 : vector<32x2xf32>
    %150 = arith.negf %149 : vector<32x2xf32>
    %151 = math.exp %150 : vector<32x2xf32>
    %cst_52 = arith.constant 1.000000e+00 : f32
    %152 = vector.broadcast %cst_52 : f32 to vector<32x2xf32>
    %153 = arith.addf %152, %151 : vector<32x2xf32>
    %154 = arith.divf %152, %153 : vector<32x2xf32>
    %155 = vector.extract_strided_slice %27 {offsets = [64, 0], sizes = [32, 2], strides = [1, 1]} : vector<96x2xf32> to vector<32x2xf32>
    %156 = vector.extract_strided_slice %138 {offsets = [64, 0], sizes = [32, 2], strides = [1, 1]} : vector<96x2xf32> to vector<32x2xf32>
    %157 = arith.addf %156, %7 : vector<32x2xf32>
    %158 = arith.mulf %146, %157 : vector<32x2xf32>
    %159 = arith.addf %155, %158 : vector<32x2xf32>
    %160 = math.tanh %159 : vector<32x2xf32>
    %cst_53 = arith.constant 1.000000e+00 : f32
    %161 = vector.broadcast %cst_53 : f32 to vector<32x2xf32>
    %162 = arith.subf %161, %154 : vector<32x2xf32>
    %163 = arith.mulf %162, %160 : vector<32x2xf32>
    %164 = arith.mulf %154, %134 : vector<32x2xf32>
    %165 = arith.addf %163, %164 : vector<32x2xf32>
    %166 = arith.mulf %165, %10 : vector<32x2xf32>
    %cst_54 = arith.constant dense<0.000000e+00> : vector<2xf32>
    %167 = vector.multi_reduction <add>, %166, %cst_54 [0] : vector<32x2xf32> to vector<2xf32>
    %168 = vector.shape_cast %167 : vector<2xf32> to vector<1x2xf32>
    %cst_55 = arith.constant dense<0.000000e+00> : vector<96x2xf32>
    %169 = tpu.matmul %1, %165, %cst_55 {dimension_numbers = #tpu.dot_dimension_numbers<[1], [0], [0], [1], [0, 0, 1, 1], [], []>} : vector<96x32xf32>, vector<32x2xf32>, vector<96x2xf32> -> vector<96x2xf32>
    %170 = vector.extract_strided_slice %31 {offsets = [0, 0], sizes = [32, 2], strides = [1, 1]} : vector<96x2xf32> to vector<32x2xf32>
    %171 = vector.extract_strided_slice %169 {offsets = [0, 0], sizes = [32, 2], strides = [1, 1]} : vector<96x2xf32> to vector<32x2xf32>
    %172 = arith.addf %170, %171 : vector<32x2xf32>
    %173 = arith.negf %172 : vector<32x2xf32>
    %174 = math.exp %173 : vector<32x2xf32>
    %cst_56 = arith.constant 1.000000e+00 : f32
    %175 = vector.broadcast %cst_56 : f32 to vector<32x2xf32>
    %176 = arith.addf %175, %174 : vector<32x2xf32>
    %177 = arith.divf %175, %176 : vector<32x2xf32>
    %178 = vector.extract_strided_slice %31 {offsets = [32, 0], sizes = [32, 2], strides = [1, 1]} : vector<96x2xf32> to vector<32x2xf32>
    %179 = vector.extract_strided_slice %169 {offsets = [32, 0], sizes = [32, 2], strides = [1, 1]} : vector<96x2xf32> to vector<32x2xf32>
    %180 = arith.addf %178, %179 : vector<32x2xf32>
    %181 = arith.negf %180 : vector<32x2xf32>
    %182 = math.exp %181 : vector<32x2xf32>
    %cst_57 = arith.constant 1.000000e+00 : f32
    %183 = vector.broadcast %cst_57 : f32 to vector<32x2xf32>
    %184 = arith.addf %183, %182 : vector<32x2xf32>
    %185 = arith.divf %183, %184 : vector<32x2xf32>
    %186 = vector.extract_strided_slice %31 {offsets = [64, 0], sizes = [32, 2], strides = [1, 1]} : vector<96x2xf32> to vector<32x2xf32>
    %187 = vector.extract_strided_slice %169 {offsets = [64, 0], sizes = [32, 2], strides = [1, 1]} : vector<96x2xf32> to vector<32x2xf32>
    %188 = arith.addf %187, %7 : vector<32x2xf32>
    %189 = arith.mulf %177, %188 : vector<32x2xf32>
    %190 = arith.addf %186, %189 : vector<32x2xf32>
    %191 = math.tanh %190 : vector<32x2xf32>
    %cst_58 = arith.constant 1.000000e+00 : f32
    %192 = vector.broadcast %cst_58 : f32 to vector<32x2xf32>
    %193 = arith.subf %192, %185 : vector<32x2xf32>
    %194 = arith.mulf %193, %191 : vector<32x2xf32>
    %195 = arith.mulf %185, %165 : vector<32x2xf32>
    %196 = arith.addf %194, %195 : vector<32x2xf32>
    %197 = arith.mulf %196, %10 : vector<32x2xf32>
    %cst_59 = arith.constant dense<0.000000e+00> : vector<2xf32>
    %198 = vector.multi_reduction <add>, %197, %cst_59 [0] : vector<32x2xf32> to vector<2xf32>
    %199 = vector.shape_cast %198 : vector<2xf32> to vector<1x2xf32>
    %cst_60 = arith.constant dense<0.000000e+00> : vector<96x2xf32>
    %200 = tpu.matmul %1, %196, %cst_60 {dimension_numbers = #tpu.dot_dimension_numbers<[1], [0], [0], [1], [0, 0, 1, 1], [], []>} : vector<96x32xf32>, vector<32x2xf32>, vector<96x2xf32> -> vector<96x2xf32>
    %201 = vector.extract_strided_slice %35 {offsets = [0, 0], sizes = [32, 2], strides = [1, 1]} : vector<96x2xf32> to vector<32x2xf32>
    %202 = vector.extract_strided_slice %200 {offsets = [0, 0], sizes = [32, 2], strides = [1, 1]} : vector<96x2xf32> to vector<32x2xf32>
    %203 = arith.addf %201, %202 : vector<32x2xf32>
    %204 = arith.negf %203 : vector<32x2xf32>
    %205 = math.exp %204 : vector<32x2xf32>
    %cst_61 = arith.constant 1.000000e+00 : f32
    %206 = vector.broadcast %cst_61 : f32 to vector<32x2xf32>
    %207 = arith.addf %206, %205 : vector<32x2xf32>
    %208 = arith.divf %206, %207 : vector<32x2xf32>
    %209 = vector.extract_strided_slice %35 {offsets = [32, 0], sizes = [32, 2], strides = [1, 1]} : vector<96x2xf32> to vector<32x2xf32>
    %210 = vector.extract_strided_slice %200 {offsets = [32, 0], sizes = [32, 2], strides = [1, 1]} : vector<96x2xf32> to vector<32x2xf32>
    %211 = arith.addf %209, %210 : vector<32x2xf32>
    %212 = arith.negf %211 : vector<32x2xf32>
    %213 = math.exp %212 : vector<32x2xf32>
    %cst_62 = arith.constant 1.000000e+00 : f32
    %214 = vector.broadcast %cst_62 : f32 to vector<32x2xf32>
    %215 = arith.addf %214, %213 : vector<32x2xf32>
    %216 = arith.divf %214, %215 : vector<32x2xf32>
    %217 = vector.extract_strided_slice %35 {offsets = [64, 0], sizes = [32, 2], strides = [1, 1]} : vector<96x2xf32> to vector<32x2xf32>
    %218 = vector.extract_strided_slice %200 {offsets = [64, 0], sizes = [32, 2], strides = [1, 1]} : vector<96x2xf32> to vector<32x2xf32>
    %219 = arith.addf %218, %7 : vector<32x2xf32>
    %220 = arith.mulf %208, %219 : vector<32x2xf32>
    %221 = arith.addf %217, %220 : vector<32x2xf32>
    %222 = math.tanh %221 : vector<32x2xf32>
    %cst_63 = arith.constant 1.000000e+00 : f32
    %223 = vector.broadcast %cst_63 : f32 to vector<32x2xf32>
    %224 = arith.subf %223, %216 : vector<32x2xf32>
    %225 = arith.mulf %224, %222 : vector<32x2xf32>
    %226 = arith.mulf %216, %196 : vector<32x2xf32>
    %227 = arith.addf %225, %226 : vector<32x2xf32>
    %228 = arith.mulf %227, %10 : vector<32x2xf32>
    %cst_64 = arith.constant dense<0.000000e+00> : vector<2xf32>
    %229 = vector.multi_reduction <add>, %228, %cst_64 [0] : vector<32x2xf32> to vector<2xf32>
    %230 = vector.shape_cast %229 : vector<2xf32> to vector<1x2xf32>
    %cst_65 = arith.constant dense<0.000000e+00> : vector<96x2xf32>
    %231 = tpu.matmul %1, %227, %cst_65 {dimension_numbers = #tpu.dot_dimension_numbers<[1], [0], [0], [1], [0, 0, 1, 1], [], []>} : vector<96x32xf32>, vector<32x2xf32>, vector<96x2xf32> -> vector<96x2xf32>
    %232 = vector.extract_strided_slice %39 {offsets = [0, 0], sizes = [32, 2], strides = [1, 1]} : vector<96x2xf32> to vector<32x2xf32>
    %233 = vector.extract_strided_slice %231 {offsets = [0, 0], sizes = [32, 2], strides = [1, 1]} : vector<96x2xf32> to vector<32x2xf32>
    %234 = arith.addf %232, %233 : vector<32x2xf32>
    %235 = arith.negf %234 : vector<32x2xf32>
    %236 = math.exp %235 : vector<32x2xf32>
    %cst_66 = arith.constant 1.000000e+00 : f32
    %237 = vector.broadcast %cst_66 : f32 to vector<32x2xf32>
    %238 = arith.addf %237, %236 : vector<32x2xf32>
    %239 = arith.divf %237, %238 : vector<32x2xf32>
    %240 = vector.extract_strided_slice %39 {offsets = [32, 0], sizes = [32, 2], strides = [1, 1]} : vector<96x2xf32> to vector<32x2xf32>
    %241 = vector.extract_strided_slice %231 {offsets = [32, 0], sizes = [32, 2], strides = [1, 1]} : vector<96x2xf32> to vector<32x2xf32>
    %242 = arith.addf %240, %241 : vector<32x2xf32>
    %243 = arith.negf %242 : vector<32x2xf32>
    %244 = math.exp %243 : vector<32x2xf32>
    %cst_67 = arith.constant 1.000000e+00 : f32
    %245 = vector.broadcast %cst_67 : f32 to vector<32x2xf32>
    %246 = arith.addf %245, %244 : vector<32x2xf32>
    %247 = arith.divf %245, %246 : vector<32x2xf32>
    %248 = vector.extract_strided_slice %39 {offsets = [64, 0], sizes = [32, 2], strides = [1, 1]} : vector<96x2xf32> to vector<32x2xf32>
    %249 = vector.extract_strided_slice %231 {offsets = [64, 0], sizes = [32, 2], strides = [1, 1]} : vector<96x2xf32> to vector<32x2xf32>
    %250 = arith.addf %249, %7 : vector<32x2xf32>
    %251 = arith.mulf %239, %250 : vector<32x2xf32>
    %252 = arith.addf %248, %251 : vector<32x2xf32>
    %253 = math.tanh %252 : vector<32x2xf32>
    %cst_68 = arith.constant 1.000000e+00 : f32
    %254 = vector.broadcast %cst_68 : f32 to vector<32x2xf32>
    %255 = arith.subf %254, %247 : vector<32x2xf32>
    %256 = arith.mulf %255, %253 : vector<32x2xf32>
    %257 = arith.mulf %247, %227 : vector<32x2xf32>
    %258 = arith.addf %256, %257 : vector<32x2xf32>
    %259 = arith.mulf %258, %10 : vector<32x2xf32>
    %cst_69 = arith.constant dense<0.000000e+00> : vector<2xf32>
    %260 = vector.multi_reduction <add>, %259, %cst_69 [0] : vector<32x2xf32> to vector<2xf32>
    %261 = vector.shape_cast %260 : vector<2xf32> to vector<1x2xf32>
    %cst_70 = arith.constant dense<0.000000e+00> : vector<96x2xf32>
    %262 = tpu.matmul %1, %258, %cst_70 {dimension_numbers = #tpu.dot_dimension_numbers<[1], [0], [0], [1], [0, 0, 1, 1], [], []>} : vector<96x32xf32>, vector<32x2xf32>, vector<96x2xf32> -> vector<96x2xf32>
    %263 = vector.extract_strided_slice %43 {offsets = [0, 0], sizes = [32, 2], strides = [1, 1]} : vector<96x2xf32> to vector<32x2xf32>
    %264 = vector.extract_strided_slice %262 {offsets = [0, 0], sizes = [32, 2], strides = [1, 1]} : vector<96x2xf32> to vector<32x2xf32>
    %265 = arith.addf %263, %264 : vector<32x2xf32>
    %266 = arith.negf %265 : vector<32x2xf32>
    %267 = math.exp %266 : vector<32x2xf32>
    %cst_71 = arith.constant 1.000000e+00 : f32
    %268 = vector.broadcast %cst_71 : f32 to vector<32x2xf32>
    %269 = arith.addf %268, %267 : vector<32x2xf32>
    %270 = arith.divf %268, %269 : vector<32x2xf32>
    %271 = vector.extract_strided_slice %43 {offsets = [32, 0], sizes = [32, 2], strides = [1, 1]} : vector<96x2xf32> to vector<32x2xf32>
    %272 = vector.extract_strided_slice %262 {offsets = [32, 0], sizes = [32, 2], strides = [1, 1]} : vector<96x2xf32> to vector<32x2xf32>
    %273 = arith.addf %271, %272 : vector<32x2xf32>
    %274 = arith.negf %273 : vector<32x2xf32>
    %275 = math.exp %274 : vector<32x2xf32>
    %cst_72 = arith.constant 1.000000e+00 : f32
    %276 = vector.broadcast %cst_72 : f32 to vector<32x2xf32>
    %277 = arith.addf %276, %275 : vector<32x2xf32>
    %278 = arith.divf %276, %277 : vector<32x2xf32>
    %279 = vector.extract_strided_slice %43 {offsets = [64, 0], sizes = [32, 2], strides = [1, 1]} : vector<96x2xf32> to vector<32x2xf32>
    %280 = vector.extract_strided_slice %262 {offsets = [64, 0], sizes = [32, 2], strides = [1, 1]} : vector<96x2xf32> to vector<32x2xf32>
    %281 = arith.addf %280, %7 : vector<32x2xf32>
    %282 = arith.mulf %270, %281 : vector<32x2xf32>
    %283 = arith.addf %279, %282 : vector<32x2xf32>
    %284 = math.tanh %283 : vector<32x2xf32>
    %cst_73 = arith.constant 1.000000e+00 : f32
    %285 = vector.broadcast %cst_73 : f32 to vector<32x2xf32>
    %286 = arith.subf %285, %278 : vector<32x2xf32>
    %287 = arith.mulf %286, %284 : vector<32x2xf32>
    %288 = arith.mulf %278, %258 : vector<32x2xf32>
    %289 = arith.addf %287, %288 : vector<32x2xf32>
    %290 = arith.mulf %289, %10 : vector<32x2xf32>
    %cst_74 = arith.constant dense<0.000000e+00> : vector<2xf32>
    %291 = vector.multi_reduction <add>, %290, %cst_74 [0] : vector<32x2xf32> to vector<2xf32>
    %292 = vector.shape_cast %291 : vector<2xf32> to vector<1x2xf32>
    %293 = tpu.concatenate %75, %106, %137, %168, %199, %230, %261, %292 in 0 : vector<1x2xf32>, vector<1x2xf32>, vector<1x2xf32>, vector<1x2xf32>, vector<1x2xf32>, vector<1x2xf32>, vector<1x2xf32>, vector<1x2xf32> -> vector<8x2xf32>
    %294 = vector.broadcast %11 : f32 to vector<8x2xf32>
    %295 = arith.addf %293, %294 : vector<8x2xf32>
    %c0_75 = arith.constant 0 : index
    %c0_76 = arith.constant 0 : index
    %296 = vector.load %arg16[%c0_75, %c0_76] : memref<8x2xf32, #tpu.memory_space<vmem>>, vector<8x2xf32>
    tpu.vector_store %arg16[%c0_75, %c0_76], %295 {strides = array<i32>} : memref<8x2xf32, #tpu.memory_space<vmem>>, vector<8x2xf32>,
    %c0_77 = arith.constant 0 : index
    %c0_78 = arith.constant 0 : index
    %297 = vector.load %arg2[%c0_77, %c0_78] : memref<8x2xf32, #tpu.memory_space<vmem>>, vector<8x2xf32>
    %cst_79 = arith.constant 0.000000e+00 : f32
    %298 = vector.broadcast %cst_79 : f32 to vector<8x2xf32>
    %299 = arith.cmpf ogt, %297, %298 : vector<8x2xf32>
    %cst_80 = arith.constant -1.000000e+30 : f32
    %300 = vector.broadcast %cst_80 : f32 to vector<8x2xf32>
    %301 = arith.select %299, %295, %300 : vector<8x2xi1>, vector<8x2xf32>
    %cst_81 = arith.constant dense<0xFF800000> : vector<2xf32>
    %302 = vector.multi_reduction <maximumf>, %301, %cst_81 [0] : vector<8x2xf32> to vector<2xf32>
    %303 = vector.shape_cast %302 : vector<2xf32> to vector<1x2xf32>
    %304 = vector.broadcast %303 : vector<1x2xf32> to vector<8x2xf32>
    %305 = arith.subf %301, %304 : vector<8x2xf32>
    %306 = math.exp %305 : vector<8x2xf32>
    %cst_82 = arith.constant dense<0.000000e+00> : vector<2xf32>
    %307 = vector.multi_reduction <add>, %306, %cst_82 [0] : vector<8x2xf32> to vector<2xf32>
    %308 = vector.shape_cast %307 : vector<2xf32> to vector<1x2xf32>
    %309 = vector.broadcast %308 : vector<1x2xf32> to vector<8x2xf32>
    %310 = arith.divf %306, %309 : vector<8x2xf32>
    %c0_83 = arith.constant 0 : index
    %c0_84 = arith.constant 0 : index
    %311 = vector.load %arg17[%c0_83, %c0_84] : memref<8x2xf32, #tpu.memory_space<vmem>>, vector<8x2xf32>
    tpu.vector_store %arg17[%c0_83, %c0_84], %310 {strides = array<i32>} : memref<8x2xf32, #tpu.memory_space<vmem>>, vector<8x2xf32>,
    %cst_85 = arith.constant 0.000000e+00 : f32
    %312 = vector.broadcast %cst_85 : f32 to vector<32x2xf32>
    %313 = vector.extract_strided_slice %310 {offsets = [0, 0], sizes = [1, 2], strides = [1, 1]} : vector<8x2xf32> to vector<1x2xf32>
    %314 = vector.broadcast %313 : vector<1x2xf32> to vector<32x2xf32>
    %315 = arith.mulf %314, %72 : vector<32x2xf32>
    %316 = arith.addf %312, %315 : vector<32x2xf32>
    %317 = vector.extract_strided_slice %310 {offsets = [1, 0], sizes = [1, 2], strides = [1, 1]} : vector<8x2xf32> to vector<1x2xf32>
    %318 = vector.broadcast %317 : vector<1x2xf32> to vector<32x2xf32>
    %319 = arith.mulf %318, %103 : vector<32x2xf32>
    %320 = arith.addf %316, %319 : vector<32x2xf32>
    %321 = vector.extract_strided_slice %310 {offsets = [2, 0], sizes = [1, 2], strides = [1, 1]} : vector<8x2xf32> to vector<1x2xf32>
    %322 = vector.broadcast %321 : vector<1x2xf32> to vector<32x2xf32>
    %323 = arith.mulf %322, %134 : vector<32x2xf32>
    %324 = arith.addf %320, %323 : vector<32x2xf32>
    %325 = vector.extract_strided_slice %310 {offsets = [3, 0], sizes = [1, 2], strides = [1, 1]} : vector<8x2xf32> to vector<1x2xf32>
    %326 = vector.broadcast %325 : vector<1x2xf32> to vector<32x2xf32>
    %327 = arith.mulf %326, %165 : vector<32x2xf32>
    %328 = arith.addf %324, %327 : vector<32x2xf32>
    %329 = vector.extract_strided_slice %310 {offsets = [4, 0], sizes = [1, 2], strides = [1, 1]} : vector<8x2xf32> to vector<1x2xf32>
    %330 = vector.broadcast %329 : vector<1x2xf32> to vector<32x2xf32>
    %331 = arith.mulf %330, %196 : vector<32x2xf32>
    %332 = arith.addf %328, %331 : vector<32x2xf32>
    %333 = vector.extract_strided_slice %310 {offsets = [5, 0], sizes = [1, 2], strides = [1, 1]} : vector<8x2xf32> to vector<1x2xf32>
    %334 = vector.broadcast %333 : vector<1x2xf32> to vector<32x2xf32>
    %335 = arith.mulf %334, %227 : vector<32x2xf32>
    %336 = arith.addf %332, %335 : vector<32x2xf32>
    %337 = vector.extract_strided_slice %310 {offsets = [6, 0], sizes = [1, 2], strides = [1, 1]} : vector<8x2xf32> to vector<1x2xf32>
    %338 = vector.broadcast %337 : vector<1x2xf32> to vector<32x2xf32>
    %339 = arith.mulf %338, %258 : vector<32x2xf32>
    %340 = arith.addf %336, %339 : vector<32x2xf32>
    %341 = vector.extract_strided_slice %310 {offsets = [7, 0], sizes = [1, 2], strides = [1, 1]} : vector<8x2xf32> to vector<1x2xf32>
    %342 = vector.broadcast %341 : vector<1x2xf32> to vector<32x2xf32>
    %343 = arith.mulf %342, %289 : vector<32x2xf32>
    %344 = arith.addf %340, %343 : vector<32x2xf32>
    %c0_86 = arith.constant 0 : index
    %c0_87 = arith.constant 0 : index
    %345 = vector.load %arg9[%c0_86, %c0_87] : memref<96x1xf32, #tpu.memory_space<vmem>>, vector<96x1xf32>
    %346 = vector.shape_cast %345 : vector<96x1xf32> to vector<96x1xf32>
    %347 = vector.broadcast %346 : vector<96x1xf32> to vector<96x2xf32>
    %c0_88 = arith.constant 0 : index
    %c0_89 = arith.constant 0 : index
    %348 = vector.load %arg10[%c0_88, %c0_89] : memref<96x32xf32, #tpu.memory_space<vmem>>, vector<96x32xf32>
    %c0_90 = arith.constant 0 : index
    %c0_91 = arith.constant 0 : index
    %349 = vector.load %arg11[%c0_90, %c0_91] : memref<96x1xf32, #tpu.memory_space<vmem>>, vector<96x1xf32>
    %350 = vector.shape_cast %349 : vector<96x1xf32> to vector<96x1xf32>
    %351 = vector.broadcast %350 : vector<96x1xf32> to vector<96x2xf32>
    %c0_92 = arith.constant 0 : index
    %c0_93 = arith.constant 0 : index
    %352 = vector.load %arg12[%c0_92, %c0_93] : memref<32x1xf32, #tpu.memory_space<vmem>>, vector<32x1xf32>
    %353 = vector.shape_cast %352 : vector<32x1xf32> to vector<32x1xf32>
    %354 = vector.broadcast %353 : vector<32x1xf32> to vector<32x2xf32>
    %c0_94 = arith.constant 0 : index
    %c0_95 = arith.constant 0 : index
    %355 = vector.load %arg13[%c0_94, %c0_95] : memref<32x1xf32, #tpu.memory_space<vmem>>, vector<32x1xf32>
    %356 = vector.shape_cast %355 : vector<32x1xf32> to vector<32x1xf32>
    %357 = vector.broadcast %356 : vector<32x1xf32> to vector<32x2xf32>
    %c0_96 = arith.constant 0 : index
    %358 = memref.load %arg14[%c0_96] : memref<1xf32, #tpu.memory_space<smem>>
    %cst_97 = arith.constant 0.000000e+00 : f32
    %359 = vector.broadcast %cst_97 : f32 to vector<1x2xf32>
    %360 = vector.broadcast %359 : vector<1x2xf32> to vector<96x2xf32>
    %361 = arith.mulf %347, %360 : vector<96x2xf32>
    %362 = arith.addf %361, %351 : vector<96x2xf32>
    %cst_98 = arith.constant dense<0.000000e+00> : vector<96x2xf32>
    %363 = tpu.matmul %348, %344, %cst_98 {dimension_numbers = #tpu.dot_dimension_numbers<[1], [0], [0], [1], [0, 0, 1, 1], [], []>} : vector<96x32xf32>, vector<32x2xf32>, vector<96x2xf32> -> vector<96x2xf32>
    %364 = vector.extract_strided_slice %362 {offsets = [0, 0], sizes = [32, 2], strides = [1, 1]} : vector<96x2xf32> to vector<32x2xf32>
    %365 = vector.extract_strided_slice %363 {offsets = [0, 0], sizes = [32, 2], strides = [1, 1]} : vector<96x2xf32> to vector<32x2xf32>
    %366 = arith.addf %364, %365 : vector<32x2xf32>
    %367 = arith.negf %366 : vector<32x2xf32>
    %368 = math.exp %367 : vector<32x2xf32>
    %cst_99 = arith.constant 1.000000e+00 : f32
    %369 = vector.broadcast %cst_99 : f32 to vector<32x2xf32>
    %370 = arith.addf %369, %368 : vector<32x2xf32>
    %371 = arith.divf %369, %370 : vector<32x2xf32>
    %372 = vector.extract_strided_slice %362 {offsets = [32, 0], sizes = [32, 2], strides = [1, 1]} : vector<96x2xf32> to vector<32x2xf32>
    %373 = vector.extract_strided_slice %363 {offsets = [32, 0], sizes = [32, 2], strides = [1, 1]} : vector<96x2xf32> to vector<32x2xf32>
    %374 = arith.addf %372, %373 : vector<32x2xf32>
    %375 = arith.negf %374 : vector<32x2xf32>
    %376 = math.exp %375 : vector<32x2xf32>
    %cst_100 = arith.constant 1.000000e+00 : f32
    %377 = vector.broadcast %cst_100 : f32 to vector<32x2xf32>
    %378 = arith.addf %377, %376 : vector<32x2xf32>
    %379 = arith.divf %377, %378 : vector<32x2xf32>
    %380 = vector.extract_strided_slice %362 {offsets = [64, 0], sizes = [32, 2], strides = [1, 1]} : vector<96x2xf32> to vector<32x2xf32>
    %381 = vector.extract_strided_slice %363 {offsets = [64, 0], sizes = [32, 2], strides = [1, 1]} : vector<96x2xf32> to vector<32x2xf32>
    %382 = arith.addf %381, %354 : vector<32x2xf32>
    %383 = arith.mulf %371, %382 : vector<32x2xf32>
    %384 = arith.addf %380, %383 : vector<32x2xf32>
    %385 = math.tanh %384 : vector<32x2xf32>
    %cst_101 = arith.constant 1.000000e+00 : f32
    %386 = vector.broadcast %cst_101 : f32 to vector<32x2xf32>
    %387 = arith.subf %386, %379 : vector<32x2xf32>
    %388 = arith.mulf %387, %385 : vector<32x2xf32>
    %389 = arith.mulf %379, %344 : vector<32x2xf32>
    %390 = arith.addf %388, %389 : vector<32x2xf32>
    %391 = arith.mulf %390, %357 : vector<32x2xf32>
    %cst_102 = arith.constant dense<0.000000e+00> : vector<2xf32>
    %392 = vector.multi_reduction <add>, %391, %cst_102 [0] : vector<32x2xf32> to vector<2xf32>
    %393 = vector.shape_cast %392 : vector<2xf32> to vector<1x2xf32>
    %394 = vector.broadcast %358 : f32 to vector<1x2xf32>
    %395 = arith.addf %393, %394 : vector<1x2xf32>
    %396 = vector.broadcast %395 : vector<1x2xf32> to vector<96x2xf32>
    %397 = arith.mulf %347, %396 : vector<96x2xf32>
    %398 = arith.addf %397, %351 : vector<96x2xf32>
    %cst_103 = arith.constant dense<0.000000e+00> : vector<96x2xf32>
    %399 = tpu.matmul %348, %390, %cst_103 {dimension_numbers = #tpu.dot_dimension_numbers<[1], [0], [0], [1], [0, 0, 1, 1], [], []>} : vector<96x32xf32>, vector<32x2xf32>, vector<96x2xf32> -> vector<96x2xf32>
    %400 = vector.extract_strided_slice %398 {offsets = [0, 0], sizes = [32, 2], strides = [1, 1]} : vector<96x2xf32> to vector<32x2xf32>
    %401 = vector.extract_strided_slice %399 {offsets = [0, 0], sizes = [32, 2], strides = [1, 1]} : vector<96x2xf32> to vector<32x2xf32>
    %402 = arith.addf %400, %401 : vector<32x2xf32>
    %403 = arith.negf %402 : vector<32x2xf32>
    %404 = math.exp %403 : vector<32x2xf32>
    %cst_104 = arith.constant 1.000000e+00 : f32
    %405 = vector.broadcast %cst_104 : f32 to vector<32x2xf32>
    %406 = arith.addf %405, %404 : vector<32x2xf32>
    %407 = arith.divf %405, %406 : vector<32x2xf32>
    %408 = vector.extract_strided_slice %398 {offsets = [32, 0], sizes = [32, 2], strides = [1, 1]} : vector<96x2xf32> to vector<32x2xf32>
    %409 = vector.extract_strided_slice %399 {offsets = [32, 0], sizes = [32, 2], strides = [1, 1]} : vector<96x2xf32> to vector<32x2xf32>
    %410 = arith.addf %408, %409 : vector<32x2xf32>
    %411 = arith.negf %410 : vector<32x2xf32>
    %412 = math.exp %411 : vector<32x2xf32>
    %cst_105 = arith.constant 1.000000e+00 : f32
    %413 = vector.broadcast %cst_105 : f32 to vector<32x2xf32>
    %414 = arith.addf %413, %412 : vector<32x2xf32>
    %415 = arith.divf %413, %414 : vector<32x2xf32>
    %416 = vector.extract_strided_slice %398 {offsets = [64, 0], sizes = [32, 2], strides = [1, 1]} : vector<96x2xf32> to vector<32x2xf32>
    %417 = vector.extract_strided_slice %399 {offsets = [64, 0], sizes = [32, 2], strides = [1, 1]} : vector<96x2xf32> to vector<32x2xf32>
    %418 = arith.addf %417, %354 : vector<32x2xf32>
    %419 = arith.mulf %407, %418 : vector<32x2xf32>
    %420 = arith.addf %416, %419 : vector<32x2xf32>
    %421 = math.tanh %420 : vector<32x2xf32>
    %cst_106 = arith.constant 1.000000e+00 : f32
    %422 = vector.broadcast %cst_106 : f32 to vector<32x2xf32>
    %423 = arith.subf %422, %415 : vector<32x2xf32>
    %424 = arith.mulf %423, %421 : vector<32x2xf32>
    %425 = arith.mulf %415, %390 : vector<32x2xf32>
    %426 = arith.addf %424, %425 : vector<32x2xf32>
    %427 = arith.mulf %426, %357 : vector<32x2xf32>
    %cst_107 = arith.constant dense<0.000000e+00> : vector<2xf32>
    %428 = vector.multi_reduction <add>, %427, %cst_107 [0] : vector<32x2xf32> to vector<2xf32>
    %429 = vector.shape_cast %428 : vector<2xf32> to vector<1x2xf32>
    %430 = vector.broadcast %358 : f32 to vector<1x2xf32>
    %431 = arith.addf %429, %430 : vector<1x2xf32>
    %432 = vector.broadcast %431 : vector<1x2xf32> to vector<96x2xf32>
    %433 = arith.mulf %347, %432 : vector<96x2xf32>
    %434 = arith.addf %433, %351 : vector<96x2xf32>
    %cst_108 = arith.constant dense<0.000000e+00> : vector<96x2xf32>
    %435 = tpu.matmul %348, %426, %cst_108 {dimension_numbers = #tpu.dot_dimension_numbers<[1], [0], [0], [1], [0, 0, 1, 1], [], []>} : vector<96x32xf32>, vector<32x2xf32>, vector<96x2xf32> -> vector<96x2xf32>
    %436 = vector.extract_strided_slice %434 {offsets = [0, 0], sizes = [32, 2], strides = [1, 1]} : vector<96x2xf32> to vector<32x2xf32>
    %437 = vector.extract_strided_slice %435 {offsets = [0, 0], sizes = [32, 2], strides = [1, 1]} : vector<96x2xf32> to vector<32x2xf32>
    %438 = arith.addf %436, %437 : vector<32x2xf32>
    %439 = arith.negf %438 : vector<32x2xf32>
    %440 = math.exp %439 : vector<32x2xf32>
    %cst_109 = arith.constant 1.000000e+00 : f32
    %441 = vector.broadcast %cst_109 : f32 to vector<32x2xf32>
    %442 = arith.addf %441, %440 : vector<32x2xf32>
    %443 = arith.divf %441, %442 : vector<32x2xf32>
    %444 = vector.extract_strided_slice %434 {offsets = [32, 0], sizes = [32, 2], strides = [1, 1]} : vector<96x2xf32> to vector<32x2xf32>
    %445 = vector.extract_strided_slice %435 {offsets = [32, 0], sizes = [32, 2], strides = [1, 1]} : vector<96x2xf32> to vector<32x2xf32>
    %446 = arith.addf %444, %445 : vector<32x2xf32>
    %447 = arith.negf %446 : vector<32x2xf32>
    %448 = math.exp %447 : vector<32x2xf32>
    %cst_110 = arith.constant 1.000000e+00 : f32
    %449 = vector.broadcast %cst_110 : f32 to vector<32x2xf32>
    %450 = arith.addf %449, %448 : vector<32x2xf32>
    %451 = arith.divf %449, %450 : vector<32x2xf32>
    %452 = vector.extract_strided_slice %434 {offsets = [64, 0], sizes = [32, 2], strides = [1, 1]} : vector<96x2xf32> to vector<32x2xf32>
    %453 = vector.extract_strided_slice %435 {offsets = [64, 0], sizes = [32, 2], strides = [1, 1]} : vector<96x2xf32> to vector<32x2xf32>
    %454 = arith.addf %453, %354 : vector<32x2xf32>
    %455 = arith.mulf %443, %454 : vector<32x2xf32>
    %456 = arith.addf %452, %455 : vector<32x2xf32>
    %457 = math.tanh %456 : vector<32x2xf32>
    %cst_111 = arith.constant 1.000000e+00 : f32
    %458 = vector.broadcast %cst_111 : f32 to vector<32x2xf32>
    %459 = arith.subf %458, %451 : vector<32x2xf32>
    %460 = arith.mulf %459, %457 : vector<32x2xf32>
    %461 = arith.mulf %451, %426 : vector<32x2xf32>
    %462 = arith.addf %460, %461 : vector<32x2xf32>
    %463 = arith.mulf %462, %357 : vector<32x2xf32>
    %cst_112 = arith.constant dense<0.000000e+00> : vector<2xf32>
    %464 = vector.multi_reduction <add>, %463, %cst_112 [0] : vector<32x2xf32> to vector<2xf32>
    %465 = vector.shape_cast %464 : vector<2xf32> to vector<1x2xf32>
    %466 = vector.broadcast %358 : f32 to vector<1x2xf32>
    %467 = arith.addf %465, %466 : vector<1x2xf32>
    %468 = vector.broadcast %467 : vector<1x2xf32> to vector<96x2xf32>
    %469 = arith.mulf %347, %468 : vector<96x2xf32>
    %470 = arith.addf %469, %351 : vector<96x2xf32>
    %cst_113 = arith.constant dense<0.000000e+00> : vector<96x2xf32>
    %471 = tpu.matmul %348, %462, %cst_113 {dimension_numbers = #tpu.dot_dimension_numbers<[1], [0], [0], [1], [0, 0, 1, 1], [], []>} : vector<96x32xf32>, vector<32x2xf32>, vector<96x2xf32> -> vector<96x2xf32>
    %472 = vector.extract_strided_slice %470 {offsets = [0, 0], sizes = [32, 2], strides = [1, 1]} : vector<96x2xf32> to vector<32x2xf32>
    %473 = vector.extract_strided_slice %471 {offsets = [0, 0], sizes = [32, 2], strides = [1, 1]} : vector<96x2xf32> to vector<32x2xf32>
    %474 = arith.addf %472, %473 : vector<32x2xf32>
    %475 = arith.negf %474 : vector<32x2xf32>
    %476 = math.exp %475 : vector<32x2xf32>
    %cst_114 = arith.constant 1.000000e+00 : f32
    %477 = vector.broadcast %cst_114 : f32 to vector<32x2xf32>
    %478 = arith.addf %477, %476 : vector<32x2xf32>
    %479 = arith.divf %477, %478 : vector<32x2xf32>
    %480 = vector.extract_strided_slice %470 {offsets = [32, 0], sizes = [32, 2], strides = [1, 1]} : vector<96x2xf32> to vector<32x2xf32>
    %481 = vector.extract_strided_slice %471 {offsets = [32, 0], sizes = [32, 2], strides = [1, 1]} : vector<96x2xf32> to vector<32x2xf32>
    %482 = arith.addf %480, %481 : vector<32x2xf32>
    %483 = arith.negf %482 : vector<32x2xf32>
    %484 = math.exp %483 : vector<32x2xf32>
    %cst_115 = arith.constant 1.000000e+00 : f32
    %485 = vector.broadcast %cst_115 : f32 to vector<32x2xf32>
    %486 = arith.addf %485, %484 : vector<32x2xf32>
    %487 = arith.divf %485, %486 : vector<32x2xf32>
    %488 = vector.extract_strided_slice %470 {offsets = [64, 0], sizes = [32, 2], strides = [1, 1]} : vector<96x2xf32> to vector<32x2xf32>
    %489 = vector.extract_strided_slice %471 {offsets = [64, 0], sizes = [32, 2], strides = [1, 1]} : vector<96x2xf32> to vector<32x2xf32>
    %490 = arith.addf %489, %354 : vector<32x2xf32>
    %491 = arith.mulf %479, %490 : vector<32x2xf32>
    %492 = arith.addf %488, %491 : vector<32x2xf32>
    %493 = math.tanh %492 : vector<32x2xf32>
    %cst_116 = arith.constant 1.000000e+00 : f32
    %494 = vector.broadcast %cst_116 : f32 to vector<32x2xf32>
    %495 = arith.subf %494, %487 : vector<32x2xf32>
    %496 = arith.mulf %495, %493 : vector<32x2xf32>
    %497 = arith.mulf %487, %462 : vector<32x2xf32>
    %498 = arith.addf %496, %497 : vector<32x2xf32>
    %499 = arith.mulf %498, %357 : vector<32x2xf32>
    %cst_117 = arith.constant dense<0.000000e+00> : vector<2xf32>
    %500 = vector.multi_reduction <add>, %499, %cst_117 [0] : vector<32x2xf32> to vector<2xf32>
    %501 = vector.shape_cast %500 : vector<2xf32> to vector<1x2xf32>
    %502 = vector.broadcast %358 : f32 to vector<1x2xf32>
    %503 = arith.addf %501, %502 : vector<1x2xf32>
    %504 = tpu.concatenate %395, %431, %467, %503 in 0 : vector<1x2xf32>, vector<1x2xf32>, vector<1x2xf32>, vector<1x2xf32> -> vector<4x2xf32>
    %c0_118 = arith.constant 0 : index
    %c0_119 = arith.constant 0 : index
    %505 = vector.load %arg15[%c0_118, %c0_119] : memref<4x2xf32, #tpu.memory_space<vmem>>, vector<4x2xf32>
    tpu.vector_store %arg15[%c0_118, %c0_119], %504 {strides = array<i32>} : memref<4x2xf32, #tpu.memory_space<vmem>>, vector<4x2xf32>,
    return
  }
  func.func @transform_0(%arg0: i32) -> (i32, i32, i32) {
    %c0_i32 = arith.constant 0 : i32
    %c0_i32_0 = arith.constant 0 : i32
    %c0_i32_1 = arith.constant 0 : i32
    return %c0_i32, %c0_i32_0, %arg0 : i32, i32, i32
  }
  func.func @transform_1(%arg0: i32) -> (i32, i32) {
    %c0_i32 = arith.constant 0 : i32
    %c0_i32_0 = arith.constant 0 : i32
    return %c0_i32, %arg0 : i32, i32
  }
  func.func @transform_2(%arg0: i32) -> (i32, i32) {
    %c0_i32 = arith.constant 0 : i32
    %c0_i32_0 = arith.constant 0 : i32
    %c0_i32_1 = arith.constant 0 : i32
    return %c0_i32, %c0_i32_0 : i32, i32
  }
  func.func @transform_3(%arg0: i32) -> (i32, i32) {
    %c0_i32 = arith.constant 0 : i32
    %c0_i32_0 = arith.constant 0 : i32
    %c0_i32_1 = arith.constant 0 : i32
    return %c0_i32, %c0_i32_0 : i32, i32
  }
  func.func @transform_4(%arg0: i32) -> (i32, i32) {
    %c0_i32 = arith.constant 0 : i32
    %c0_i32_0 = arith.constant 0 : i32
    %c0_i32_1 = arith.constant 0 : i32
    return %c0_i32, %c0_i32_0 : i32, i32
  }
  func.func @transform_5(%arg0: i32) -> (i32, i32) {
    %c0_i32 = arith.constant 0 : i32
    %c0_i32_0 = arith.constant 0 : i32
    %c0_i32_1 = arith.constant 0 : i32
    return %c0_i32, %c0_i32_0 : i32, i32
  }
  func.func @transform_6(%arg0: i32) -> (i32, i32) {
    %c0_i32 = arith.constant 0 : i32
    %c0_i32_0 = arith.constant 0 : i32
    %c0_i32_1 = arith.constant 0 : i32
    return %c0_i32, %c0_i32_0 : i32, i32
  }
  func.func @transform_7(%arg0: i32) -> i32 {
    %c0_i32 = arith.constant 0 : i32
    %c0_i32_0 = arith.constant 0 : i32
    return %c0_i32 : i32
  }
  func.func @transform_8(%arg0: i32) -> (i32, i32) {
    %c0_i32 = arith.constant 0 : i32
    %c0_i32_0 = arith.constant 0 : i32
    %c0_i32_1 = arith.constant 0 : i32
    return %c0_i32, %c0_i32_0 : i32, i32
  }
  func.func @transform_9(%arg0: i32) -> (i32, i32) {
    %c0_i32 = arith.constant 0 : i32
    %c0_i32_0 = arith.constant 0 : i32
    %c0_i32_1 = arith.constant 0 : i32
    return %c0_i32, %c0_i32_0 : i32, i32
  }
  func.func @transform_10(%arg0: i32) -> (i32, i32) {
    %c0_i32 = arith.constant 0 : i32
    %c0_i32_0 = arith.constant 0 : i32
    %c0_i32_1 = arith.constant 0 : i32
    return %c0_i32, %c0_i32_0 : i32, i32
  }
  func.func @transform_11(%arg0: i32) -> (i32, i32) {
    %c0_i32 = arith.constant 0 : i32
    %c0_i32_0 = arith.constant 0 : i32
    %c0_i32_1 = arith.constant 0 : i32
    return %c0_i32, %c0_i32_0 : i32, i32
  }
  func.func @transform_12(%arg0: i32) -> (i32, i32) {
    %c0_i32 = arith.constant 0 : i32
    %c0_i32_0 = arith.constant 0 : i32
    %c0_i32_1 = arith.constant 0 : i32
    return %c0_i32, %c0_i32_0 : i32, i32
  }
  func.func @transform_13(%arg0: i32) -> i32 {
    %c0_i32 = arith.constant 0 : i32
    %c0_i32_0 = arith.constant 0 : i32
    return %c0_i32 : i32
  }
  func.func @transform_14(%arg0: i32) -> (i32, i32) {
    %c0_i32 = arith.constant 0 : i32
    %c0_i32_0 = arith.constant 0 : i32
    return %c0_i32, %arg0 : i32, i32
  }
  func.func @transform_15(%arg0: i32) -> (i32, i32) {
    %c0_i32 = arith.constant 0 : i32
    %c0_i32_0 = arith.constant 0 : i32
    return %c0_i32, %arg0 : i32, i32
  }
  func.func @transform_16(%arg0: i32) -> (i32, i32) {
    %c0_i32 = arith.constant 0 : i32
    %c0_i32_0 = arith.constant 0 : i32
    return %c0_i32, %arg0 : i32, i32
  }
}

</mosaic_0001>

<llo_original>
// kernel: tpu_custom_call.1
$region0: #{tpu_custom_call.1}
  #allocation0 [shape = 'u32[]', space=smem, size = 0x4, offset = 0x4, fixed_abs, tag = 'smem constant byte address 0x4 - core index']
  #allocation1 [shape = 'u32[144,128]{1,0:T(1,128)}', space=vmem, size = 0x12000, scoped, tag = 'internal scratch']
  #allocation2 [shape = 'f32[1]{0:T(128)S(6)}', space=smem, size = 0x200, scoped, tag = 'scoped memory for tpu_custom_call.1']
  #allocation3 [shape = 'f32[1]{0:T(128)S(6)}', space=smem, size = 0x200, scoped, tag = 'scoped memory for tpu_custom_call.1']
  %s0 = inlined_call_operand.vmem [shape: f32[8,4,2], index: 0, kind: input, shape index: {}]
  %s1 = inlined_call_operand.vmem [shape: f32[8,2], index: 1, kind: input, shape index: {}]
  %s2 = inlined_call_operand.vmem [shape: f32[96,4], index: 2, kind: input, shape index: {}]
  %s3 = inlined_call_operand.vmem [shape: f32[96,32], index: 3, kind: input, shape index: {}]
  %s4 = inlined_call_operand.vmem [shape: f32[96,1], index: 4, kind: input, shape index: {}]
  %s5 = inlined_call_operand.vmem [shape: f32[32,1], index: 5, kind: input, shape index: {}]
  %s6 = inlined_call_operand.vmem [shape: f32[32,1], index: 6, kind: input, shape index: {}]
  %s7 = inlined_call_operand.<no memory space> [shape: f32[1], index: 7, kind: input, shape index: {}]
  %s8 = inlined_call_operand.vmem [shape: f32[96,1], index: 8, kind: input, shape index: {}]
  %s9 = inlined_call_operand.vmem [shape: f32[96,32], index: 9, kind: input, shape index: {}]
  %s10 = inlined_call_operand.vmem [shape: f32[96,1], index: 10, kind: input, shape index: {}]
  %s11 = inlined_call_operand.vmem [shape: f32[32,1], index: 11, kind: input, shape index: {}]
  %s12 = inlined_call_operand.vmem [shape: f32[32,1], index: 12, kind: input, shape index: {}]
  %s13 = inlined_call_operand.<no memory space> [shape: f32[1], index: 13, kind: input, shape index: {}]
  %s14 = inlined_call_operand.vmem [shape: f32[4,2], index: 14, kind: output, shape index: {0}]
  %s15 = inlined_call_operand.vmem [shape: f32[8,2], index: 15, kind: output, shape index: {1}]
  %s16 = inlined_call_operand.vmem [shape: f32[8,2], index: 16, kind: output, shape index: {2}]
  %17 = xla_tuple %s14, %s15, %s16
  %s18 = sld [smem:[#allocation0]]
  $region82: #{tpu_custom_call.1} parent=0
    _
  %s20 = ssub.s32 1, %s18
  %s21 = scalar_select 0, %s20, %s18
  %22 = sst [smem:[#allocation2]] %s7
  %23 = sst [smem:[#allocation3]] %s13
  // Predicated region
  $region2: #{tpu_custom_call.1} parent=0 // pred_check
    _
  $region3: #{tpu_custom_call.1} parent=0 // pred_check_branch
    %25 = sbr.rel (0) target = $region5
  $region4: #{tpu_custom_call.1} parent=0 // pred_region
    _
  $region5: #{tpu_custom_call.1} parent=0 // pred_fallthru
    _
  // Predicated region
  $region6: #{tpu_custom_call.1} parent=0 // pred_check
    _
  $region7: #{tpu_custom_call.1} parent=0 // pred_check_branch
    %27 = sbr.rel (0) target = $region9
  $region8: #{tpu_custom_call.1} parent=0 // pred_region
    _
  $region9: #{tpu_custom_call.1} parent=0 // pred_fallthru
    _
  // Predicated region
  $region10: #{tpu_custom_call.1} parent=0 // pred_check
    _
  $region11: #{tpu_custom_call.1} parent=0 // pred_check_branch
    %29 = sbr.rel (0) target = $region13
  $region12: #{tpu_custom_call.1} parent=0 // pred_region
    _
  $region13: #{tpu_custom_call.1} parent=0 // pred_fallthru
    _
  // Predicated region
  $region14: #{tpu_custom_call.1} parent=0 // pred_check
    _
  $region15: #{tpu_custom_call.1} parent=0 // pred_check_branch
    %31 = sbr.rel (0) target = $region17
  $region16: #{tpu_custom_call.1} parent=0 // pred_region
    _
  $region17: #{tpu_custom_call.1} parent=0 // pred_fallthru
    _
  // Predicated region
  $region18: #{tpu_custom_call.1} parent=0 // pred_check
    _
  $region19: #{tpu_custom_call.1} parent=0 // pred_check_branch
    %33 = sbr.rel (0) target = $region21
  $region20: #{tpu_custom_call.1} parent=0 // pred_region
    _
  $region21: #{tpu_custom_call.1} parent=0 // pred_fallthru
    _
  // Predicated region
  $region22: #{tpu_custom_call.1} parent=0 // pred_check
    _
  $region23: #{tpu_custom_call.1} parent=0 // pred_check_branch
    %35 = sbr.rel (0) target = $region25
  $region24: #{tpu_custom_call.1} parent=0 // pred_region
    _
  $region25: #{tpu_custom_call.1} parent=0 // pred_fallthru
    _
  // Predicated region
  $region26: #{tpu_custom_call.1} parent=0 // pred_check
    _
  $region27: #{tpu_custom_call.1} parent=0 // pred_check_branch
    %37 = sbr.rel (0) target = $region29
  $region28: #{tpu_custom_call.1} parent=0 // pred_region
    _
  $region29: #{tpu_custom_call.1} parent=0 // pred_fallthru
    _
  // Predicated region
  $region30: #{tpu_custom_call.1} parent=0 // pred_check
    _
  $region31: #{tpu_custom_call.1} parent=0 // pred_check_branch
    %39 = sbr.rel (0) target = $region33
  $region32: #{tpu_custom_call.1} parent=0 // pred_region
    _
  $region33: #{tpu_custom_call.1} parent=0 // pred_fallthru
    _
  // Predicated region
  $region34: #{tpu_custom_call.1} parent=0 // pred_check
    _
  $region35: #{tpu_custom_call.1} parent=0 // pred_check_branch
    %41 = sbr.rel (0) target = $region37
  $region36: #{tpu_custom_call.1} parent=0 // pred_region
    _
  $region37: #{tpu_custom_call.1} parent=0 // pred_fallthru
    _
  // Predicated region
  $region38: #{tpu_custom_call.1} parent=0 // pred_check
    _
  $region39: #{tpu_custom_call.1} parent=0 // pred_check_branch
    %43 = sbr.rel (0) target = $region41
  $region40: #{tpu_custom_call.1} parent=0 // pred_region
    _
  $region41: #{tpu_custom_call.1} parent=0 // pred_fallthru
    _
  // Predicated region
  $region42: #{tpu_custom_call.1} parent=0 // pred_check
    _
  $region43: #{tpu_custom_call.1} parent=0 // pred_check_branch
    %45 = sbr.rel (0) target = $region45
  $region44: #{tpu_custom_call.1} parent=0 // pred_region
    _
  $region45: #{tpu_custom_call.1} parent=0 // pred_fallthru
    _
  // Predicated region
  $region46: #{tpu_custom_call.1} parent=0 // pred_check
    _
  $region47: #{tpu_custom_call.1} parent=0 // pred_check_branch
    %47 = sbr.rel (0) target = $region49
  $region48: #{tpu_custom_call.1} parent=0 // pred_region
    _
  $region49: #{tpu_custom_call.1} parent=0 // pred_fallthru
    _
  // Predicated region
  $region50: #{tpu_custom_call.1} parent=0 // pred_check
    _
  $region51: #{tpu_custom_call.1} parent=0 // pred_check_branch
    %49 = sbr.rel (0) target = $region53
  $region52: #{tpu_custom_call.1} parent=0 // pred_region
    _
  $region53: #{tpu_custom_call.1} parent=0 // pred_fallthru
    _
  // Predicated region
  $region54: #{tpu_custom_call.1} parent=0 // pred_check
    _
  $region55: #{tpu_custom_call.1} parent=0 // pred_check_branch
    %51 = sbr.rel (0) target = $region57
  $region56: #{tpu_custom_call.1} parent=0 // pred_region
    _
  $region57: #{tpu_custom_call.1} parent=0 // pred_fallthru
    _
  %v52 = vld [vmem:[%s2] sm:$0xff]
  %v53 = vld [vmem:[%s2 + $0x8] sm:$0xff]
  %v54 = vld [vmem:[%s2 + $0x10] sm:$0xff]
  %v55 = vld [vmem:[%s2 + $0x18] sm:$0xff]
  %v56 = vld [vmem:[%s2 + $0x20] sm:$0xff]
  %v57 = vld [vmem:[%s2 + $0x28] sm:$0xff]
  %v58 = vld [vmem:[%s2 + $0x30] sm:$0xff]
  %v59 = vld [vmem:[%s2 + $0x38] sm:$0xff]
  %v60 = vld [vmem:[%s2 + $0x40] sm:$0xff]
  %v61 = vld [vmem:[%s2 + $0x48] sm:$0xff]
  %v62 = vld [vmem:[%s2 + $0x50] sm:$0xff]
  %v63 = vld [vmem:[%s2 + $0x58] sm:$0xff]
  %v64 = vld [vmem:[%s3] sm:$0xff]
  %v65 = vld [vmem:[%s3 + $0x8] sm:$0xff]
  %v66 = vld [vmem:[%s3 + $0x10] sm:$0xff]
  %v67 = vld [vmem:[%s3 + $0x18] sm:$0xff]
  %v68 = vld [vmem:[%s3 + $0x20] sm:$0xff]
  %v69 = vld [vmem:[%s3 + $0x28] sm:$0xff]
  %v70 = vld [vmem:[%s3 + $0x30] sm:$0xff]
  %v71 = vld [vmem:[%s3 + $0x38] sm:$0xff]
  %v72 = vld [vmem:[%s3 + $0x40] sm:$0xff]
  %v73 = vld [vmem:[%s3 + $0x48] sm:$0xff]
  %v74 = vld [vmem:[%s3 + $0x50] sm:$0xff]
  %v75 = vld [vmem:[%s3 + $0x58] sm:$0xff]
  %v76 = vld [vmem:[%s4] sm:$0xff]
  %v77 = vld [vmem:[%s4 + $0x8] sm:$0xff]
  %v78 = vld [vmem:[%s4 + $0x10] sm:$0xff]
  %v79 = vld [vmem:[%s4 + $0x18] sm:$0xff]
  %v80 = vld [vmem:[%s4 + $0x20] sm:$0xff]
  %v81 = vld [vmem:[%s4 + $0x28] sm:$0xff]
  %v82 = vld [vmem:[%s4 + $0x30] sm:$0xff]
  %v83 = vld [vmem:[%s4 + $0x38] sm:$0xff]
  %v84 = vld [vmem:[%s4 + $0x40] sm:$0xff]
  %v85 = vld [vmem:[%s4 + $0x48] sm:$0xff]
  %v86 = vld [vmem:[%s4 + $0x50] sm:$0xff]
  %v87 = vld [vmem:[%s4 + $0x58] sm:$0xff]
  %89 = vset.pattern.permute.xlu0 0
  %90 = vperm.xlu0 %89, %v76
  %v91 = vpop.permute.xlu0 %90
  %94 = vset.pattern.permute.xlu0 0
  %95 = vperm.xlu0 %94, %v77
  %v96 = vpop.permute.xlu0 %95
  %99 = vset.pattern.permute.xlu0 0
  %100 = vperm.xlu0 %99, %v78
  %v101 = vpop.permute.xlu0 %100
  %104 = vset.pattern.permute.xlu0 0
  %105 = vperm.xlu0 %104, %v79
  %v106 = vpop.permute.xlu0 %105
  %109 = vset.pattern.permute.xlu0 0
  %110 = vperm.xlu0 %109, %v80
  %v111 = vpop.permute.xlu0 %110
  %114 = vset.pattern.permute.xlu0 0
  %115 = vperm.xlu0 %114, %v81
  %v116 = vpop.permute.xlu0 %115
  %119 = vset.pattern.permute.xlu0 0
  %120 = vperm.xlu0 %119, %v82
  %v121 = vpop.permute.xlu0 %120
  %124 = vset.pattern.permute.xlu0 0
  %125 = vperm.xlu0 %124, %v83
  %v126 = vpop.permute.xlu0 %125
  %129 = vset.pattern.permute.xlu0 0
  %130 = vperm.xlu0 %129, %v84
  %v131 = vpop.permute.xlu0 %130
  %134 = vset.pattern.permute.xlu0 0
  %135 = vperm.xlu0 %134, %v85
  %v136 = vpop.permute.xlu0 %135
  %139 = vset.pattern.permute.xlu0 0
  %140 = vperm.xlu0 %139, %v86
  %v141 = vpop.permute.xlu0 %140
  %144 = vset.pattern.permute.xlu0 0
  %145 = vperm.xlu0 %144, %v87
  %v146 = vpop.permute.xlu0 %145
  %v148 = vld [vmem:[%s5] sm:$0xff]
  %v149 = vld [vmem:[%s5 + $0x8] sm:$0xff]
  %v150 = vld [vmem:[%s5 + $0x10] sm:$0xff]
  %v151 = vld [vmem:[%s5 + $0x18] sm:$0xff]
  %153 = vset.pattern.permute.xlu0 0
  %154 = vperm.xlu0 %153, %v148
  %v155 = vpop.permute.xlu0 %154
  %158 = vset.pattern.permute.xlu0 0
  %159 = vperm.xlu0 %158, %v149
  %v160 = vpop.permute.xlu0 %159
  %163 = vset.pattern.permute.xlu0 0
  %164 = vperm.xlu0 %163, %v150
  %v165 = vpop.permute.xlu0 %164
  %168 = vset.pattern.permute.xlu0 0
  %169 = vperm.xlu0 %168, %v151
  %v170 = vpop.permute.xlu0 %169
  %v172 = vld [vmem:[%s6] sm:$0xff]
  %v173 = vld [vmem:[%s6 + $0x8] sm:$0xff]
  %v174 = vld [vmem:[%s6 + $0x10] sm:$0xff]
  %v175 = vld [vmem:[%s6 + $0x18] sm:$0xff]
  %177 = vset.pattern.permute.xlu0 0
  %178 = vperm.xlu0 %177, %v172
  %v179 = vpop.permute.xlu0 %178
  %182 = vset.pattern.permute.xlu0 0
  %183 = vperm.xlu0 %182, %v173
  %v184 = vpop.permute.xlu0 %183
  %187 = vset.pattern.permute.xlu0 0
  %188 = vperm.xlu0 %187, %v174
  %v189 = vpop.permute.xlu0 %188
  %192 = vset.pattern.permute.xlu0 0
  %193 = vperm.xlu0 %192, %v175
  %v194 = vpop.permute.xlu0 %193
  %s196 = sld [smem:[#allocation2]]
  %v197 = vld [vmem:[%s0] sm:$0xf]
  %vm198 = vcmask 31744
  %v200 = vsel %vm198, %v52, 0
  %v203 = vsel %vm198, %v53, 0
  %v206 = vsel %vm198, %v54, 0
  %v209 = vsel %vm198, %v55, 0
  %v212 = vsel %vm198, %v56, 0
  %v215 = vsel %vm198, %v57, 0
  %v218 = vsel %vm198, %v58, 0
  %v221 = vsel %vm198, %v59, 0
  %v224 = vsel %vm198, %v60, 0
  %v227 = vsel %vm198, %v61, 0
  %v230 = vsel %vm198, %v62, 0
  %v233 = vsel %vm198, %v63, 0
  %vm235 = vcmask 1043456
  %v237 = vsel %vm235, %v197, 0
  %239 = vmatprep.subr.mxu0 0.0
  %240 = vmatpush1.msra.mxu0 %v237
  %241 = vmatprep.subr.mxu0 0.0
  %242 = vmatpush1.msra.mxu0 0.0
  %243 = vmatprep.subr.mxu0 0.0
  %244 = vmatpush1.msra.mxu0 0.0
  %245 = vmatprep.subr.mxu0 0.0
  %246 = vmatpush1.msra.mxu0 0.0
  %247 = vmatprep.subr.mxu0 0.0
  %248 = vmatpush1.msra.mxu0 0.0
  %249 = vmatprep.subr.mxu0 0.0
  %250 = vmatpush1.msra.mxu0 0.0
  %251 = vmatprep.subr.mxu0 0.0
  %252 = vmatpush1.msra.mxu0 0.0
  %253 = vmatprep.subr.mxu0 0.0
  %254 = vmatpush1.msra.mxu0 0.0
  %255 = vmatprep.subr.mxu0 0.0
  %256 = vmatpush1.msra.mxu0 0.0
  %257 = vmatprep.subr.mxu0 0.0
  %258 = vmatpush1.msra.mxu0 0.0
  %259 = vmatprep.subr.mxu0 0.0
  %260 = vmatpush1.msra.mxu0 0.0
  %261 = vmatprep.subr.mxu0 0.0
  %262 = vmatpush1.msra.mxu0 0.0
  %263 = vmatprep.subr.mxu0 0.0
  %264 = vmatpush1.msra.mxu0 0.0
  %265 = vmatprep.subr.mxu0 0.0
  %266 = vmatpush1.msra.mxu0 0.0
  %267 = vmatprep.subr.mxu0 0.0
  %268 = vmatpush1.msra.mxu0 0.0
  %269 = vmatprep.subr.mxu0 0.0
  %270 = vmatpush1.msra.mxu0 0.0
  %271 = vmatprep.subr.mxu0 0.0
  %272 = vmatpush1.msra.mxu0 0.0
  %273 = vmatprep.subr.mxu0 0.0
  %274 = vmatpush1.msra.mxu0 0.0
  %275 = vmatprep.subr.mxu0 0.0
  %276 = vmatpush1.msra.mxu0 0.0
  %277 = vmatprep.subr.mxu0 0.0
  %278 = vmatpush1.msra.mxu0 0.0
  %279 = vmatprep.subr.mxu0 0.0
  %280 = vmatpush1.msra.mxu0 0.0
  %281 = vmatprep.subr.mxu0 0.0
  %282 = vmatpush1.msra.mxu0 0.0
  %283 = vmatprep.subr.mxu0 0.0
  %284 = vmatpush1.msra.mxu0 0.0
  %285 = vmatprep.subr.mxu0 0.0
  %286 = vmatpush1.msra.mxu0 0.0
  %287 = vmatprep.subr.mxu0 0.0
  %288 = vmatpush1.msra.mxu0 0.0
  %289 = vmatprep.subr.mxu0 0.0
  %290 = vmatpush1.msra.mxu0 0.0
  %291 = vmatprep.subr.mxu0 0.0
  %292 = vmatpush1.msra.mxu0 0.0
  %293 = vmatprep.subr.mxu0 0.0
  %294 = vmatpush1.msra.mxu0 0.0
  %295 = vmatprep.subr.mxu0 0.0
  %296 = vmatpush1.msra.mxu0 0.0
  %297 = vmatprep.subr.mxu0 0.0
  %298 = vmatpush1.msra.mxu0 0.0
  %299 = vmatprep.subr.mxu0 0.0
  %300 = vmatpush1.msra.mxu0 0.0
  %301 = vmatprep.subr.mxu0 0.0
  %302 = vmatpush1.msra.mxu0 0.0
  %303 = vmatprep.mubr.f32.mxu0 0.0
  %304 = vmatmul.mubr.f32.gmra.mrb[0].mxu0 %v200
  %v305 = vpop.f32.mrb[0].mxu0
  %v306 = vadd.f32 %v91, %v305
  %v307 = vpop.f32.mrb[0].mxu0
  %308 = vmatprep.mubr.f32.mxu0 0.0
  %309 = vmatmul.mubr.f32.gmra.mrb[0].mxu0 %v203
  %v310 = vpop.f32.mrb[0].mxu0
  %v311 = vadd.f32 %v96, %v310
  %v312 = vpop.f32.mrb[0].mxu0
  %313 = vmatprep.mubr.f32.mxu0 0.0
  %314 = vmatmul.mubr.f32.gmra.mrb[0].mxu0 %v206
  %v315 = vpop.f32.mrb[0].mxu0
  %v316 = vadd.f32 %v101, %v315
  %v317 = vpop.f32.mrb[0].mxu0
  %318 = vmatprep.mubr.f32.mxu0 0.0
  %319 = vmatmul.mubr.f32.gmra.mrb[0].mxu0 %v209
  %v320 = vpop.f32.mrb[0].mxu0
  %v321 = vadd.f32 %v106, %v320
  %v322 = vpop.f32.mrb[0].mxu0
  %323 = vmatprep.mubr.f32.mxu0 0.0
  %324 = vmatmul.mubr.f32.gmra.mrb[0].mxu0 %v212
  %v325 = vpop.f32.mrb[0].mxu0
  %v326 = vadd.f32 %v111, %v325
  %v327 = vpop.f32.mrb[0].mxu0
  %328 = vmatprep.mubr.f32.mxu0 0.0
  %329 = vmatmul.mubr.f32.gmra.mrb[0].mxu0 %v215
  %v330 = vpop.f32.mrb[0].mxu0
  %v331 = vadd.f32 %v116, %v330
  %v332 = vpop.f32.mrb[0].mxu0
  %333 = vmatprep.mubr.f32.mxu0 0.0
  %334 = vmatmul.mubr.f32.gmra.mrb[0].mxu0 %v218
  %v335 = vpop.f32.mrb[0].mxu0
  %v336 = vadd.f32 %v121, %v335
  %v337 = vpop.f32.mrb[0].mxu0
  %338 = vmatprep.mubr.f32.mxu0 0.0
  %339 = vmatmul.mubr.f32.gmra.mrb[0].mxu0 %v221
  %v340 = vpop.f32.mrb[0].mxu0
  %v341 = vadd.f32 %v126, %v340
  %v342 = vpop.f32.mrb[0].mxu0
  %343 = vmatprep.mubr.f32.mxu0 0.0
  %344 = vmatmul.mubr.f32.gmra.mrb[0].mxu0 %v224
  %v345 = vpop.f32.mrb[0].mxu0
  %v346 = vadd.f32 %v131, %v345
  %v347 = vpop.f32.mrb[0].mxu0
  %348 = vmatprep.mubr.f32.mxu0 0.0
  %349 = vmatmul.mubr.f32.gmra.mrb[0].mxu0 %v227
  %v350 = vpop.f32.mrb[0].mxu0
  %v351 = vadd.f32 %v136, %v350
  %v352 = vpop.f32.mrb[0].mxu0
  %353 = vmatprep.mubr.f32.mxu0 0.0
  %354 = vmatmul.mubr.f32.gmra.mrb[0].mxu0 %v230
  %v355 = vpop.f32.mrb[0].mxu0
  %v356 = vadd.f32 %v141, %v355
  %v357 = vpop.f32.mrb[0].mxu0
  %358 = vmatprep.mubr.f32.mxu0 0.0
  %359 = vmatmul.mubr.f32.gmra.mrb[0].mxu0 %v233
  %v360 = vpop.f32.mrb[0].mxu0
  %v361 = vadd.f32 %v146, %v360
  %v362 = vpop.f32.mrb[0].mxu0
  %363 = vdwg.mxu0
  %s364 = scalar_lea.vmem %s0, 4
  %v365 = vld [vmem:[%s364] sm:$0xf]
  %v367 = vsel %vm235, %v365, 0
  %369 = vmatprep.subr.mxu0 0.0
  %370 = vmatpush1.msra.mxu0 %v367
  %371 = vmatprep.subr.mxu0 0.0
  %372 = vmatpush1.msra.mxu0 0.0
  %373 = vmatprep.subr.mxu0 0.0
  %374 = vmatpush1.msra.mxu0 0.0
  %375 = vmatprep.subr.mxu0 0.0
  %376 = vmatpush1.msra.mxu0 0.0
  %377 = vmatprep.subr.mxu0 0.0
  %378 = vmatpush1.msra.mxu0 0.0
  %379 = vmatprep.subr.mxu0 0.0
  %380 = vmatpush1.msra.mxu0 0.0
  %381 = vmatprep.subr.mxu0 0.0
  %382 = vmatpush1.msra.mxu0 0.0
  %383 = vmatprep.subr.mxu0 0.0
  %384 = vmatpush1.msra.mxu0 0.0
  %385 = vmatprep.subr.mxu0 0.0
  %386 = vmatpush1.msra.mxu0 0.0
  %387 = vmatprep.subr.mxu0 0.0
  %388 = vmatpush1.msra.mxu0 0.0
  %389 = vmatprep.subr.mxu0 0.0
  %390 = vmatpush1.msra.mxu0 0.0
  %391 = vmatprep.subr.mxu0 0.0
  %392 = vmatpush1.msra.mxu0 0.0
  %393 = vmatprep.subr.mxu0 0.0
  %394 = vmatpush1.msra.mxu0 0.0
  %395 = vmatprep.subr.mxu0 0.0
  %396 = vmatpush1.msra.mxu0 0.0
  %397 = vmatprep.subr.mxu0 0.0
  %398 = vmatpush1.msra.mxu0 0.0
  %399 = vmatprep.subr.mxu0 0.0
  %400 = vmatpush1.msra.mxu0 0.0
  %401 = vmatprep.subr.mxu0 0.0
  %402 = vmatpush1.msra.mxu0 0.0
  %403 = vmatprep.subr.mxu0 0.0
  %404 = vmatpush1.msra.mxu0 0.0
  %405 = vmatprep.subr.mxu0 0.0
  %406 = vmatpush1.msra.mxu0 0.0
  %407 = vmatprep.subr.mxu0 0.0
  %408 = vmatpush1.msra.mxu0 0.0
  %409 = vmatprep.subr.mxu0 0.0
  %410 = vmatpush1.msra.mxu0 0.0
  %411 = vmatprep.subr.mxu0 0.0
  %412 = vmatpush1.msra.mxu0 0.0
  %413 = vmatprep.subr.mxu0 0.0
  %414 = vmatpush1.msra.mxu0 0.0
  %415 = vmatprep.subr.mxu0 0.0
  %416 = vmatpush1.msra.mxu0 0.0
  %417 = vmatprep.subr.mxu0 0.0
  %418 = vmatpush1.msra.mxu0 0.0
  %419 = vmatprep.subr.mxu0 0.0
  %420 = vmatpush1.msra.mxu0 0.0
  %421 = vmatprep.subr.mxu0 0.0
  %422 = vmatpush1.msra.mxu0 0.0
  %423 = vmatprep.subr.mxu0 0.0
  %424 = vmatpush1.msra.mxu0 0.0
  %425 = vmatprep.subr.mxu0 0.0
  %426 = vmatpush1.msra.mxu0 0.0
  %427 = vmatprep.subr.mxu0 0.0
  %428 = vmatpush1.msra.mxu0 0.0
  %429 = vmatprep.subr.mxu0 0.0
  %430 = vmatpush1.msra.mxu0 0.0
  %431 = vmatprep.subr.mxu0 0.0
  %432 = vmatpush1.msra.mxu0 0.0
  %433 = vmatprep.mubr.f32.mxu0 0.0
  %434 = vmatmul.mubr.f32.gmra.mrb[0].mxu0 %v200
  %v435 = vpop.f32.mrb[0].mxu0
  %v436 = vadd.f32 %v91, %v435
  %v437 = vpop.f32.mrb[0].mxu0
  %438 = vmatprep.mubr.f32.mxu0 0.0
  %439 = vmatmul.mubr.f32.gmra.mrb[0].mxu0 %v203
  %v440 = vpop.f32.mrb[0].mxu0
  %v441 = vadd.f32 %v96, %v440
  %v442 = vpop.f32.mrb[0].mxu0
  %443 = vmatprep.mubr.f32.mxu0 0.0
  %444 = vmatmul.mubr.f32.gmra.mrb[0].mxu0 %v206
  %v445 = vpop.f32.mrb[0].mxu0
  %v446 = vadd.f32 %v101, %v445
  %v447 = vpop.f32.mrb[0].mxu0
  %448 = vmatprep.mubr.f32.mxu0 0.0
  %449 = vmatmul.mubr.f32.gmra.mrb[0].mxu0 %v209
  %v450 = vpop.f32.mrb[0].mxu0
  %v451 = vadd.f32 %v106, %v450
  %v452 = vpop.f32.mrb[0].mxu0
  %453 = vmatprep.mubr.f32.mxu0 0.0
  %454 = vmatmul.mubr.f32.gmra.mrb[0].mxu0 %v212
  %v455 = vpop.f32.mrb[0].mxu0
  %v456 = vadd.f32 %v111, %v455
  %v457 = vpop.f32.mrb[0].mxu0
  %458 = vmatprep.mubr.f32.mxu0 0.0
  %459 = vmatmul.mubr.f32.gmra.mrb[0].mxu0 %v215
  %v460 = vpop.f32.mrb[0].mxu0
  %v461 = vadd.f32 %v116, %v460
  %v462 = vpop.f32.mrb[0].mxu0
  %463 = vmatprep.mubr.f32.mxu0 0.0
  %464 = vmatmul.mubr.f32.gmra.mrb[0].mxu0 %v218
  %v465 = vpop.f32.mrb[0].mxu0
  %v466 = vadd.f32 %v121, %v465
  %v467 = vpop.f32.mrb[0].mxu0
  %468 = vmatprep.mubr.f32.mxu0 0.0
  %469 = vmatmul.mubr.f32.gmra.mrb[0].mxu0 %v221
  %v470 = vpop.f32.mrb[0].mxu0
  %v471 = vadd.f32 %v126, %v470
  %v472 = vpop.f32.mrb[0].mxu0
  %473 = vmatprep.mubr.f32.mxu0 0.0
  %474 = vmatmul.mubr.f32.gmra.mrb[0].mxu0 %v224
  %v475 = vpop.f32.mrb[0].mxu0
  %v476 = vadd.f32 %v131, %v475
  %v477 = vpop.f32.mrb[0].mxu0
  %478 = vmatprep.mubr.f32.mxu0 0.0
  %479 = vmatmul.mubr.f32.gmra.mrb[0].mxu0 %v227
  %v480 = vpop.f32.mrb[0].mxu0
  %v481 = vadd.f32 %v136, %v480
  %v482 = vpop.f32.mrb[0].mxu0
  %483 = vmatprep.mubr.f32.mxu0 0.0
  %484 = vmatmul.mubr.f32.gmra.mrb[0].mxu0 %v230
  %v485 = vpop.f32.mrb[0].mxu0
  %v486 = vadd.f32 %v141, %v485
  %v487 = vpop.f32.mrb[0].mxu0
  %488 = vmatprep.mubr.f32.mxu0 0.0
  %489 = vmatmul.mubr.f32.gmra.mrb[0].mxu0 %v233
  %v490 = vpop.f32.mrb[0].mxu0
  %v491 = vadd.f32 %v146, %v490
  %v492 = vpop.f32.mrb[0].mxu0
  %493 = vdwg.mxu0
  %s494 = scalar_lea.vmem %s0, 8
  %v495 = vld [vmem:[%s494] sm:$0xf]
  %v497 = vsel %vm235, %v495, 0
  %499 = vmatprep.subr.mxu0 0.0
  %500 = vmatpush1.msra.mxu0 %v497
  %501 = vmatprep.subr.mxu0 0.0
  %502 = vmatpush1.msra.mxu0 0.0
  %503 = vmatprep.subr.mxu0 0.0
  %504 = vmatpush1.msra.mxu0 0.0
  %505 = vmatprep.subr.mxu0 0.0
  %506 = vmatpush1.msra.mxu0 0.0
  %507 = vmatprep.subr.mxu0 0.0
  %508 = vmatpush1.msra.mxu0 0.0
  %509 = vmatprep.subr.mxu0 0.0
  %510 = vmatpush1.msra.mxu0 0.0
  %511 = vmatprep.subr.mxu0 0.0
  %512 = vmatpush1.msra.mxu0 0.0
  %513 = vmatprep.subr.mxu0 0.0
  %514 = vmatpush1.msra.mxu0 0.0
  %515 = vmatprep.subr.mxu0 0.0
  %516 = vmatpush1.msra.mxu0 0.0
  %517 = vmatprep.subr.mxu0 0.0
  %518 = vmatpush1.msra.mxu0 0.0
  %519 = vmatprep.subr.mxu0 0.0
  %520 = vmatpush1.msra.mxu0 0.0
  %521 = vmatprep.subr.mxu0 0.0
  %522 = vmatpush1.msra.mxu0 0.0
  %523 = vmatprep.subr.mxu0 0.0
  %524 = vmatpush1.msra.mxu0 0.0
  %525 = vmatprep.subr.mxu0 0.0
  %526 = vmatpush1.msra.mxu0 0.0
  %527 = vmatprep.subr.mxu0 0.0
  %528 = vmatpush1.msra.mxu0 0.0
  %529 = vmatprep.subr.mxu0 0.0
  %530 = vmatpush1.msra.mxu0 0.0
  %531 = vmatprep.subr.mxu0 0.0
  %532 = vmatpush1.msra.mxu0 0.0
  %533 = vmatprep.subr.mxu0 0.0
  %534 = vmatpush1.msra.mxu0 0.0
  %535 = vmatprep.subr.mxu0 0.0
  %536 = vmatpush1.msra.mxu0 0.0
  %537 = vmatprep.subr.mxu0 0.0
  %538 = vmatpush1.msra.mxu0 0.0
  %539 = vmatprep.subr.mxu0 0.0
  %540 = vmatpush1.msra.mxu0 0.0
  %541 = vmatprep.subr.mxu0 0.0
  %542 = vmatpush1.msra.mxu0 0.0
  %543 = vmatprep.subr.mxu0 0.0
  %544 = vmatpush1.msra.mxu0 0.0
  %545 = vmatprep.subr.mxu0 0.0
  %546 = vmatpush1.msra.mxu0 0.0
  %547 = vmatprep.subr.mxu0 0.0
  %548 = vmatpush1.msra.mxu0 0.0
  %549 = vmatprep.subr.mxu0 0.0
  %550 = vmatpush1.msra.mxu0 0.0
  %551 = vmatprep.subr.mxu0 0.0
  %552 = vmatpush1.msra.mxu0 0.0
  %553 = vmatprep.subr.mxu0 0.0
  %554 = vmatpush1.msra.mxu0 0.0
  %555 = vmatprep.subr.mxu0 0.0
  %556 = vmatpush1.msra.mxu0 0.0
  %557 = vmatprep.subr.mxu0 0.0
  %558 = vmatpush1.msra.mxu0 0.0
  %559 = vmatprep.subr.mxu0 0.0
  %560 = vmatpush1.msra.mxu0 0.0
  %561 = vmatprep.subr.mxu0 0.0
  %562 = vmatpush1.msra.mxu0 0.0
  %563 = vmatprep.mubr.f32.mxu0 0.0
  %564 = vmatmul.mubr.f32.gmra.mrb[0].mxu0 %v200
  %v565 = vpop.f32.mrb[0].mxu0
  %v566 = vadd.f32 %v91, %v565
  %v567 = vpop.f32.mrb[0].mxu0
  %568 = vmatprep.mubr.f32.mxu0 0.0
  %569 = vmatmul.mubr.f32.gmra.mrb[0].mxu0 %v203
  %v570 = vpop.f32.mrb[0].mxu0
  %v571 = vadd.f32 %v96, %v570
  %v572 = vpop.f32.mrb[0].mxu0
  %573 = vmatprep.mubr.f32.mxu0 0.0
  %574 = vmatmul.mubr.f32.gmra.mrb[0].mxu0 %v206
  %v575 = vpop.f32.mrb[0].mxu0
  %v576 = vadd.f32 %v101, %v575
  %v577 = vpop.f32.mrb[0].mxu0
  %578 = vmatprep.mubr.f32.mxu0 0.0
  %579 = vmatmul.mubr.f32.gmra.mrb[0].mxu0 %v209
  %v580 = vpop.f32.mrb[0].mxu0
  %v581 = vadd.f32 %v106, %v580
  %v582 = vpop.f32.mrb[0].mxu0
  %583 = vmatprep.mubr.f32.mxu0 0.0
  %584 = vmatmul.mubr.f32.gmra.mrb[0].mxu0 %v212
  %v585 = vpop.f32.mrb[0].mxu0
  %v586 = vadd.f32 %v111, %v585
  %v587 = vpop.f32.mrb[0].mxu0
  %588 = vmatprep.mubr.f32.mxu0 0.0
  %589 = vmatmul.mubr.f32.gmra.mrb[0].mxu0 %v215
  %v590 = vpop.f32.mrb[0].mxu0
  %v591 = vadd.f32 %v116, %v590
  %v592 = vpop.f32.mrb[0].mxu0
  %593 = vmatprep.mubr.f32.mxu0 0.0
  %594 = vmatmul.mubr.f32.gmra.mrb[0].mxu0 %v218
  %v595 = vpop.f32.mrb[0].mxu0
  %v596 = vadd.f32 %v121, %v595
  %v597 = vpop.f32.mrb[0].mxu0
  %598 = vmatprep.mubr.f32.mxu0 0.0
  %599 = vmatmul.mubr.f32.gmra.mrb[0].mxu0 %v221
  %v600 = vpop.f32.mrb[0].mxu0
  %v601 = vadd.f32 %v126, %v600
  %v602 = vpop.f32.mrb[0].mxu0
  %603 = vmatprep.mubr.f32.mxu0 0.0
  %604 = vmatmul.mubr.f32.gmra.mrb[0].mxu0 %v224
  %v605 = vpop.f32.mrb[0].mxu0
  %v606 = vadd.f32 %v131, %v605
  %v607 = vpop.f32.mrb[0].mxu0
  %608 = vmatprep.mubr.f32.mxu0 0.0
  %609 = vmatmul.mubr.f32.gmra.mrb[0].mxu0 %v227
  %v610 = vpop.f32.mrb[0].mxu0
  %v611 = vadd.f32 %v136, %v610
  %v612 = vpop.f32.mrb[0].mxu0
  %613 = vmatprep.mubr.f32.mxu0 0.0
  %614 = vmatmul.mubr.f32.gmra.mrb[0].mxu0 %v230
  %v615 = vpop.f32.mrb[0].mxu0
  %v616 = vadd.f32 %v141, %v615
  %v617 = vpop.f32.mrb[0].mxu0
  %618 = vmatprep.mubr.f32.mxu0 0.0
  %619 = vmatmul.mubr.f32.gmra.mrb[0].mxu0 %v233
  %v620 = vpop.f32.mrb[0].mxu0
  %v621 = vadd.f32 %v146, %v620
  %v622 = vpop.f32.mrb[0].mxu0
  %623 = vdwg.mxu0
  %s624 = scalar_lea.vmem %s0, 12
  %v625 = vld [vmem:[%s624] sm:$0xf]
  %v627 = vsel %vm235, %v625, 0
  %629 = vmatprep.subr.mxu0 0.0
  %630 = vmatpush1.msra.mxu0 %v627
  %631 = vmatprep.subr.mxu0 0.0
  %632 = vmatpush1.msra.mxu0 0.0
  %633 = vmatprep.subr.mxu0 0.0
  %634 = vmatpush1.msra.mxu0 0.0
  %635 = vmatprep.subr.mxu0 0.0
  %636 = vmatpush1.msra.mxu0 0.0
  %637 = vmatprep.subr.mxu0 0.0
  %638 = vmatpush1.msra.mxu0 0.0
  %639 = vmatprep.subr.mxu0 0.0
  %640 = vmatpush1.msra.mxu0 0.0
  %641 = vmatprep.subr.mxu0 0.0
  %642 = vmatpush1.msra.mxu0 0.0
  %643 = vmatprep.subr.mxu0 0.0
  %644 = vmatpush1.msra.mxu0 0.0
  %645 = vmatprep.subr.mxu0 0.0
  %646 = vmatpush1.msra.mxu0 0.0
  %647 = vmatprep.subr.mxu0 0.0
  %648 = vmatpush1.msra.mxu0 0.0
  %649 = vmatprep.subr.mxu0 0.0
  %650 = vmatpush1.msra.mxu0 0.0
  %651 = vmatprep.subr.mxu0 0.0
  %652 = vmatpush1.msra.mxu0 0.0
  %653 = vmatprep.subr.mxu0 0.0
  %654 = vmatpush1.msra.mxu0 0.0
  %655 = vmatprep.subr.mxu0 0.0
  %656 = vmatpush1.msra.mxu0 0.0
  %657 = vmatprep.subr.mxu0 0.0
  %658 = vmatpush1.msra.mxu0 0.0
  %659 = vmatprep.subr.mxu0 0.0
  %660 = vmatpush1.msra.mxu0 0.0
  %661 = vmatprep.subr.mxu0 0.0
  %662 = vmatpush1.msra.mxu0 0.0
  %663 = vmatprep.subr.mxu0 0.0
  %664 = vmatpush1.msra.mxu0 0.0
  %665 = vmatprep.subr.mxu0 0.0
  %666 = vmatpush1.msra.mxu0 0.0
  %667 = vmatprep.subr.mxu0 0.0
  %668 = vmatpush1.msra.mxu0 0.0
  %669 = vmatprep.subr.mxu0 0.0
  %670 = vmatpush1.msra.mxu0 0.0
  %671 = vmatprep.subr.mxu0 0.0
  %672 = vmatpush1.msra.mxu0 0.0
  %673 = vmatprep.subr.mxu0 0.0
  %674 = vmatpush1.msra.mxu0 0.0
  %675 = vmatprep.subr.mxu0 0.0
  %676 = vmatpush1.msra.mxu0 0.0
  %677 = vmatprep.subr.mxu0 0.0
  %678 = vmatpush1.msra.mxu0 0.0
  %679 = vmatprep.subr.mxu0 0.0
  %680 = vmatpush1.msra.mxu0 0.0
  %681 = vmatprep.subr.mxu0 0.0
  %682 = vmatpush1.msra.mxu0 0.0
  %683 = vmatprep.subr.mxu0 0.0
  %684 = vmatpush1.msra.mxu0 0.0
  %685 = vmatprep.subr.mxu0 0.0
  %686 = vmatpush1.msra.mxu0 0.0
  %687 = vmatprep.subr.mxu0 0.0
  %688 = vmatpush1.msra.mxu0 0.0
  %689 = vmatprep.subr.mxu0 0.0
  %690 = vmatpush1.msra.mxu0 0.0
  %691 = vmatprep.subr.mxu0 0.0
  %692 = vmatpush1.msra.mxu0 0.0
  %693 = vmatprep.mubr.f32.mxu0 0.0
  %694 = vmatmul.mubr.f32.gmra.mrb[0].mxu0 %v200
  %v695 = vpop.f32.mrb[0].mxu0
  %v696 = vadd.f32 %v91, %v695
  %v697 = vpop.f32.mrb[0].mxu0
  %698 = vmatprep.mubr.f32.mxu0 0.0
  %699 = vmatmul.mubr.f32.gmra.mrb[0].mxu0 %v203
  %v700 = vpop.f32.mrb[0].mxu0
  %v701 = vadd.f32 %v96, %v700
  %v702 = vpop.f32.mrb[0].mxu0
  %703 = vmatprep.mubr.f32.mxu0 0.0
  %704 = vmatmul.mubr.f32.gmra.mrb[0].mxu0 %v206
  %v705 = vpop.f32.mrb[0].mxu0
  %v706 = vadd.f32 %v101, %v705
  %v707 = vpop.f32.mrb[0].mxu0
  %708 = vmatprep.mubr.f32.mxu0 0.0
  %709 = vmatmul.mubr.f32.gmra.mrb[0].mxu0 %v209
  %v710 = vpop.f32.mrb[0].mxu0
  %v711 = vadd.f32 %v106, %v710
  %v712 = vpop.f32.mrb[0].mxu0
  %713 = vmatprep.mubr.f32.mxu0 0.0
  %714 = vmatmul.mubr.f32.gmra.mrb[0].mxu0 %v212
  %v715 = vpop.f32.mrb[0].mxu0
  %v716 = vadd.f32 %v111, %v715
  %v717 = vpop.f32.mrb[0].mxu0
  %718 = vmatprep.mubr.f32.mxu0 0.0
  %719 = vmatmul.mubr.f32.gmra.mrb[0].mxu0 %v215
  %v720 = vpop.f32.mrb[0].mxu0
  %v721 = vadd.f32 %v116, %v720
  %v722 = vpop.f32.mrb[0].mxu0
  %723 = vmatprep.mubr.f32.mxu0 0.0
  %724 = vmatmul.mubr.f32.gmra.mrb[0].mxu0 %v218
  %v725 = vpop.f32.mrb[0].mxu0
  %v726 = vadd.f32 %v121, %v725
  %v727 = vpop.f32.mrb[0].mxu0
  %728 = vmatprep.mubr.f32.mxu0 0.0
  %729 = vmatmul.mubr.f32.gmra.mrb[0].mxu0 %v221
  %v730 = vpop.f32.mrb[0].mxu0
  %v731 = vadd.f32 %v126, %v730
  %v732 = vpop.f32.mrb[0].mxu0
  %733 = vmatprep.mubr.f32.mxu0 0.0
  %734 = vmatmul.mubr.f32.gmra.mrb[0].mxu0 %v224
  %v735 = vpop.f32.mrb[0].mxu0
  %v736 = vadd.f32 %v131, %v735
  %v737 = vpop.f32.mrb[0].mxu0
  %738 = vmatprep.mubr.f32.mxu0 0.0
  %739 = vmatmul.mubr.f32.gmra.mrb[0].mxu0 %v227
  %v740 = vpop.f32.mrb[0].mxu0
  %v741 = vadd.f32 %v136, %v740
  %v742 = vpop.f32.mrb[0].mxu0
  %743 = vmatprep.mubr.f32.mxu0 0.0
  %744 = vmatmul.mubr.f32.gmra.mrb[0].mxu0 %v230
  %v745 = vpop.f32.mrb[0].mxu0
  %v746 = vadd.f32 %v141, %v745
  %v747 = vpop.f32.mrb[0].mxu0
  %748 = vmatprep.mubr.f32.mxu0 0.0
  %749 = vmatmul.mubr.f32.gmra.mrb[0].mxu0 %v233
  %v750 = vpop.f32.mrb[0].mxu0
  %v751 = vadd.f32 %v146, %v750
  %v752 = vpop.f32.mrb[0].mxu0
  %753 = vdwg.mxu0
  %s754 = scalar_lea.vmem %s0, 16
  %v755 = vld [vmem:[%s754] sm:$0xf]
  %v757 = vsel %vm235, %v755, 0
  %759 = vmatprep.subr.mxu0 0.0
  %760 = vmatpush1.msra.mxu0 %v757
  %761 = vmatprep.subr.mxu0 0.0
  %762 = vmatpush1.msra.mxu0 0.0
  %763 = vmatprep.subr.mxu0 0.0
  %764 = vmatpush1.msra.mxu0 0.0
  %765 = vmatprep.subr.mxu0 0.0
  %766 = vmatpush1.msra.mxu0 0.0
  %767 = vmatprep.subr.mxu0 0.0
  %768 = vmatpush1.msra.mxu0 0.0
  %769 = vmatprep.subr.mxu0 0.0
  %770 = vmatpush1.msra.mxu0 0.0
  %771 = vmatprep.subr.mxu0 0.0
  %772 = vmatpush1.msra.mxu0 0.0
  %773 = vmatprep.subr.mxu0 0.0
  %774 = vmatpush1.msra.mxu0 0.0
  %775 = vmatprep.subr.mxu0 0.0
  %776 = vmatpush1.msra.mxu0 0.0
  %777 = vmatprep.subr.mxu0 0.0
  %778 = vmatpush1.msra.mxu0 0.0
  %779 = vmatprep.subr.mxu0 0.0
  %780 = vmatpush1.msra.mxu0 0.0
  %781 = vmatprep.subr.mxu0 0.0
  %782 = vmatpush1.msra.mxu0 0.0
  %783 = vmatprep.subr.mxu0 0.0
  %784 = vmatpush1.msra.mxu0 0.0
  %785 = vmatprep.subr.mxu0 0.0
  %786 = vmatpush1.msra.mxu0 0.0
  %787 = vmatprep.subr.mxu0 0.0
  %788 = vmatpush1.msra.mxu0 0.0
  %789 = vmatprep.subr.mxu0 0.0
  %790 = vmatpush1.msra.mxu0 0.0
  %791 = vmatprep.subr.mxu0 0.0
  %792 = vmatpush1.msra.mxu0 0.0
  %793 = vmatprep.subr.mxu0 0.0
  %794 = vmatpush1.msra.mxu0 0.0
  %795 = vmatprep.subr.mxu0 0.0
  %796 = vmatpush1.msra.mxu0 0.0
  %797 = vmatprep.subr.mxu0 0.0
  %798 = vmatpush1.msra.mxu0 0.0
  %799 = vmatprep.subr.mxu0 0.0
  %800 = vmatpush1.msra.mxu0 0.0
  %801 = vmatprep.subr.mxu0 0.0
  %802 = vmatpush1.msra.mxu0 0.0
  %803 = vmatprep.subr.mxu0 0.0
  %804 = vmatpush1.msra.mxu0 0.0
  %805 = vmatprep.subr.mxu0 0.0
  %806 = vmatpush1.msra.mxu0 0.0
  %807 = vmatprep.subr.mxu0 0.0
  %808 = vmatpush1.msra.mxu0 0.0
  %809 = vmatprep.subr.mxu0 0.0
  %810 = vmatpush1.msra.mxu0 0.0
  %811 = vmatprep.subr.mxu0 0.0
  %812 = vmatpush1.msra.mxu0 0.0
  %813 = vmatprep.subr.mxu0 0.0
  %814 = vmatpush1.msra.mxu0 0.0
  %815 = vmatprep.subr.mxu0 0.0
  %816 = vmatpush1.msra.mxu0 0.0
  %817 = vmatprep.subr.mxu0 0.0
  %818 = vmatpush1.msra.mxu0 0.0
  %819 = vmatprep.subr.mxu0 0.0
  %820 = vmatpush1.msra.mxu0 0.0
  %821 = vmatprep.subr.mxu0 0.0
  %822 = vmatpush1.msra.mxu0 0.0
  %823 = vmatprep.mubr.f32.mxu0 0.0
  %824 = vmatmul.mubr.f32.gmra.mrb[0].mxu0 %v200
  %v825 = vpop.f32.mrb[0].mxu0
  %v826 = vadd.f32 %v91, %v825
  %v827 = vpop.f32.mrb[0].mxu0
  %828 = vmatprep.mubr.f32.mxu0 0.0
  %829 = vmatmul.mubr.f32.gmra.mrb[0].mxu0 %v203
  %v830 = vpop.f32.mrb[0].mxu0
  %v831 = vadd.f32 %v96, %v830
  %v832 = vpop.f32.mrb[0].mxu0
  %833 = vmatprep.mubr.f32.mxu0 0.0
  %834 = vmatmul.mubr.f32.gmra.mrb[0].mxu0 %v206
  %v835 = vpop.f32.mrb[0].mxu0
  %v836 = vadd.f32 %v101, %v835
  %v837 = vpop.f32.mrb[0].mxu0
  %838 = vmatprep.mubr.f32.mxu0 0.0
  %839 = vmatmul.mubr.f32.gmra.mrb[0].mxu0 %v209
  %v840 = vpop.f32.mrb[0].mxu0
  %v841 = vadd.f32 %v106, %v840
  %v842 = vpop.f32.mrb[0].mxu0
  %843 = vmatprep.mubr.f32.mxu0 0.0
  %844 = vmatmul.mubr.f32.gmra.mrb[0].mxu0 %v212
  %v845 = vpop.f32.mrb[0].mxu0
  %v846 = vadd.f32 %v111, %v845
  %v847 = vpop.f32.mrb[0].mxu0
  %848 = vmatprep.mubr.f32.mxu0 0.0
  %849 = vmatmul.mubr.f32.gmra.mrb[0].mxu0 %v215
  %v850 = vpop.f32.mrb[0].mxu0
  %v851 = vadd.f32 %v116, %v850
  %v852 = vpop.f32.mrb[0].mxu0
  %853 = vmatprep.mubr.f32.mxu0 0.0
  %854 = vmatmul.mubr.f32.gmra.mrb[0].mxu0 %v218
  %v855 = vpop.f32.mrb[0].mxu0
  %v856 = vadd.f32 %v121, %v855
  %v857 = vpop.f32.mrb[0].mxu0
  %858 = vmatprep.mubr.f32.mxu0 0.0
  %859 = vmatmul.mubr.f32.gmra.mrb[0].mxu0 %v221
  %v860 = vpop.f32.mrb[0].mxu0
  %v861 = vadd.f32 %v126, %v860
  %v862 = vpop.f32.mrb[0].mxu0
  %863 = vmatprep.mubr.f32.mxu0 0.0
  %864 = vmatmul.mubr.f32.gmra.mrb[0].mxu0 %v224
  %v865 = vpop.f32.mrb[0].mxu0
  %v866 = vadd.f32 %v131, %v865
  %v867 = vpop.f32.mrb[0].mxu0
  %868 = vmatprep.mubr.f32.mxu0 0.0
  %869 = vmatmul.mubr.f32.gmra.mrb[0].mxu0 %v227
  %v870 = vpop.f32.mrb[0].mxu0
  %v871 = vadd.f32 %v136, %v870
  %v872 = vpop.f32.mrb[0].mxu0
  %873 = vmatprep.mubr.f32.mxu0 0.0
  %874 = vmatmul.mubr.f32.gmra.mrb[0].mxu0 %v230
  %v875 = vpop.f32.mrb[0].mxu0
  %v876 = vadd.f32 %v141, %v875
  %v877 = vpop.f32.mrb[0].mxu0
  %878 = vmatprep.mubr.f32.mxu0 0.0
  %879 = vmatmul.mubr.f32.gmra.mrb[0].mxu0 %v233
  %v880 = vpop.f32.mrb[0].mxu0
  %v881 = vadd.f32 %v146, %v880
  %v882 = vpop.f32.mrb[0].mxu0
  %883 = vdwg.mxu0
  %s884 = scalar_lea.vmem %s0, 20
  %v885 = vld [vmem:[%s884] sm:$0xf]
  %v887 = vsel %vm235, %v885, 0
  %889 = vmatprep.subr.mxu0 0.0
  %890 = vmatpush1.msra.mxu0 %v887
  %891 = vmatprep.subr.mxu0 0.0
  %892 = vmatpush1.msra.mxu0 0.0
  %893 = vmatprep.subr.mxu0 0.0
  %894 = vmatpush1.msra.mxu0 0.0
  %895 = vmatprep.subr.mxu0 0.0
  %896 = vmatpush1.msra.mxu0 0.0
  %897 = vmatprep.subr.mxu0 0.0
  %898 = vmatpush1.msra.mxu0 0.0
  %899 = vmatprep.subr.mxu0 0.0
  %900 = vmatpush1.msra.mxu0 0.0
  %901 = vmatprep.subr.mxu0 0.0
  %902 = vmatpush1.msra.mxu0 0.0
  %903 = vmatprep.subr.mxu0 0.0
  %904 = vmatpush1.msra.mxu0 0.0
  %905 = vmatprep.subr.mxu0 0.0
  %906 = vmatpush1.msra.mxu0 0.0
  %907 = vmatprep.subr.mxu0 0.0
  %908 = vmatpush1.msra.mxu0 0.0
  %909 = vmatprep.subr.mxu0 0.0
  %910 = vmatpush1.msra.mxu0 0.0
  %911 = vmatprep.subr.mxu0 0.0
  %912 = vmatpush1.msra.mxu0 0.0
  %913 = vmatprep.subr.mxu0 0.0
  %914 = vmatpush1.msra.mxu0 0.0
  %915 = vmatprep.subr.mxu0 0.0
  %916 = vmatpush1.msra.mxu0 0.0
  %917 = vmatprep.subr.mxu0 0.0
  %918 = vmatpush1.msra.mxu0 0.0
  %919 = vmatprep.subr.mxu0 0.0
  %920 = vmatpush1.msra.mxu0 0.0
  %921 = vmatprep.subr.mxu0 0.0
  %922 = vmatpush1.msra.mxu0 0.0
  %923 = vmatprep.subr.mxu0 0.0
  %924 = vmatpush1.msra.mxu0 0.0
  %925 = vmatprep.subr.mxu0 0.0
  %926 = vmatpush1.msra.mxu0 0.0
  %927 = vmatprep.subr.mxu0 0.0
  %928 = vmatpush1.msra.mxu0 0.0
  %929 = vmatprep.subr.mxu0 0.0
  %930 = vmatpush1.msra.mxu0 0.0
  %931 = vmatprep.subr.mxu0 0.0
  %932 = vmatpush1.msra.mxu0 0.0
  %933 = vmatprep.subr.mxu0 0.0
  %934 = vmatpush1.msra.mxu0 0.0
  %935 = vmatprep.subr.mxu0 0.0
  %936 = vmatpush1.msra.mxu0 0.0
  %937 = vmatprep.subr.mxu0 0.0
  %938 = vmatpush1.msra.mxu0 0.0
  %939 = vmatprep.subr.mxu0 0.0
  %940 = vmatpush1.msra.mxu0 0.0
  %941 = vmatprep.subr.mxu0 0.0
  %942 = vmatpush1.msra.mxu0 0.0
  %943 = vmatprep.subr.mxu0 0.0
  %944 = vmatpush1.msra.mxu0 0.0
  %945 = vmatprep.subr.mxu0 0.0
  %946 = vmatpush1.msra.mxu0 0.0
  %947 = vmatprep.subr.mxu0 0.0
  %948 = vmatpush1.msra.mxu0 0.0
  %949 = vmatprep.subr.mxu0 0.0
  %950 = vmatpush1.msra.mxu0 0.0
  %951 = vmatprep.subr.mxu0 0.0
  %952 = vmatpush1.msra.mxu0 0.0
  %953 = vmatprep.mubr.f32.mxu0 0.0
  %954 = vmatmul.mubr.f32.gmra.mrb[0].mxu0 %v200
  %v955 = vpop.f32.mrb[0].mxu0
  %v956 = vadd.f32 %v91, %v955
  %v957 = vpop.f32.mrb[0].mxu0
  %958 = vmatprep.mubr.f32.mxu0 0.0
  %959 = vmatmul.mubr.f32.gmra.mrb[0].mxu0 %v203
  %v960 = vpop.f32.mrb[0].mxu0
  %v961 = vadd.f32 %v96, %v960
  %v962 = vpop.f32.mrb[0].mxu0
  %963 = vmatprep.mubr.f32.mxu0 0.0
  %964 = vmatmul.mubr.f32.gmra.mrb[0].mxu0 %v206
  %v965 = vpop.f32.mrb[0].mxu0
  %v966 = vadd.f32 %v101, %v965
  %v967 = vpop.f32.mrb[0].mxu0
  %968 = vmatprep.mubr.f32.mxu0 0.0
  %969 = vmatmul.mubr.f32.gmra.mrb[0].mxu0 %v209
  %v970 = vpop.f32.mrb[0].mxu0
  %v971 = vadd.f32 %v106, %v970
  %v972 = vpop.f32.mrb[0].mxu0
  %973 = vmatprep.mubr.f32.mxu0 0.0
  %974 = vmatmul.mubr.f32.gmra.mrb[0].mxu0 %v212
  %v975 = vpop.f32.mrb[0].mxu0
  %v976 = vadd.f32 %v111, %v975
  %v977 = vpop.f32.mrb[0].mxu0
  %978 = vmatprep.mubr.f32.mxu0 0.0
  %979 = vmatmul.mubr.f32.gmra.mrb[0].mxu0 %v215
  %v980 = vpop.f32.mrb[0].mxu0
  %v981 = vadd.f32 %v116, %v980
  %v982 = vpop.f32.mrb[0].mxu0
  %983 = vmatprep.mubr.f32.mxu0 0.0
  %984 = vmatmul.mubr.f32.gmra.mrb[0].mxu0 %v218
  %v985 = vpop.f32.mrb[0].mxu0
  %v986 = vadd.f32 %v121, %v985
  %v987 = vpop.f32.mrb[0].mxu0
  %988 = vmatprep.mubr.f32.mxu0 0.0
  %989 = vmatmul.mubr.f32.gmra.mrb[0].mxu0 %v221
  %v990 = vpop.f32.mrb[0].mxu0
  %v991 = vadd.f32 %v126, %v990
  %v992 = vpop.f32.mrb[0].mxu0
  %993 = vmatprep.mubr.f32.mxu0 0.0
  %994 = vmatmul.mubr.f32.gmra.mrb[0].mxu0 %v224
  %v995 = vpop.f32.mrb[0].mxu0
  %v996 = vadd.f32 %v131, %v995
  %v997 = vpop.f32.mrb[0].mxu0
  %998 = vmatprep.mubr.f32.mxu0 0.0
  %999 = vmatmul.mubr.f32.gmra.mrb[0].mxu0 %v227
  %v1000 = vpop.f32.mrb[0].mxu0
  %v1001 = vadd.f32 %v136, %v1000
  %v1002 = vpop.f32.mrb[0].mxu0
  %1003 = vmatprep.mubr.f32.mxu0 0.0
  %1004 = vmatmul.mubr.f32.gmra.mrb[0].mxu0 %v230
  %v1005 = vpop.f32.mrb[0].mxu0
  %v1006 = vadd.f32 %v141, %v1005
  %v1007 = vpop.f32.mrb[0].mxu0
  %1008 = vmatprep.mubr.f32.mxu0 0.0
  %1009 = vmatmul.mubr.f32.gmra.mrb[0].mxu0 %v233
  %v1010 = vpop.f32.mrb[0].mxu0
  %v1011 = vadd.f32 %v146, %v1010
  %v1012 = vpop.f32.mrb[0].mxu0
  %1013 = vdwg.mxu0
  %s1014 = scalar_lea.vmem %s0, 24
  %v1015 = vld [vmem:[%s1014] sm:$0xf]
  %v1017 = vsel %vm235, %v1015, 0
  %1019 = vmatprep.subr.mxu0 0.0
  %1020 = vmatpush1.msra.mxu0 %v1017
  %1021 = vmatprep.subr.mxu0 0.0
  %1022 = vmatpush1.msra.mxu0 0.0
  %1023 = vmatprep.subr.mxu0 0.0
  %1024 = vmatpush1.msra.mxu0 0.0
  %1025 = vmatprep.subr.mxu0 0.0
  %1026 = vmatpush1.msra.mxu0 0.0
  %1027 = vmatprep.subr.mxu0 0.0
  %1028 = vmatpush1.msra.mxu0 0.0
  %1029 = vmatprep.subr.mxu0 0.0
  %1030 = vmatpush1.msra.mxu0 0.0
  %1031 = vmatprep.subr.mxu0 0.0
  %1032 = vmatpush1.msra.mxu0 0.0
  %1033 = vmatprep.subr.mxu0 0.0
  %1034 = vmatpush1.msra.mxu0 0.0
  %1035 = vmatprep.subr.mxu0 0.0
  %1036 = vmatpush1.msra.mxu0 0.0
  %1037 = vmatprep.subr.mxu0 0.0
  %1038 = vmatpush1.msra.mxu0 0.0
  %1039 = vmatprep.subr.mxu0 0.0
  %1040 = vmatpush1.msra.mxu0 0.0
  %1041 = vmatprep.subr.mxu0 0.0
  %1042 = vmatpush1.msra.mxu0 0.0
  %1043 = vmatprep.subr.mxu0 0.0
  %1044 = vmatpush1.msra.mxu0 0.0
  %1045 = vmatprep.subr.mxu0 0.0
  %1046 = vmatpush1.msra.mxu0 0.0
  %1047 = vmatprep.subr.mxu0 0.0
  %1048 = vmatpush1.msra.mxu0 0.0
  %1049 = vmatprep.subr.mxu0 0.0
  %1050 = vmatpush1.msra.mxu0 0.0
  %1051 = vmatprep.subr.mxu0 0.0
  %1052 = vmatpush1.msra.mxu0 0.0
  %1053 = vmatprep.subr.mxu0 0.0
  %1054 = vmatpush1.msra.mxu0 0.0
  %1055 = vmatprep.subr.mxu0 0.0
  %1056 = vmatpush1.msra.mxu0 0.0
  %1057 = vmatprep.subr.mxu0 0.0
  %1058 = vmatpush1.msra.mxu0 0.0
  %1059 = vmatprep.subr.mxu0 0.0
  %1060 = vmatpush1.msra.mxu0 0.0
  %1061 = vmatprep.subr.mxu0 0.0
  %1062 = vmatpush1.msra.mxu0 0.0
  %1063 = vmatprep.subr.mxu0 0.0
  %1064 = vmatpush1.msra.mxu0 0.0
  %1065 = vmatprep.subr.mxu0 0.0
  %1066 = vmatpush1.msra.mxu0 0.0
  %1067 = vmatprep.subr.mxu0 0.0
  %1068 = vmatpush1.msra.mxu0 0.0
  %1069 = vmatprep.subr.mxu0 0.0
  %1070 = vmatpush1.msra.mxu0 0.0
  %1071 = vmatprep.subr.mxu0 0.0
  %1072 = vmatpush1.msra.mxu0 0.0
  %1073 = vmatprep.subr.mxu0 0.0
  %1074 = vmatpush1.msra.mxu0 0.0
  %1075 = vmatprep.subr.mxu0 0.0
  %1076 = vmatpush1.msra.mxu0 0.0
  %1077 = vmatprep.subr.mxu0 0.0
  %1078 = vmatpush1.msra.mxu0 0.0
  %1079 = vmatprep.subr.mxu0 0.0
  %1080 = vmatpush1.msra.mxu0 0.0
  %1081 = vmatprep.subr.mxu0 0.0
  %1082 = vmatpush1.msra.mxu0 0.0
  %1083 = vmatprep.mubr.f32.mxu0 0.0
  %1084 = vmatmul.mubr.f32.gmra.mrb[0].mxu0 %v200
  %v1085 = vpop.f32.mrb[0].mxu0
  %v1086 = vadd.f32 %v91, %v1085
  %v1087 = vpop.f32.mrb[0].mxu0
  %1088 = vmatprep.mubr.f32.mxu0 0.0
  %1089 = vmatmul.mubr.f32.gmra.mrb[0].mxu0 %v203
  %v1090 = vpop.f32.mrb[0].mxu0
  %v1091 = vadd.f32 %v96, %v1090
  %v1092 = vpop.f32.mrb[0].mxu0
  %1093 = vmatprep.mubr.f32.mxu0 0.0
  %1094 = vmatmul.mubr.f32.gmra.mrb[0].mxu0 %v206
  %v1095 = vpop.f32.mrb[0].mxu0
  %v1096 = vadd.f32 %v101, %v1095
  %v1097 = vpop.f32.mrb[0].mxu0
  %1098 = vmatprep.mubr.f32.mxu0 0.0
  %1099 = vmatmul.mubr.f32.gmra.mrb[0].mxu0 %v209
  %v1100 = vpop.f32.mrb[0].mxu0
  %v1101 = vadd.f32 %v106, %v1100
  %v1102 = vpop.f32.mrb[0].mxu0
  %1103 = vmatprep.mubr.f32.mxu0 0.0
  %1104 = vmatmul.mubr.f32.gmra.mrb[0].mxu0 %v212
  %v1105 = vpop.f32.mrb[0].mxu0
  %v1106 = vadd.f32 %v111, %v1105
  %v1107 = vpop.f32.mrb[0].mxu0
  %1108 = vmatprep.mubr.f32.mxu0 0.0
  %1109 = vmatmul.mubr.f32.gmra.mrb[0].mxu0 %v215
  %v1110 = vpop.f32.mrb[0].mxu0
  %v1111 = vadd.f32 %v116, %v1110
  %v1112 = vpop.f32.mrb[0].mxu0
  %1113 = vmatprep.mubr.f32.mxu0 0.0
  %1114 = vmatmul.mubr.f32.gmra.mrb[0].mxu0 %v218
  %v1115 = vpop.f32.mrb[0].mxu0
  %v1116 = vadd.f32 %v121, %v1115
  %v1117 = vpop.f32.mrb[0].mxu0
  %1118 = vmatprep.mubr.f32.mxu0 0.0
  %1119 = vmatmul.mubr.f32.gmra.mrb[0].mxu0 %v221
  %v1120 = vpop.f32.mrb[0].mxu0
  %v1121 = vadd.f32 %v126, %v1120
  %v1122 = vpop.f32.mrb[0].mxu0
  %1123 = vmatprep.mubr.f32.mxu0 0.0
  %1124 = vmatmul.mubr.f32.gmra.mrb[0].mxu0 %v224
  %v1125 = vpop.f32.mrb[0].mxu0
  %v1126 = vadd.f32 %v131, %v1125
  %v1127 = vpop.f32.mrb[0].mxu0
  %1128 = vmatprep.mubr.f32.mxu0 0.0
  %1129 = vmatmul.mubr.f32.gmra.mrb[0].mxu0 %v227
  %v1130 = vpop.f32.mrb[0].mxu0
  %v1131 = vadd.f32 %v136, %v1130
  %v1132 = vpop.f32.mrb[0].mxu0
  %1133 = vmatprep.mubr.f32.mxu0 0.0
  %1134 = vmatmul.mubr.f32.gmra.mrb[0].mxu0 %v230
  %v1135 = vpop.f32.mrb[0].mxu0
  %v1136 = vadd.f32 %v141, %v1135
  %v1137 = vpop.f32.mrb[0].mxu0
  %1138 = vmatprep.mubr.f32.mxu0 0.0
  %1139 = vmatmul.mubr.f32.gmra.mrb[0].mxu0 %v233
  %v1140 = vpop.f32.mrb[0].mxu0
  %v1141 = vadd.f32 %v146, %v1140
  %v1142 = vpop.f32.mrb[0].mxu0
  %1143 = vdwg.mxu0
  %s1144 = scalar_lea.vmem %s0, 28
  %v1145 = vld [vmem:[%s1144] sm:$0xf]
  %v1147 = vsel %vm235, %v1145, 0
  %1149 = vmatprep.subr.mxu0 0.0
  %1150 = vmatpush1.msra.mxu0 %v1147
  %1151 = vmatprep.subr.mxu0 0.0
  %1152 = vmatpush1.msra.mxu0 0.0
  %1153 = vmatprep.subr.mxu0 0.0
  %1154 = vmatpush1.msra.mxu0 0.0
  %1155 = vmatprep.subr.mxu0 0.0
  %1156 = vmatpush1.msra.mxu0 0.0
  %1157 = vmatprep.subr.mxu0 0.0
  %1158 = vmatpush1.msra.mxu0 0.0
  %1159 = vmatprep.subr.mxu0 0.0
  %1160 = vmatpush1.msra.mxu0 0.0
  %1161 = vmatprep.subr.mxu0 0.0
  %1162 = vmatpush1.msra.mxu0 0.0
  %1163 = vmatprep.subr.mxu0 0.0
  %1164 = vmatpush1.msra.mxu0 0.0
  %1165 = vmatprep.subr.mxu0 0.0
  %1166 = vmatpush1.msra.mxu0 0.0
  %1167 = vmatprep.subr.mxu0 0.0
  %1168 = vmatpush1.msra.mxu0 0.0
  %1169 = vmatprep.subr.mxu0 0.0
  %1170 = vmatpush1.msra.mxu0 0.0
  %1171 = vmatprep.subr.mxu0 0.0
  %1172 = vmatpush1.msra.mxu0 0.0
  %1173 = vmatprep.subr.mxu0 0.0
  %1174 = vmatpush1.msra.mxu0 0.0
  %1175 = vmatprep.subr.mxu0 0.0
  %1176 = vmatpush1.msra.mxu0 0.0
  %1177 = vmatprep.subr.mxu0 0.0
  %1178 = vmatpush1.msra.mxu0 0.0
  %1179 = vmatprep.subr.mxu0 0.0
  %1180 = vmatpush1.msra.mxu0 0.0
  %1181 = vmatprep.subr.mxu0 0.0
  %1182 = vmatpush1.msra.mxu0 0.0
  %1183 = vmatprep.subr.mxu0 0.0
  %1184 = vmatpush1.msra.mxu0 0.0
  %1185 = vmatprep.subr.mxu0 0.0
  %1186 = vmatpush1.msra.mxu0 0.0
  %1187 = vmatprep.subr.mxu0 0.0
  %1188 = vmatpush1.msra.mxu0 0.0
  %1189 = vmatprep.subr.mxu0 0.0
  %1190 = vmatpush1.msra.mxu0 0.0
  %1191 = vmatprep.subr.mxu0 0.0
  %1192 = vmatpush1.msra.mxu0 0.0
  %1193 = vmatprep.subr.mxu0 0.0
  %1194 = vmatpush1.msra.mxu0 0.0
  %1195 = vmatprep.subr.mxu0 0.0
  %1196 = vmatpush1.msra.mxu0 0.0
  %1197 = vmatprep.subr.mxu0 0.0
  %1198 = vmatpush1.msra.mxu0 0.0
  %1199 = vmatprep.subr.mxu0 0.0
  %1200 = vmatpush1.msra.mxu0 0.0
  %1201 = vmatprep.subr.mxu0 0.0
  %1202 = vmatpush1.msra.mxu0 0.0
  %1203 = vmatprep.subr.mxu0 0.0
  %1204 = vmatpush1.msra.mxu0 0.0
  %1205 = vmatprep.subr.mxu0 0.0
  %1206 = vmatpush1.msra.mxu0 0.0
  %1207 = vmatprep.subr.mxu0 0.0
  %1208 = vmatpush1.msra.mxu0 0.0
  %1209 = vmatprep.subr.mxu0 0.0
  %1210 = vmatpush1.msra.mxu0 0.0
  %1211 = vmatprep.subr.mxu0 0.0
  %1212 = vmatpush1.msra.mxu0 0.0
  %1213 = vmatprep.mubr.f32.mxu0 0.0
  %1214 = vmatmul.mubr.f32.gmra.mrb[0].mxu0 %v200
  %v1215 = vpop.f32.mrb[0].mxu0
  %v1216 = vadd.f32 %v91, %v1215
  %v1217 = vpop.f32.mrb[0].mxu0
  %1218 = vmatprep.mubr.f32.mxu0 0.0
  %1219 = vmatmul.mubr.f32.gmra.mrb[0].mxu0 %v203
  %v1220 = vpop.f32.mrb[0].mxu0
  %v1221 = vadd.f32 %v96, %v1220
  %v1222 = vpop.f32.mrb[0].mxu0
  %1223 = vmatprep.mubr.f32.mxu0 0.0
  %1224 = vmatmul.mubr.f32.gmra.mrb[0].mxu0 %v206
  %v1225 = vpop.f32.mrb[0].mxu0
  %v1226 = vadd.f32 %v101, %v1225
  %v1227 = vpop.f32.mrb[0].mxu0
  %1228 = vmatprep.mubr.f32.mxu0 0.0
  %1229 = vmatmul.mubr.f32.gmra.mrb[0].mxu0 %v209
  %v1230 = vpop.f32.mrb[0].mxu0
  %v1231 = vadd.f32 %v106, %v1230
  %v1232 = vpop.f32.mrb[0].mxu0
  %1233 = vmatprep.mubr.f32.mxu0 0.0
  %1234 = vmatmul.mubr.f32.gmra.mrb[0].mxu0 %v212
  %v1235 = vpop.f32.mrb[0].mxu0
  %v1236 = vadd.f32 %v111, %v1235
  %v1237 = vpop.f32.mrb[0].mxu0
  %1238 = vmatprep.mubr.f32.mxu0 0.0
  %1239 = vmatmul.mubr.f32.gmra.mrb[0].mxu0 %v215
  %v1240 = vpop.f32.mrb[0].mxu0
  %v1241 = vadd.f32 %v116, %v1240
  %v1242 = vpop.f32.mrb[0].mxu0
  %1243 = vmatprep.mubr.f32.mxu0 0.0
  %1244 = vmatmul.mubr.f32.gmra.mrb[0].mxu0 %v218
  %v1245 = vpop.f32.mrb[0].mxu0
  %v1246 = vadd.f32 %v121, %v1245
  %v1247 = vpop.f32.mrb[0].mxu0
  %1248 = vmatprep.mubr.f32.mxu0 0.0
  %1249 = vmatmul.mubr.f32.gmra.mrb[0].mxu0 %v221
  %v1250 = vpop.f32.mrb[0].mxu0
  %v1251 = vadd.f32 %v126, %v1250
  %v1252 = vpop.f32.mrb[0].mxu0
  %1253 = vmatprep.mubr.f32.mxu0 0.0
  %1254 = vmatmul.mubr.f32.gmra.mrb[0].mxu0 %v224
  %v1255 = vpop.f32.mrb[0].mxu0
  %v1256 = vadd.f32 %v131, %v1255
  %v1257 = vpop.f32.mrb[0].mxu0
  %1258 = vmatprep.mubr.f32.mxu0 0.0
  %1259 = vmatmul.mubr.f32.gmra.mrb[0].mxu0 %v227
  %v1260 = vpop.f32.mrb[0].mxu0
  %v1261 = vadd.f32 %v136, %v1260
  %v1262 = vpop.f32.mrb[0].mxu0
  %1263 = vmatprep.mubr.f32.mxu0 0.0
  %1264 = vmatmul.mubr.f32.gmra.mrb[0].mxu0 %v230
  %v1265 = vpop.f32.mrb[0].mxu0
  %v1266 = vadd.f32 %v141, %v1265
  %v1267 = vpop.f32.mrb[0].mxu0
  %1268 = vmatprep.mubr.f32.mxu0 0.0
  %1269 = vmatmul.mubr.f32.gmra.mrb[0].mxu0 %v233
  %v1270 = vpop.f32.mrb[0].mxu0
  %v1271 = vadd.f32 %v146, %v1270
  %v1272 = vpop.f32.mrb[0].mxu0
  %1273 = vdwg.mxu0
  %vm1274 = vcmask 261120
  %v1276 = vsel %vm1274, %v64, 0
  %v1279 = vsel %vm1274, %v65, 0
  %v1282 = vsel %vm1274, %v66, 0
  %v1285 = vsel %vm1274, %v67, 0
  %v1288 = vsel %vm1274, %v68, 0
  %v1291 = vsel %vm1274, %v69, 0
  %v1294 = vsel %vm1274, %v70, 0
  %v1297 = vsel %vm1274, %v71, 0
  %v1300 = vsel %vm1274, %v72, 0
  %v1303 = vsel %vm1274, %v73, 0
  %v1306 = vsel %vm1274, %v74, 0
  %v1309 = vsel %vm1274, %v75, 0
  %1311 = vmatprep.subr.mxu0 0.0
  %1312 = vmatpush1.msra.mxu0 0.0
  %1313 = vmatprep.subr.mxu0 0.0
  %1314 = vmatpush1.msra.mxu0 0.0
  %1315 = vmatprep.subr.mxu0 0.0
  %1316 = vmatpush1.msra.mxu0 0.0
  %1317 = vmatprep.subr.mxu0 0.0
  %1318 = vmatpush1.msra.mxu0 0.0
  %1319 = vmatprep.subr.mxu0 0.0
  %1320 = vmatpush1.msra.mxu0 0.0
  %1321 = vmatprep.subr.mxu0 0.0
  %1322 = vmatpush1.msra.mxu0 0.0
  %1323 = vmatprep.subr.mxu0 0.0
  %1324 = vmatpush1.msra.mxu0 0.0
  %1325 = vmatprep.subr.mxu0 0.0
  %1326 = vmatpush1.msra.mxu0 0.0
  %1327 = vmatprep.subr.mxu0 0.0
  %1328 = vmatpush1.msra.mxu0 0.0
  %1329 = vmatprep.subr.mxu0 0.0
  %1330 = vmatpush1.msra.mxu0 0.0
  %1331 = vmatprep.subr.mxu0 0.0
  %1332 = vmatpush1.msra.mxu0 0.0
  %1333 = vmatprep.subr.mxu0 0.0
  %1334 = vmatpush1.msra.mxu0 0.0
  %1335 = vmatprep.subr.mxu0 0.0
  %1336 = vmatpush1.msra.mxu0 0.0
  %1337 = vmatprep.subr.mxu0 0.0
  %1338 = vmatpush1.msra.mxu0 0.0
  %1339 = vmatprep.subr.mxu0 0.0
  %1340 = vmatpush1.msra.mxu0 0.0
  %1341 = vmatprep.subr.mxu0 0.0
  %1342 = vmatpush1.msra.mxu0 0.0
  %1343 = vmatprep.subr.mxu0 0.0
  %1344 = vmatpush1.msra.mxu0 0.0
  %1345 = vmatprep.subr.mxu0 0.0
  %1346 = vmatpush1.msra.mxu0 0.0
  %1347 = vmatprep.subr.mxu0 0.0
  %1348 = vmatpush1.msra.mxu0 0.0
  %1349 = vmatprep.subr.mxu0 0.0
  %1350 = vmatpush1.msra.mxu0 0.0
  %1351 = vmatprep.subr.mxu0 0.0
  %1352 = vmatpush1.msra.mxu0 0.0
  %1353 = vmatprep.subr.mxu0 0.0
  %1354 = vmatpush1.msra.mxu0 0.0
  %1355 = vmatprep.subr.mxu0 0.0
  %1356 = vmatpush1.msra.mxu0 0.0
  %1357 = vmatprep.subr.mxu0 0.0
  %1358 = vmatpush1.msra.mxu0 0.0
  %1359 = vmatprep.subr.mxu0 0.0
  %1360 = vmatpush1.msra.mxu0 0.0
  %1361 = vmatprep.subr.mxu0 0.0
  %1362 = vmatpush1.msra.mxu0 0.0
  %1363 = vmatprep.subr.mxu0 0.0
  %1364 = vmatpush1.msra.mxu0 0.0
  %1365 = vmatprep.subr.mxu0 0.0
  %1366 = vmatpush1.msra.mxu0 0.0
  %1367 = vmatprep.subr.mxu0 0.0
  %1368 = vmatpush1.msra.mxu0 0.0
  %1369 = vmatprep.subr.mxu0 0.0
  %1370 = vmatpush1.msra.mxu0 0.0
  %1371 = vmatprep.subr.mxu0 0.0
  %1372 = vmatpush1.msra.mxu0 0.0
  %1373 = vmatprep.subr.mxu0 0.0
  %1374 = vmatpush1.msra.mxu0 0.0
  %1375 = vmatprep.mubr.f32.mxu0 0.0
  %1376 = vmatmul.mubr.f32.gmra.mrb[0].mxu0 %v1276
  %v1377 = vpop.f32.mrb[0].mxu0
  %v1378 = vadd.f32 0.0, %v1377
  %v1379 = vpop.f32.mrb[0].mxu0
  %1380 = vmatprep.mubr.f32.mxu0 0.0
  %1381 = vmatmul.mubr.f32.gmra.mrb[0].mxu0 %v1279
  %v1382 = vpop.f32.mrb[0].mxu0
  %v1383 = vadd.f32 0.0, %v1382
  %v1384 = vpop.f32.mrb[0].mxu0
  %1385 = vmatprep.mubr.f32.mxu0 0.0
  %1386 = vmatmul.mubr.f32.gmra.mrb[0].mxu0 %v1282
  %v1387 = vpop.f32.mrb[0].mxu0
  %v1388 = vadd.f32 0.0, %v1387
  %v1389 = vpop.f32.mrb[0].mxu0
  %1390 = vmatprep.mubr.f32.mxu0 0.0
  %1391 = vmatmul.mubr.f32.gmra.mrb[0].mxu0 %v1285
  %v1392 = vpop.f32.mrb[0].mxu0
  %v1393 = vadd.f32 0.0, %v1392
  %v1394 = vpop.f32.mrb[0].mxu0
  %1395 = vmatprep.mubr.f32.mxu0 0.0
  %1396 = vmatmul.mubr.f32.gmra.mrb[0].mxu0 %v1288
  %v1397 = vpop.f32.mrb[0].mxu0
  %v1398 = vadd.f32 0.0, %v1397
  %v1399 = vpop.f32.mrb[0].mxu0
  %1400 = vmatprep.mubr.f32.mxu0 0.0
  %1401 = vmatmul.mubr.f32.gmra.mrb[0].mxu0 %v1291
  %v1402 = vpop.f32.mrb[0].mxu0
  %v1403 = vadd.f32 0.0, %v1402
  %v1404 = vpop.f32.mrb[0].mxu0
  %1405 = vmatprep.mubr.f32.mxu0 0.0
  %1406 = vmatmul.mubr.f32.gmra.mrb[0].mxu0 %v1294
  %v1407 = vpop.f32.mrb[0].mxu0
  %v1408 = vadd.f32 0.0, %v1407
  %v1409 = vpop.f32.mrb[0].mxu0
  %1410 = vmatprep.mubr.f32.mxu0 0.0
  %1411 = vmatmul.mubr.f32.gmra.mrb[0].mxu0 %v1297
  %v1412 = vpop.f32.mrb[0].mxu0
  %v1413 = vadd.f32 0.0, %v1412
  %v1414 = vpop.f32.mrb[0].mxu0
  %1415 = vmatprep.mubr.f32.mxu0 0.0
  %1416 = vmatmul.mubr.f32.gmra.mrb[0].mxu0 %v1300
  %v1417 = vpop.f32.mrb[0].mxu0
  %v1418 = vadd.f32 0.0, %v1417
  %v1419 = vpop.f32.mrb[0].mxu0
  %1420 = vmatprep.mubr.f32.mxu0 0.0
  %1421 = vmatmul.mubr.f32.gmra.mrb[0].mxu0 %v1303
  %v1422 = vpop.f32.mrb[0].mxu0
  %v1423 = vadd.f32 0.0, %v1422
  %v1424 = vpop.f32.mrb[0].mxu0
  %1425 = vmatprep.mubr.f32.mxu0 0.0
  %1426 = vmatmul.mubr.f32.gmra.mrb[0].mxu0 %v1306
  %v1427 = vpop.f32.mrb[0].mxu0
  %v1428 = vadd.f32 0.0, %v1427
  %v1429 = vpop.f32.mrb[0].mxu0
  %1430 = vmatprep.mubr.f32.mxu0 0.0
  %1431 = vmatmul.mubr.f32.gmra.mrb[0].mxu0 %v1309
  %v1432 = vpop.f32.mrb[0].mxu0
  %v1433 = vadd.f32 0.0, %v1432
  %v1434 = vpop.f32.mrb[0].mxu0
  %1435 = vdwg.mxu0
  %v1436 = vadd.f32 %v306, %v1378
  %v1437 = vadd.f32 %v311, %v1383
  %v1438 = vadd.f32 %v316, %v1388
  %v1439 = vadd.f32 %v321, %v1393
  %v1440 = vxor.u32 %v1436, 2147483648
  %v1441 = vxor.u32 %v1437, 2147483648
  %v1442 = vxor.u32 %v1438, 2147483648
  %v1443 = vxor.u32 %v1439, 2147483648
  %v1444 = vmul.f32 %v1440, 1.442695
  %v1445 = vpow.pop %v1444
  %v1446 = vmul.f32 %v1441, 1.442695
  %v1447 = vpow.pop %v1446
  %v1448 = vmul.f32 %v1442, 1.442695
  %v1449 = vpow.pop %v1448
  %v1450 = vmul.f32 %v1443, 1.442695
  %v1451 = vpow.pop %v1450
  %v1452 = vadd.f32 %v1445, 1.0
  %v1453 = vadd.f32 %v1447, 1.0
  %v1454 = vadd.f32 %v1449, 1.0
  %v1455 = vadd.f32 %v1451, 1.0
  %v1456 = vrcp.pop %v1452
  %v1457 = vmul.f32 1.0, %v1456
  %v1458 = vrcp.pop %v1453
  %v1459 = vmul.f32 1.0, %v1458
  %v1460 = vrcp.pop %v1454
  %v1461 = vmul.f32 1.0, %v1460
  %v1462 = vrcp.pop %v1455
  %v1463 = vmul.f32 1.0, %v1462
  %v1464 = vadd.f32 %v326, %v1398
  %v1465 = vadd.f32 %v331, %v1403
  %v1466 = vadd.f32 %v336, %v1408
  %v1467 = vadd.f32 %v341, %v1413
  %v1468 = vxor.u32 %v1464, 2147483648
  %v1469 = vxor.u32 %v1465, 2147483648
  %v1470 = vxor.u32 %v1466, 2147483648
  %v1471 = vxor.u32 %v1467, 2147483648
  %v1472 = vmul.f32 %v1468, 1.442695
  %v1473 = vpow.pop %v1472
  %v1474 = vmul.f32 %v1469, 1.442695
  %v1475 = vpow.pop %v1474
  %v1476 = vmul.f32 %v1470, 1.442695
  %v1477 = vpow.pop %v1476
  %v1478 = vmul.f32 %v1471, 1.442695
  %v1479 = vpow.pop %v1478
  %v1480 = vadd.f32 %v1473, 1.0
  %v1481 = vadd.f32 %v1475, 1.0
  %v1482 = vadd.f32 %v1477, 1.0
  %v1483 = vadd.f32 %v1479, 1.0
  %v1484 = vrcp.pop %v1480
  %v1485 = vmul.f32 1.0, %v1484
  %v1486 = vrcp.pop %v1481
  %v1487 = vmul.f32 1.0, %v1486
  %v1488 = vrcp.pop %v1482
  %v1489 = vmul.f32 1.0, %v1488
  %v1490 = vrcp.pop %v1483
  %v1491 = vmul.f32 1.0, %v1490
  %v1492 = vadd.f32 %v1418, %v155
  %v1493 = vadd.f32 %v1423, %v160
  %v1494 = vadd.f32 %v1428, %v165
  %v1495 = vadd.f32 %v1433, %v170
  %v1496 = vmul.f32 %v1457, %v1492
  %v1497 = vmul.f32 %v1459, %v1493
  %v1498 = vmul.f32 %v1461, %v1494
  %v1499 = vmul.f32 %v1463, %v1495
  %v1500 = vadd.f32 %v346, %v1496
  %v1501 = vadd.f32 %v351, %v1497
  %v1502 = vadd.f32 %v356, %v1498
  %v1503 = vadd.f32 %v361, %v1499
  %v1504 = vtanh.pop %v1500
  %v1505 = vtanh.pop %v1501
  %v1506 = vtanh.pop %v1502
  %v1507 = vtanh.pop %v1503
  %v1508 = vsub.f32 1.0, %v1485
  %v1509 = vsub.f32 1.0, %v1487
  %v1510 = vsub.f32 1.0, %v1489
  %v1511 = vsub.f32 1.0, %v1491
  %v1512 = vmul.f32 %v1508, %v1504
  %v1513 = vmul.f32 %v1509, %v1505
  %v1514 = vmul.f32 %v1510, %v1506
  %v1515 = vmul.f32 %v1511, %v1507
  %v1516 = vmul.f32 %v1485, 0.0
  %v1517 = vmul.f32 %v1487, 0.0
  %v1518 = vmul.f32 %v1489, 0.0
  %v1519 = vmul.f32 %v1491, 0.0
  %v1520 = vadd.f32 %v1512, %v1516
  %v1521 = vadd.f32 %v1513, %v1517
  %v1522 = vadd.f32 %v1514, %v1518
  %v1523 = vadd.f32 %v1515, %v1519
  %v1524 = vmul.f32 %v1520, %v179
  %v1525 = vmul.f32 %v1521, %v184
  %v1526 = vmul.f32 %v1522, %v189
  %v1527 = vmul.f32 %v1523, %v194
  %vm1528 = vcmask 15360
  %v1529 = vsel %vm1528, %v1524, 0.0
  %v1530 = vsel %vm1528, %v1525, 0.0
  %v1531 = vadd.f32 %v1529, %v1530
  %v1532 = vsel %vm1528, %v1526, 0.0
  %v1533 = vadd.f32 %v1531, %v1532
  %v1534 = vsel %vm1528, %v1527, 0.0
  %v1535 = vadd.f32 %v1533, %v1534
  %v1536 = vrot.slane %v1535, 4
  %v1537 = vadd.f32 %v1535, %v1536
  %v1538 = vrot.slane %v1537, 2
  %v1539 = vadd.f32 %v1537, %v1538
  %v1540 = vrot.slane %v1539, 1
  %v1541 = vadd.f32 %v1539, %v1540
  %1542 = vmatprep.subr.mxu0 0.0
  %1543 = vmatpush1.msra.mxu0 %v1520
  %1544 = vmatprep.subr.mxu0 0.0
  %1545 = vmatpush1.msra.mxu0 %v1521
  %1546 = vmatprep.subr.mxu0 0.0
  %1547 = vmatpush1.msra.mxu0 %v1522
  %1548 = vmatprep.subr.mxu0 0.0
  %1549 = vmatpush1.msra.mxu0 %v1523
  %1550 = vmatprep.subr.mxu0 0.0
  %1551 = vmatpush1.msra.mxu0 0.0
  %1552 = vmatprep.subr.mxu0 0.0
  %1553 = vmatpush1.msra.mxu0 0.0
  %1554 = vmatprep.subr.mxu0 0.0
  %1555 = vmatpush1.msra.mxu0 0.0
  %1556 = vmatprep.subr.mxu0 0.0
  %1557 = vmatpush1.msra.mxu0 0.0
  %1558 = vmatprep.subr.mxu0 0.0
  %1559 = vmatpush1.msra.mxu0 0.0
  %1560 = vmatprep.subr.mxu0 0.0
  %1561 = vmatpush1.msra.mxu0 0.0
  %1562 = vmatprep.subr.mxu0 0.0
  %1563 = vmatpush1.msra.mxu0 0.0
  %1564 = vmatprep.subr.mxu0 0.0
  %1565 = vmatpush1.msra.mxu0 0.0
  %1566 = vmatprep.subr.mxu0 0.0
  %1567 = vmatpush1.msra.mxu0 0.0
  %1568 = vmatprep.subr.mxu0 0.0
  %1569 = vmatpush1.msra.mxu0 0.0
  %1570 = vmatprep.subr.mxu0 0.0
  %1571 = vmatpush1.msra.mxu0 0.0
  %1572 = vmatprep.subr.mxu0 0.0
  %1573 = vmatpush1.msra.mxu0 0.0
  %1574 = vmatprep.subr.mxu0 0.0
  %1575 = vmatpush1.msra.mxu0 0.0
  %1576 = vmatprep.subr.mxu0 0.0
  %1577 = vmatpush1.msra.mxu0 0.0
  %1578 = vmatprep.subr.mxu0 0.0
  %1579 = vmatpush1.msra.mxu0 0.0
  %1580 = vmatprep.subr.mxu0 0.0
  %1581 = vmatpush1.msra.mxu0 0.0
  %1582 = vmatprep.subr.mxu0 0.0
  %1583 = vmatpush1.msra.mxu0 0.0
  %1584 = vmatprep.subr.mxu0 0.0
  %1585 = vmatpush1.msra.mxu0 0.0
  %1586 = vmatprep.subr.mxu0 0.0
  %1587 = vmatpush1.msra.mxu0 0.0
  %1588 = vmatprep.subr.mxu0 0.0
  %1589 = vmatpush1.msra.mxu0 0.0
  %1590 = vmatprep.subr.mxu0 0.0
  %1591 = vmatpush1.msra.mxu0 0.0
  %1592 = vmatprep.subr.mxu0 0.0
  %1593 = vmatpush1.msra.mxu0 0.0
  %1594 = vmatprep.subr.mxu0 0.0
  %1595 = vmatpush1.msra.mxu0 0.0
  %1596 = vmatprep.subr.mxu0 0.0
  %1597 = vmatpush1.msra.mxu0 0.0
  %1598 = vmatprep.subr.mxu0 0.0
  %1599 = vmatpush1.msra.mxu0 0.0
  %1600 = vmatprep.subr.mxu0 0.0
  %1601 = vmatpush1.msra.mxu0 0.0
  %1602 = vmatprep.subr.mxu0 0.0
  %1603 = vmatpush1.msra.mxu0 0.0
  %1604 = vmatprep.subr.mxu0 0.0
  %1605 = vmatpush1.msra.mxu0 0.0
  %1606 = vmatprep.mubr.f32.mxu0 0.0
  %1607 = vmatmul.mubr.f32.gmra.mrb[0].mxu0 %v1276
  %v1608 = vpop.f32.mrb[0].mxu0
  %v1609 = vadd.f32 0.0, %v1608
  %v1610 = vpop.f32.mrb[0].mxu0
  %1611 = vmatprep.mubr.f32.mxu0 0.0
  %1612 = vmatmul.mubr.f32.gmra.mrb[0].mxu0 %v1279
  %v1613 = vpop.f32.mrb[0].mxu0
  %v1614 = vadd.f32 0.0, %v1613
  %v1615 = vpop.f32.mrb[0].mxu0
  %1616 = vmatprep.mubr.f32.mxu0 0.0
  %1617 = vmatmul.mubr.f32.gmra.mrb[0].mxu0 %v1282
  %v1618 = vpop.f32.mrb[0].mxu0
  %v1619 = vadd.f32 0.0, %v1618
  %v1620 = vpop.f32.mrb[0].mxu0
  %1621 = vmatprep.mubr.f32.mxu0 0.0
  %1622 = vmatmul.mubr.f32.gmra.mrb[0].mxu0 %v1285
  %v1623 = vpop.f32.mrb[0].mxu0
  %v1624 = vadd.f32 0.0, %v1623
  %v1625 = vpop.f32.mrb[0].mxu0
  %1626 = vmatprep.mubr.f32.mxu0 0.0
  %1627 = vmatmul.mubr.f32.gmra.mrb[0].mxu0 %v1288
  %v1628 = vpop.f32.mrb[0].mxu0
  %v1629 = vadd.f32 0.0, %v1628
  %v1630 = vpop.f32.mrb[0].mxu0
  %1631 = vmatprep.mubr.f32.mxu0 0.0
  %1632 = vmatmul.mubr.f32.gmra.mrb[0].mxu0 %v1291
  %v1633 = vpop.f32.mrb[0].mxu0
  %v1634 = vadd.f32 0.0, %v1633
  %v1635 = vpop.f32.mrb[0].mxu0
  %1636 = vmatprep.mubr.f32.mxu0 0.0
  %1637 = vmatmul.mubr.f32.gmra.mrb[0].mxu0 %v1294
  %v1638 = vpop.f32.mrb[0].mxu0
  %v1639 = vadd.f32 0.0, %v1638
  %v1640 = vpop.f32.mrb[0].mxu0
  %1641 = vmatprep.mubr.f32.mxu0 0.0
  %1642 = vmatmul.mubr.f32.gmra.mrb[0].mxu0 %v1297
  %v1643 = vpop.f32.mrb[0].mxu0
  %v1644 = vadd.f32 0.0, %v1643
  %v1645 = vpop.f32.mrb[0].mxu0
  %1646 = vmatprep.mubr.f32.mxu0 0.0
  %1647 = vmatmul.mubr.f32.gmra.mrb[0].mxu0 %v1300
  %v1648 = vpop.f32.mrb[0].mxu0
  %v1649 = vadd.f32 0.0, %v1648
  %v1650 = vpop.f32.mrb[0].mxu0
  %1651 = vmatprep.mubr.f32.mxu0 0.0
  %1652 = vmatmul.mubr.f32.gmra.mrb[0].mxu0 %v1303
  %v1653 = vpop.f32.mrb[0].mxu0
  %v1654 = vadd.f32 0.0, %v1653
  %v1655 = vpop.f32.mrb[0].mxu0
  %1656 = vmatprep.mubr.f32.mxu0 0.0
  %1657 = vmatmul.mubr.f32.gmra.mrb[0].mxu0 %v1306
  %v1658 = vpop.f32.mrb[0].mxu0
  %v1659 = vadd.f32 0.0, %v1658
  %v1660 = vpop.f32.mrb[0].mxu0
  %1661 = vmatprep.mubr.f32.mxu0 0.0
  %1662 = vmatmul.mubr.f32.gmra.mrb[0].mxu0 %v1309
  %v1663 = vpop.f32.mrb[0].mxu0
  %v1664 = vadd.f32 0.0, %v1663
  %v1665 = vpop.f32.mrb[0].mxu0
  %1666 = vdwg.mxu0
  %v1667 = vadd.f32 %v436, %v1609
  %v1668 = vadd.f32 %v441, %v1614
  %v1669 = vadd.f32 %v446, %v1619
  %v1670 = vadd.f32 %v451, %v1624
  %v1671 = vxor.u32 %v1667, 2147483648
  %v1672 = vxor.u32 %v1668, 2147483648
  %v1673 = vxor.u32 %v1669, 2147483648
  %v1674 = vxor.u32 %v1670, 2147483648
  %v1675 = vmul.f32 %v1671, 1.442695
  %v1676 = vpow.pop %v1675
  %v1677 = vmul.f32 %v1672, 1.442695
  %v1678 = vpow.pop %v1677
  %v1679 = vmul.f32 %v1673, 1.442695
  %v1680 = vpow.pop %v1679
  %v1681 = vmul.f32 %v1674, 1.442695
  %v1682 = vpow.pop %v1681
  %v1683 = vadd.f32 %v1676, 1.0
  %v1684 = vadd.f32 %v1678, 1.0
  %v1685 = vadd.f32 %v1680, 1.0
  %v1686 = vadd.f32 %v1682, 1.0
  %v1687 = vrcp.pop %v1683
  %v1688 = vmul.f32 1.0, %v1687
  %v1689 = vrcp.pop %v1684
  %v1690 = vmul.f32 1.0, %v1689
  %v1691 = vrcp.pop %v1685
  %v1692 = vmul.f32 1.0, %v1691
  %v1693 = vrcp.pop %v1686
  %v1694 = vmul.f32 1.0, %v1693
  %v1695 = vadd.f32 %v456, %v1629
  %v1696 = vadd.f32 %v461, %v1634
  %v1697 = vadd.f32 %v466, %v1639
  %v1698 = vadd.f32 %v471, %v1644
  %v1699 = vxor.u32 %v1695, 2147483648
  %v1700 = vxor.u32 %v1696, 2147483648
  %v1701 = vxor.u32 %v1697, 2147483648
  %v1702 = vxor.u32 %v1698, 2147483648
  %v1703 = vmul.f32 %v1699, 1.442695
  %v1704 = vpow.pop %v1703
  %v1705 = vmul.f32 %v1700, 1.442695
  %v1706 = vpow.pop %v1705
  %v1707 = vmul.f32 %v1701, 1.442695
  %v1708 = vpow.pop %v1707
  %v1709 = vmul.f32 %v1702, 1.442695
  %v1710 = vpow.pop %v1709
  %v1711 = vadd.f32 %v1704, 1.0
  %v1712 = vadd.f32 %v1706, 1.0
  %v1713 = vadd.f32 %v1708, 1.0
  %v1714 = vadd.f32 %v1710, 1.0
  %v1715 = vrcp.pop %v1711
  %v1716 = vmul.f32 1.0, %v1715
  %v1717 = vrcp.pop %v1712
  %v1718 = vmul.f32 1.0, %v1717
  %v1719 = vrcp.pop %v1713
  %v1720 = vmul.f32 1.0, %v1719
  %v1721 = vrcp.pop %v1714
  %v1722 = vmul.f32 1.0, %v1721
  %v1723 = vadd.f32 %v1649, %v155
  %v1724 = vadd.f32 %v1654, %v160
  %v1725 = vadd.f32 %v1659, %v165
  %v1726 = vadd.f32 %v1664, %v170
  %v1727 = vmul.f32 %v1688, %v1723
  %v1728 = vmul.f32 %v1690, %v1724
  %v1729 = vmul.f32 %v1692, %v1725
  %v1730 = vmul.f32 %v1694, %v1726
  %v1731 = vadd.f32 %v476, %v1727
  %v1732 = vadd.f32 %v481, %v1728
  %v1733 = vadd.f32 %v486, %v1729
  %v1734 = vadd.f32 %v491, %v1730
  %v1735 = vtanh.pop %v1731
  %v1736 = vtanh.pop %v1732
  %v1737 = vtanh.pop %v1733
  %v1738 = vtanh.pop %v1734
  %v1739 = vsub.f32 1.0, %v1716
  %v1740 = vsub.f32 1.0, %v1718
  %v1741 = vsub.f32 1.0, %v1720
  %v1742 = vsub.f32 1.0, %v1722
  %v1743 = vmul.f32 %v1739, %v1735
  %v1744 = vmul.f32 %v1740, %v1736
  %v1745 = vmul.f32 %v1741, %v1737
  %v1746 = vmul.f32 %v1742, %v1738
  %v1747 = vmul.f32 %v1716, %v1520
  %v1748 = vmul.f32 %v1718, %v1521
  %v1749 = vmul.f32 %v1720, %v1522
  %v1750 = vmul.f32 %v1722, %v1523
  %v1751 = vadd.f32 %v1743, %v1747
  %v1752 = vadd.f32 %v1744, %v1748
  %v1753 = vadd.f32 %v1745, %v1749
  %v1754 = vadd.f32 %v1746, %v1750
  %v1755 = vmul.f32 %v1751, %v179
  %v1756 = vmul.f32 %v1752, %v184
  %v1757 = vmul.f32 %v1753, %v189
  %v1758 = vmul.f32 %v1754, %v194
  %v1759 = vsel %vm1528, %v1755, 0.0
  %v1760 = vsel %vm1528, %v1756, 0.0
  %v1761 = vadd.f32 %v1759, %v1760
  %v1762 = vsel %vm1528, %v1757, 0.0
  %v1763 = vadd.f32 %v1761, %v1762
  %v1764 = vsel %vm1528, %v1758, 0.0
  %v1765 = vadd.f32 %v1763, %v1764
  %v1766 = vrot.slane %v1765, 4
  %v1767 = vadd.f32 %v1765, %v1766
  %v1768 = vrot.slane %v1767, 2
  %v1769 = vadd.f32 %v1767, %v1768
  %v1770 = vrot.slane %v1769, 1
  %v1771 = vadd.f32 %v1769, %v1770
  %1772 = vmatprep.subr.mxu0 0.0
  %1773 = vmatpush1.msra.mxu0 %v1751
  %1774 = vmatprep.subr.mxu0 0.0
  %1775 = vmatpush1.msra.mxu0 %v1752
  %1776 = vmatprep.subr.mxu0 0.0
  %1777 = vmatpush1.msra.mxu0 %v1753
  %1778 = vmatprep.subr.mxu0 0.0
  %1779 = vmatpush1.msra.mxu0 %v1754
  %1780 = vmatprep.subr.mxu0 0.0
  %1781 = vmatpush1.msra.mxu0 0.0
  %1782 = vmatprep.subr.mxu0 0.0
  %1783 = vmatpush1.msra.mxu0 0.0
  %1784 = vmatprep.subr.mxu0 0.0
  %1785 = vmatpush1.msra.mxu0 0.0
  %1786 = vmatprep.subr.mxu0 0.0
  %1787 = vmatpush1.msra.mxu0 0.0
  %1788 = vmatprep.subr.mxu0 0.0
  %1789 = vmatpush1.msra.mxu0 0.0
  %1790 = vmatprep.subr.mxu0 0.0
  %1791 = vmatpush1.msra.mxu0 0.0
  %1792 = vmatprep.subr.mxu0 0.0
  %1793 = vmatpush1.msra.mxu0 0.0
  %1794 = vmatprep.subr.mxu0 0.0
  %1795 = vmatpush1.msra.mxu0 0.0
  %1796 = vmatprep.subr.mxu0 0.0
  %1797 = vmatpush1.msra.mxu0 0.0
  %1798 = vmatprep.subr.mxu0 0.0
  %1799 = vmatpush1.msra.mxu0 0.0
  %1800 = vmatprep.subr.mxu0 0.0
  %1801 = vmatpush1.msra.mxu0 0.0
  %1802 = vmatprep.subr.mxu0 0.0
  %1803 = vmatpush1.msra.mxu0 0.0
  %1804 = vmatprep.subr.mxu0 0.0
  %1805 = vmatpush1.msra.mxu0 0.0
  %1806 = vmatprep.subr.mxu0 0.0
  %1807 = vmatpush1.msra.mxu0 0.0
  %1808 = vmatprep.subr.mxu0 0.0
  %1809 = vmatpush1.msra.mxu0 0.0
  %1810 = vmatprep.subr.mxu0 0.0
  %1811 = vmatpush1.msra.mxu0 0.0
  %1812 = vmatprep.subr.mxu0 0.0
  %1813 = vmatpush1.msra.mxu0 0.0
  %1814 = vmatprep.subr.mxu0 0.0
  %1815 = vmatpush1.msra.mxu0 0.0
  %1816 = vmatprep.subr.mxu0 0.0
  %1817 = vmatpush1.msra.mxu0 0.0
  %1818 = vmatprep.subr.mxu0 0.0
  %1819 = vmatpush1.msra.mxu0 0.0
  %1820 = vmatprep.subr.mxu0 0.0
  %1821 = vmatpush1.msra.mxu0 0.0
  %1822 = vmatprep.subr.mxu0 0.0
  %1823 = vmatpush1.msra.mxu0 0.0
  %1824 = vmatprep.subr.mxu0 0.0
  %1825 = vmatpush1.msra.mxu0 0.0
  %1826 = vmatprep.subr.mxu0 0.0
  %1827 = vmatpush1.msra.mxu0 0.0
  %1828 = vmatprep.subr.mxu0 0.0
  %1829 = vmatpush1.msra.mxu0 0.0
  %1830 = vmatprep.subr.mxu0 0.0
  %1831 = vmatpush1.msra.mxu0 0.0
  %1832 = vmatprep.subr.mxu0 0.0
  %1833 = vmatpush1.msra.mxu0 0.0
  %1834 = vmatprep.subr.mxu0 0.0
  %1835 = vmatpush1.msra.mxu0 0.0
  %1836 = vmatprep.mubr.f32.mxu0 0.0
  %1837 = vmatmul.mubr.f32.gmra.mrb[0].mxu0 %v1276
  %v1838 = vpop.f32.mrb[0].mxu0
  %v1839 = vadd.f32 0.0, %v1838
  %v1840 = vpop.f32.mrb[0].mxu0
  %1841 = vmatprep.mubr.f32.mxu0 0.0
  %1842 = vmatmul.mubr.f32.gmra.mrb[0].mxu0 %v1279
  %v1843 = vpop.f32.mrb[0].mxu0
  %v1844 = vadd.f32 0.0, %v1843
  %v1845 = vpop.f32.mrb[0].mxu0
  %1846 = vmatprep.mubr.f32.mxu0 0.0
  %1847 = vmatmul.mubr.f32.gmra.mrb[0].mxu0 %v1282
  %v1848 = vpop.f32.mrb[0].mxu0
  %v1849 = vadd.f32 0.0, %v1848
  %v1850 = vpop.f32.mrb[0].mxu0
  %1851 = vmatprep.mubr.f32.mxu0 0.0
  %1852 = vmatmul.mubr.f32.gmra.mrb[0].mxu0 %v1285
  %v1853 = vpop.f32.mrb[0].mxu0
  %v1854 = vadd.f32 0.0, %v1853
  %v1855 = vpop.f32.mrb[0].mxu0
  %1856 = vmatprep.mubr.f32.mxu0 0.0
  %1857 = vmatmul.mubr.f32.gmra.mrb[0].mxu0 %v1288
  %v1858 = vpop.f32.mrb[0].mxu0
  %v1859 = vadd.f32 0.0, %v1858
  %v1860 = vpop.f32.mrb[0].mxu0
  %1861 = vmatprep.mubr.f32.mxu0 0.0
  %1862 = vmatmul.mubr.f32.gmra.mrb[0].mxu0 %v1291
  %v1863 = vpop.f32.mrb[0].mxu0
  %v1864 = vadd.f32 0.0, %v1863
  %v1865 = vpop.f32.mrb[0].mxu0
  %1866 = vmatprep.mubr.f32.mxu0 0.0
  %1867 = vmatmul.mubr.f32.gmra.mrb[0].mxu0 %v1294
  %v1868 = vpop.f32.mrb[0].mxu0
  %v1869 = vadd.f32 0.0, %v1868
  %v1870 = vpop.f32.mrb[0].mxu0
  %1871 = vmatprep.mubr.f32.mxu0 0.0
  %1872 = vmatmul.mubr.f32.gmra.mrb[0].mxu0 %v1297
  %v1873 = vpop.f32.mrb[0].mxu0
  %v1874 = vadd.f32 0.0, %v1873
  %v1875 = vpop.f32.mrb[0].mxu0
  %1876 = vmatprep.mubr.f32.mxu0 0.0
  %1877 = vmatmul.mubr.f32.gmra.mrb[0].mxu0 %v1300
  %v1878 = vpop.f32.mrb[0].mxu0
  %v1879 = vadd.f32 0.0, %v1878
  %v1880 = vpop.f32.mrb[0].mxu0
  %1881 = vmatprep.mubr.f32.mxu0 0.0
  %1882 = vmatmul.mubr.f32.gmra.mrb[0].mxu0 %v1303
  %v1883 = vpop.f32.mrb[0].mxu0
  %v1884 = vadd.f32 0.0, %v1883
  %v1885 = vpop.f32.mrb[0].mxu0
  %1886 = vmatprep.mubr.f32.mxu0 0.0
  %1887 = vmatmul.mubr.f32.gmra.mrb[0].mxu0 %v1306
  %v1888 = vpop.f32.mrb[0].mxu0
  %v1889 = vadd.f32 0.0, %v1888
  %v1890 = vpop.f32.mrb[0].mxu0
  %1891 = vmatprep.mubr.f32.mxu0 0.0
  %1892 = vmatmul.mubr.f32.gmra.mrb[0].mxu0 %v1309
  %v1893 = vpop.f32.mrb[0].mxu0
  %v1894 = vadd.f32 0.0, %v1893
  %v1895 = vpop.f32.mrb[0].mxu0
  %1896 = vdwg.mxu0
  %v1897 = vadd.f32 %v566, %v1839
  %v1898 = vadd.f32 %v571, %v1844
  %v1899 = vadd.f32 %v576, %v1849
  %v1900 = vadd.f32 %v581, %v1854
  %v1901 = vxor.u32 %v1897, 2147483648
  %v1902 = vxor.u32 %v1898, 2147483648
  %v1903 = vxor.u32 %v1899, 2147483648
  %v1904 = vxor.u32 %v1900, 2147483648
  %v1905 = vmul.f32 %v1901, 1.442695
  %v1906 = vpow.pop %v1905
  %v1907 = vmul.f32 %v1902, 1.442695
  %v1908 = vpow.pop %v1907
  %v1909 = vmul.f32 %v1903, 1.442695
  %v1910 = vpow.pop %v1909
  %v1911 = vmul.f32 %v1904, 1.442695
  %v1912 = vpow.pop %v1911
  %v1913 = vadd.f32 %v1906, 1.0
  %v1914 = vadd.f32 %v1908, 1.0
  %v1915 = vadd.f32 %v1910, 1.0
  %v1916 = vadd.f32 %v1912, 1.0
  %v1917 = vrcp.pop %v1913
  %v1918 = vmul.f32 1.0, %v1917
  %v1919 = vrcp.pop %v1914
  %v1920 = vmul.f32 1.0, %v1919
  %v1921 = vrcp.pop %v1915
  %v1922 = vmul.f32 1.0, %v1921
  %v1923 = vrcp.pop %v1916
  %v1924 = vmul.f32 1.0, %v1923
  %v1925 = vadd.f32 %v586, %v1859
  %v1926 = vadd.f32 %v591, %v1864
  %v1927 = vadd.f32 %v596, %v1869
  %v1928 = vadd.f32 %v601, %v1874
  %v1929 = vxor.u32 %v1925, 2147483648
  %v1930 = vxor.u32 %v1926, 2147483648
  %v1931 = vxor.u32 %v1927, 2147483648
  %v1932 = vxor.u32 %v1928, 2147483648
  %v1933 = vmul.f32 %v1929, 1.442695
  %v1934 = vpow.pop %v1933
  %v1935 = vmul.f32 %v1930, 1.442695
  %v1936 = vpow.pop %v1935
  %v1937 = vmul.f32 %v1931, 1.442695
  %v1938 = vpow.pop %v1937
  %v1939 = vmul.f32 %v1932, 1.442695
  %v1940 = vpow.pop %v1939
  %v1941 = vadd.f32 %v1934, 1.0
  %v1942 = vadd.f32 %v1936, 1.0
  %v1943 = vadd.f32 %v1938, 1.0
  %v1944 = vadd.f32 %v1940, 1.0
  %v1945 = vrcp.pop %v1941
  %v1946 = vmul.f32 1.0, %v1945
  %v1947 = vrcp.pop %v1942
  %v1948 = vmul.f32 1.0, %v1947
  %v1949 = vrcp.pop %v1943
  %v1950 = vmul.f32 1.0, %v1949
  %v1951 = vrcp.pop %v1944
  %v1952 = vmul.f32 1.0, %v1951
  %v1953 = vadd.f32 %v1879, %v155
  %v1954 = vadd.f32 %v1884, %v160
  %v1955 = vadd.f32 %v1889, %v165
  %v1956 = vadd.f32 %v1894, %v170
  %v1957 = vmul.f32 %v1918, %v1953
  %v1958 = vmul.f32 %v1920, %v1954
  %v1959 = vmul.f32 %v1922, %v1955
  %v1960 = vmul.f32 %v1924, %v1956
  %v1961 = vadd.f32 %v606, %v1957
  %v1962 = vadd.f32 %v611, %v1958
  %v1963 = vadd.f32 %v616, %v1959
  %v1964 = vadd.f32 %v621, %v1960
  %v1965 = vtanh.pop %v1961
  %v1966 = vtanh.pop %v1962
  %v1967 = vtanh.pop %v1963
  %v1968 = vtanh.pop %v1964
  %v1969 = vsub.f32 1.0, %v1946
  %v1970 = vsub.f32 1.0, %v1948
  %v1971 = vsub.f32 1.0, %v1950
  %v1972 = vsub.f32 1.0, %v1952
  %v1973 = vmul.f32 %v1969, %v1965
  %v1974 = vmul.f32 %v1970, %v1966
  %v1975 = vmul.f32 %v1971, %v1967
  %v1976 = vmul.f32 %v1972, %v1968
  %v1977 = vmul.f32 %v1946, %v1751
  %v1978 = vmul.f32 %v1948, %v1752
  %v1979 = vmul.f32 %v1950, %v1753
  %v1980 = vmul.f32 %v1952, %v1754
  %v1981 = vadd.f32 %v1973, %v1977
  %v1982 = vadd.f32 %v1974, %v1978
  %v1983 = vadd.f32 %v1975, %v1979
  %v1984 = vadd.f32 %v1976, %v1980
  %v1985 = vmul.f32 %v1981, %v179
  %v1986 = vmul.f32 %v1982, %v184
  %v1987 = vmul.f32 %v1983, %v189
  %v1988 = vmul.f32 %v1984, %v194
  %v1989 = vsel %vm1528, %v1985, 0.0
  %v1990 = vsel %vm1528, %v1986, 0.0
  %v1991 = vadd.f32 %v1989, %v1990
  %v1992 = vsel %vm1528, %v1987, 0.0
  %v1993 = vadd.f32 %v1991, %v1992
  %v1994 = vsel %vm1528, %v1988, 0.0
  %v1995 = vadd.f32 %v1993, %v1994
  %v1996 = vrot.slane %v1995, 4
  %v1997 = vadd.f32 %v1995, %v1996
  %v1998 = vrot.slane %v1997, 2
  %v1999 = vadd.f32 %v1997, %v1998
  %v2000 = vrot.slane %v1999, 1
  %v2001 = vadd.f32 %v1999, %v2000
  %2002 = vmatprep.subr.mxu0 0.0
  %2003 = vmatpush1.msra.mxu0 %v1981
  %2004 = vmatprep.subr.mxu0 0.0
  %2005 = vmatpush1.msra.mxu0 %v1982
  %2006 = vmatprep.subr.mxu0 0.0
  %2007 = vmatpush1.msra.mxu0 %v1983
  %2008 = vmatprep.subr.mxu0 0.0
  %2009 = vmatpush1.msra.mxu0 %v1984
  %2010 = vmatprep.subr.mxu0 0.0
  %2011 = vmatpush1.msra.mxu0 0.0
  %2012 = vmatprep.subr.mxu0 0.0
  %2013 = vmatpush1.msra.mxu0 0.0
  %2014 = vmatprep.subr.mxu0 0.0
  %2015 = vmatpush1.msra.mxu0 0.0
  %2016 = vmatprep.subr.mxu0 0.0
  %2017 = vmatpush1.msra.mxu0 0.0
  %2018 = vmatprep.subr.mxu0 0.0
  %2019 = vmatpush1.msra.mxu0 0.0
  %2020 = vmatprep.subr.mxu0 0.0
  %2021 = vmatpush1.msra.mxu0 0.0
  %2022 = vmatprep.subr.mxu0 0.0
  %2023 = vmatpush1.msra.mxu0 0.0
  %2024 = vmatprep.subr.mxu0 0.0
  %2025 = vmatpush1.msra.mxu0 0.0
  %2026 = vmatprep.subr.mxu0 0.0
  %2027 = vmatpush1.msra.mxu0 0.0
  %2028 = vmatprep.subr.mxu0 0.0
  %2029 = vmatpush1.msra.mxu0 0.0
  %2030 = vmatprep.subr.mxu0 0.0
  %2031 = vmatpush1.msra.mxu0 0.0
  %2032 = vmatprep.subr.mxu0 0.0
  %2033 = vmatpush1.msra.mxu0 0.0
  %2034 = vmatprep.subr.mxu0 0.0
  %2035 = vmatpush1.msra.mxu0 0.0
  %2036 = vmatprep.subr.mxu0 0.0
  %2037 = vmatpush1.msra.mxu0 0.0
  %2038 = vmatprep.subr.mxu0 0.0
  %2039 = vmatpush1.msra.mxu0 0.0
  %2040 = vmatprep.subr.mxu0 0.0
  %2041 = vmatpush1.msra.mxu0 0.0
  %2042 = vmatprep.subr.mxu0 0.0
  %2043 = vmatpush1.msra.mxu0 0.0
  %2044 = vmatprep.subr.mxu0 0.0
  %2045 = vmatpush1.msra.mxu0 0.0
  %2046 = vmatprep.subr.mxu0 0.0
  %2047 = vmatpush1.msra.mxu0 0.0
  %2048 = vmatprep.subr.mxu0 0.0
  %2049 = vmatpush1.msra.mxu0 0.0
  %2050 = vmatprep.subr.mxu0 0.0
  %2051 = vmatpush1.msra.mxu0 0.0
  %2052 = vmatprep.subr.mxu0 0.0
  %2053 = vmatpush1.msra.mxu0 0.0
  %2054 = vmatprep.subr.mxu0 0.0
  %2055 = vmatpush1.msra.mxu0 0.0
  %2056 = vmatprep.subr.mxu0 0.0
  %2057 = vmatpush1.msra.mxu0 0.0
  %2058 = vmatprep.subr.mxu0 0.0
  %2059 = vmatpush1.msra.mxu0 0.0
  %2060 = vmatprep.subr.mxu0 0.0
  %2061 = vmatpush1.msra.mxu0 0.0
  %2062 = vmatprep.subr.mxu0 0.0
  %2063 = vmatpush1.msra.mxu0 0.0
  %2064 = vmatprep.subr.mxu0 0.0
  %2065 = vmatpush1.msra.mxu0 0.0
  %2066 = vmatprep.mubr.f32.mxu0 0.0
  %2067 = vmatmul.mubr.f32.gmra.mrb[0].mxu0 %v1276
  %v2068 = vpop.f32.mrb[0].mxu0
  %v2069 = vadd.f32 0.0, %v2068
  %v2070 = vpop.f32.mrb[0].mxu0
  %2071 = vmatprep.mubr.f32.mxu0 0.0
  %2072 = vmatmul.mubr.f32.gmra.mrb[0].mxu0 %v1279
  %v2073 = vpop.f32.mrb[0].mxu0
  %v2074 = vadd.f32 0.0, %v2073
  %v2075 = vpop.f32.mrb[0].mxu0
  %2076 = vmatprep.mubr.f32.mxu0 0.0
  %2077 = vmatmul.mubr.f32.gmra.mrb[0].mxu0 %v1282
  %v2078 = vpop.f32.mrb[0].mxu0
  %v2079 = vadd.f32 0.0, %v2078
  %v2080 = vpop.f32.mrb[0].mxu0
  %2081 = vmatprep.mubr.f32.mxu0 0.0
  %2082 = vmatmul.mubr.f32.gmra.mrb[0].mxu0 %v1285
  %v2083 = vpop.f32.mrb[0].mxu0
  %v2084 = vadd.f32 0.0, %v2083
  %v2085 = vpop.f32.mrb[0].mxu0
  %2086 = vmatprep.mubr.f32.mxu0 0.0
  %2087 = vmatmul.mubr.f32.gmra.mrb[0].mxu0 %v1288
  %v2088 = vpop.f32.mrb[0].mxu0
  %v2089 = vadd.f32 0.0, %v2088
  %v2090 = vpop.f32.mrb[0].mxu0
  %2091 = vmatprep.mubr.f32.mxu0 0.0
  %2092 = vmatmul.mubr.f32.gmra.mrb[0].mxu0 %v1291
  %v2093 = vpop.f32.mrb[0].mxu0
  %v2094 = vadd.f32 0.0, %v2093
  %v2095 = vpop.f32.mrb[0].mxu0
  %2096 = vmatprep.mubr.f32.mxu0 0.0
  %2097 = vmatmul.mubr.f32.gmra.mrb[0].mxu0 %v1294
  %v2098 = vpop.f32.mrb[0].mxu0
  %v2099 = vadd.f32 0.0, %v2098
  %v2100 = vpop.f32.mrb[0].mxu0
  %2101 = vmatprep.mubr.f32.mxu0 0.0
  %2102 = vmatmul.mubr.f32.gmra.mrb[0].mxu0 %v1297
  %v2103 = vpop.f32.mrb[0].mxu0
  %v2104 = vadd.f32 0.0, %v2103
  %v2105 = vpop.f32.mrb[0].mxu0
  %2106 = vmatprep.mubr.f32.mxu0 0.0
  %2107 = vmatmul.mubr.f32.gmra.mrb[0].mxu0 %v1300
  %v2108 = vpop.f32.mrb[0].mxu0
  %v2109 = vadd.f32 0.0, %v2108
  %v2110 = vpop.f32.mrb[0].mxu0
  %2111 = vmatprep.mubr.f32.mxu0 0.0
  %2112 = vmatmul.mubr.f32.gmra.mrb[0].mxu0 %v1303
  %v2113 = vpop.f32.mrb[0].mxu0
  %v2114 = vadd.f32 0.0, %v2113
  %v2115 = vpop.f32.mrb[0].mxu0
  %2116 = vmatprep.mubr.f32.mxu0 0.0
  %2117 = vmatmul.mubr.f32.gmra.mrb[0].mxu0 %v1306
  %v2118 = vpop.f32.mrb[0].mxu0
  %v2119 = vadd.f32 0.0, %v2118
  %v2120 = vpop.f32.mrb[0].mxu0
  %2121 = vmatprep.mubr.f32.mxu0 0.0
  %2122 = vmatmul.mubr.f32.gmra.mrb[0].mxu0 %v1309
  %v2123 = vpop.f32.mrb[0].mxu0
  %v2124 = vadd.f32 0.0, %v2123
  %v2125 = vpop.f32.mrb[0].mxu0
  %2126 = vdwg.mxu0
  %v2127 = vadd.f32 %v696, %v2069
  %v2128 = vadd.f32 %v701, %v2074
  %v2129 = vadd.f32 %v706, %v2079
  %v2130 = vadd.f32 %v711, %v2084
  %v2131 = vxor.u32 %v2127, 2147483648
  %v2132 = vxor.u32 %v2128, 2147483648
  %v2133 = vxor.u32 %v2129, 2147483648
  %v2134 = vxor.u32 %v2130, 2147483648
  %v2135 = vmul.f32 %v2131, 1.442695
  %v2136 = vpow.pop %v2135
  %v2137 = vmul.f32 %v2132, 1.442695
  %v2138 = vpow.pop %v2137
  %v2139 = vmul.f32 %v2133, 1.442695
  %v2140 = vpow.pop %v2139
  %v2141 = vmul.f32 %v2134, 1.442695
  %v2142 = vpow.pop %v2141
  %v2143 = vadd.f32 %v2136, 1.0
  %v2144 = vadd.f32 %v2138, 1.0
  %v2145 = vadd.f32 %v2140, 1.0
  %v2146 = vadd.f32 %v2142, 1.0
  %v2147 = vrcp.pop %v2143
  %v2148 = vmul.f32 1.0, %v2147
  %v2149 = vrcp.pop %v2144
  %v2150 = vmul.f32 1.0, %v2149
  %v2151 = vrcp.pop %v2145
  %v2152 = vmul.f32 1.0, %v2151
  %v2153 = vrcp.pop %v2146
  %v2154 = vmul.f32 1.0, %v2153
  %v2155 = vadd.f32 %v716, %v2089
  %v2156 = vadd.f32 %v721, %v2094
  %v2157 = vadd.f32 %v726, %v2099
  %v2158 = vadd.f32 %v731, %v2104
  %v2159 = vxor.u32 %v2155, 2147483648
  %v2160 = vxor.u32 %v2156, 2147483648
  %v2161 = vxor.u32 %v2157, 2147483648
  %v2162 = vxor.u32 %v2158, 2147483648
  %v2163 = vmul.f32 %v2159, 1.442695
  %v2164 = vpow.pop %v2163
  %v2165 = vmul.f32 %v2160, 1.442695
  %v2166 = vpow.pop %v2165
  %v2167 = vmul.f32 %v2161, 1.442695
  %v2168 = vpow.pop %v2167
  %v2169 = vmul.f32 %v2162, 1.442695
  %v2170 = vpow.pop %v2169
  %v2171 = vadd.f32 %v2164, 1.0
  %v2172 = vadd.f32 %v2166, 1.0
  %v2173 = vadd.f32 %v2168, 1.0
  %v2174 = vadd.f32 %v2170, 1.0
  %v2175 = vrcp.pop %v2171
  %v2176 = vmul.f32 1.0, %v2175
  %v2177 = vrcp.pop %v2172
  %v2178 = vmul.f32 1.0, %v2177
  %v2179 = vrcp.pop %v2173
  %v2180 = vmul.f32 1.0, %v2179
  %v2181 = vrcp.pop %v2174
  %v2182 = vmul.f32 1.0, %v2181
  %v2183 = vadd.f32 %v2109, %v155
  %v2184 = vadd.f32 %v2114, %v160
  %v2185 = vadd.f32 %v2119, %v165
  %v2186 = vadd.f32 %v2124, %v170
  %v2187 = vmul.f32 %v2148, %v2183
  %v2188 = vmul.f32 %v2150, %v2184
  %v2189 = vmul.f32 %v2152, %v2185
  %v2190 = vmul.f32 %v2154, %v2186
  %v2191 = vadd.f32 %v736, %v2187
  %v2192 = vadd.f32 %v741, %v2188
  %v2193 = vadd.f32 %v746, %v2189
  %v2194 = vadd.f32 %v751, %v2190
  %v2195 = vtanh.pop %v2191
  %v2196 = vtanh.pop %v2192
  %v2197 = vtanh.pop %v2193
  %v2198 = vtanh.pop %v2194
  %v2199 = vsub.f32 1.0, %v2176
  %v2200 = vsub.f32 1.0, %v2178
  %v2201 = vsub.f32 1.0, %v2180
  %v2202 = vsub.f32 1.0, %v2182
  %v2203 = vmul.f32 %v2199, %v2195
  %v2204 = vmul.f32 %v2200, %v2196
  %v2205 = vmul.f32 %v2201, %v2197
  %v2206 = vmul.f32 %v2202, %v2198
  %v2207 = vmul.f32 %v2176, %v1981
  %v2208 = vmul.f32 %v2178, %v1982
  %v2209 = vmul.f32 %v2180, %v1983
  %v2210 = vmul.f32 %v2182, %v1984
  %v2211 = vadd.f32 %v2203, %v2207
  %v2212 = vadd.f32 %v2204, %v2208
  %v2213 = vadd.f32 %v2205, %v2209
  %v2214 = vadd.f32 %v2206, %v2210
  %v2215 = vmul.f32 %v2211, %v179
  %v2216 = vmul.f32 %v2212, %v184
  %v2217 = vmul.f32 %v2213, %v189
  %v2218 = vmul.f32 %v2214, %v194
  %v2219 = vsel %vm1528, %v2215, 0.0
  %v2220 = vsel %vm1528, %v2216, 0.0
  %v2221 = vadd.f32 %v2219, %v2220
  %v2222 = vsel %vm1528, %v2217, 0.0
  %v2223 = vadd.f32 %v2221, %v2222
  %v2224 = vsel %vm1528, %v2218, 0.0
  %v2225 = vadd.f32 %v2223, %v2224
  %v2226 = vrot.slane %v2225, 4
  %v2227 = vadd.f32 %v2225, %v2226
  %v2228 = vrot.slane %v2227, 2
  %v2229 = vadd.f32 %v2227, %v2228
  %v2230 = vrot.slane %v2229, 1
  %v2231 = vadd.f32 %v2229, %v2230
  %2232 = vmatprep.subr.mxu0 0.0
  %2233 = vmatpush1.msra.mxu0 %v2211
  %2234 = vmatprep.subr.mxu0 0.0
  %2235 = vmatpush1.msra.mxu0 %v2212
  %2236 = vmatprep.subr.mxu0 0.0
  %2237 = vmatpush1.msra.mxu0 %v2213
  %2238 = vmatprep.subr.mxu0 0.0
  %2239 = vmatpush1.msra.mxu0 %v2214
  %2240 = vmatprep.subr.mxu0 0.0
  %2241 = vmatpush1.msra.mxu0 0.0
  %2242 = vmatprep.subr.mxu0 0.0
  %2243 = vmatpush1.msra.mxu0 0.0
  %2244 = vmatprep.subr.mxu0 0.0
  %2245 = vmatpush1.msra.mxu0 0.0
  %2246 = vmatprep.subr.mxu0 0.0
  %2247 = vmatpush1.msra.mxu0 0.0
  %2248 = vmatprep.subr.mxu0 0.0
  %2249 = vmatpush1.msra.mxu0 0.0
  %2250 = vmatprep.subr.mxu0 0.0
  %2251 = vmatpush1.msra.mxu0 0.0
  %2252 = vmatprep.subr.mxu0 0.0
  %2253 = vmatpush1.msra.mxu0 0.0
  %2254 = vmatprep.subr.mxu0 0.0
  %2255 = vmatpush1.msra.mxu0 0.0
  %2256 = vmatprep.subr.mxu0 0.0
  %2257 = vmatpush1.msra.mxu0 0.0
  %2258 = vmatprep.subr.mxu0 0.0
  %2259 = vmatpush1.msra.mxu0 0.0
  %2260 = vmatprep.subr.mxu0 0.0
  %2261 = vmatpush1.msra.mxu0 0.0
  %2262 = vmatprep.subr.mxu0 0.0
  %2263 = vmatpush1.msra.mxu0 0.0
  %2264 = vmatprep.subr.mxu0 0.0
  %2265 = vmatpush1.msra.mxu0 0.0
  %2266 = vmatprep.subr.mxu0 0.0
  %2267 = vmatpush1.msra.mxu0 0.0
  %2268 = vmatprep.subr.mxu0 0.0
  %2269 = vmatpush1.msra.mxu0 0.0
  %2270 = vmatprep.subr.mxu0 0.0
  %2271 = vmatpush1.msra.mxu0 0.0
  %2272 = vmatprep.subr.mxu0 0.0
  %2273 = vmatpush1.msra.mxu0 0.0
  %2274 = vmatprep.subr.mxu0 0.0
  %2275 = vmatpush1.msra.mxu0 0.0
  %2276 = vmatprep.subr.mxu0 0.0
  %2277 = vmatpush1.msra.mxu0 0.0
  %2278 = vmatprep.subr.mxu0 0.0
  %2279 = vmatpush1.msra.mxu0 0.0
  %2280 = vmatprep.subr.mxu0 0.0
  %2281 = vmatpush1.msra.mxu0 0.0
  %2282 = vmatprep.subr.mxu0 0.0
  %2283 = vmatpush1.msra.mxu0 0.0
  %2284 = vmatprep.subr.mxu0 0.0
  %2285 = vmatpush1.msra.mxu0 0.0
  %2286 = vmatprep.subr.mxu0 0.0
  %2287 = vmatpush1.msra.mxu0 0.0
  %2288 = vmatprep.subr.mxu0 0.0
  %2289 = vmatpush1.msra.mxu0 0.0
  %2290 = vmatprep.subr.mxu0 0.0
  %2291 = vmatpush1.msra.mxu0 0.0
  %2292 = vmatprep.subr.mxu0 0.0
  %2293 = vmatpush1.msra.mxu0 0.0
  %2294 = vmatprep.subr.mxu0 0.0
  %2295 = vmatpush1.msra.mxu0 0.0
  %2296 = vmatprep.mubr.f32.mxu0 0.0
  %2297 = vmatmul.mubr.f32.gmra.mrb[0].mxu0 %v1276
  %v2298 = vpop.f32.mrb[0].mxu0
  %v2299 = vadd.f32 0.0, %v2298
  %v2300 = vpop.f32.mrb[0].mxu0
  %2301 = vmatprep.mubr.f32.mxu0 0.0
  %2302 = vmatmul.mubr.f32.gmra.mrb[0].mxu0 %v1279
  %v2303 = vpop.f32.mrb[0].mxu0
  %v2304 = vadd.f32 0.0, %v2303
  %v2305 = vpop.f32.mrb[0].mxu0
  %2306 = vmatprep.mubr.f32.mxu0 0.0
  %2307 = vmatmul.mubr.f32.gmra.mrb[0].mxu0 %v1282
  %v2308 = vpop.f32.mrb[0].mxu0
  %v2309 = vadd.f32 0.0, %v2308
  %v2310 = vpop.f32.mrb[0].mxu0
  %2311 = vmatprep.mubr.f32.mxu0 0.0
  %2312 = vmatmul.mubr.f32.gmra.mrb[0].mxu0 %v1285
  %v2313 = vpop.f32.mrb[0].mxu0
  %v2314 = vadd.f32 0.0, %v2313
  %v2315 = vpop.f32.mrb[0].mxu0
  %2316 = vmatprep.mubr.f32.mxu0 0.0
  %2317 = vmatmul.mubr.f32.gmra.mrb[0].mxu0 %v1288
  %v2318 = vpop.f32.mrb[0].mxu0
  %v2319 = vadd.f32 0.0, %v2318
  %v2320 = vpop.f32.mrb[0].mxu0
  %2321 = vmatprep.mubr.f32.mxu0 0.0
  %2322 = vmatmul.mubr.f32.gmra.mrb[0].mxu0 %v1291
  %v2323 = vpop.f32.mrb[0].mxu0
  %v2324 = vadd.f32 0.0, %v2323
  %v2325 = vpop.f32.mrb[0].mxu0
  %2326 = vmatprep.mubr.f32.mxu0 0.0
  %2327 = vmatmul.mubr.f32.gmra.mrb[0].mxu0 %v1294
  %v2328 = vpop.f32.mrb[0].mxu0
  %v2329 = vadd.f32 0.0, %v2328
  %v2330 = vpop.f32.mrb[0].mxu0
  %2331 = vmatprep.mubr.f32.mxu0 0.0
  %2332 = vmatmul.mubr.f32.gmra.mrb[0].mxu0 %v1297
  %v2333 = vpop.f32.mrb[0].mxu0
  %v2334 = vadd.f32 0.0, %v2333
  %v2335 = vpop.f32.mrb[0].mxu0
  %2336 = vmatprep.mubr.f32.mxu0 0.0
  %2337 = vmatmul.mubr.f32.gmra.mrb[0].mxu0 %v1300
  %v2338 = vpop.f32.mrb[0].mxu0
  %v2339 = vadd.f32 0.0, %v2338
  %v2340 = vpop.f32.mrb[0].mxu0
  %2341 = vmatprep.mubr.f32.mxu0 0.0
  %2342 = vmatmul.mubr.f32.gmra.mrb[0].mxu0 %v1303
  %v2343 = vpop.f32.mrb[0].mxu0
  %v2344 = vadd.f32 0.0, %v2343
  %v2345 = vpop.f32.mrb[0].mxu0
  %2346 = vmatprep.mubr.f32.mxu0 0.0
  %2347 = vmatmul.mubr.f32.gmra.mrb[0].mxu0 %v1306
  %v2348 = vpop.f32.mrb[0].mxu0
  %v2349 = vadd.f32 0.0, %v2348
  %v2350 = vpop.f32.mrb[0].mxu0
  %2351 = vmatprep.mubr.f32.mxu0 0.0
  %2352 = vmatmul.mubr.f32.gmra.mrb[0].mxu0 %v1309
  %v2353 = vpop.f32.mrb[0].mxu0
  %v2354 = vadd.f32 0.0, %v2353
  %v2355 = vpop.f32.mrb[0].mxu0
  %2356 = vdwg.mxu0
  %v2357 = vadd.f32 %v826, %v2299
  %v2358 = vadd.f32 %v831, %v2304
  %v2359 = vadd.f32 %v836, %v2309
  %v2360 = vadd.f32 %v841, %v2314
  %v2361 = vxor.u32 %v2357, 2147483648
  %v2362 = vxor.u32 %v2358, 2147483648
  %v2363 = vxor.u32 %v2359, 2147483648
  %v2364 = vxor.u32 %v2360, 2147483648
  %v2365 = vmul.f32 %v2361, 1.442695
  %v2366 = vpow.pop %v2365
  %v2367 = vmul.f32 %v2362, 1.442695
  %v2368 = vpow.pop %v2367
  %v2369 = vmul.f32 %v2363, 1.442695
  %v2370 = vpow.pop %v2369
  %v2371 = vmul.f32 %v2364, 1.442695
  %v2372 = vpow.pop %v2371
  %v2373 = vadd.f32 %v2366, 1.0
  %v2374 = vadd.f32 %v2368, 1.0
  %v2375 = vadd.f32 %v2370, 1.0
  %v2376 = vadd.f32 %v2372, 1.0
  %v2377 = vrcp.pop %v2373
  %v2378 = vmul.f32 1.0, %v2377
  %v2379 = vrcp.pop %v2374
  %v2380 = vmul.f32 1.0, %v2379
  %v2381 = vrcp.pop %v2375
  %v2382 = vmul.f32 1.0, %v2381
  %v2383 = vrcp.pop %v2376
  %v2384 = vmul.f32 1.0, %v2383
  %v2385 = vadd.f32 %v846, %v2319
  %v2386 = vadd.f32 %v851, %v2324
  %v2387 = vadd.f32 %v856, %v2329
  %v2388 = vadd.f32 %v861, %v2334
  %v2389 = vxor.u32 %v2385, 2147483648
  %v2390 = vxor.u32 %v2386, 2147483648
  %v2391 = vxor.u32 %v2387, 2147483648
  %v2392 = vxor.u32 %v2388, 2147483648
  %v2393 = vmul.f32 %v2389, 1.442695
  %v2394 = vpow.pop %v2393
  %v2395 = vmul.f32 %v2390, 1.442695
  %v2396 = vpow.pop %v2395
  %v2397 = vmul.f32 %v2391, 1.442695
  %v2398 = vpow.pop %v2397
  %v2399 = vmul.f32 %v2392, 1.442695
  %v2400 = vpow.pop %v2399
  %v2401 = vadd.f32 %v2394, 1.0
  %v2402 = vadd.f32 %v2396, 1.0
  %v2403 = vadd.f32 %v2398, 1.0
  %v2404 = vadd.f32 %v2400, 1.0
  %v2405 = vrcp.pop %v2401
  %v2406 = vmul.f32 1.0, %v2405
  %v2407 = vrcp.pop %v2402
  %v2408 = vmul.f32 1.0, %v2407
  %v2409 = vrcp.pop %v2403
  %v2410 = vmul.f32 1.0, %v2409
  %v2411 = vrcp.pop %v2404
  %v2412 = vmul.f32 1.0, %v2411
  %v2413 = vadd.f32 %v2339, %v155
  %v2414 = vadd.f32 %v2344, %v160
  %v2415 = vadd.f32 %v2349, %v165
  %v2416 = vadd.f32 %v2354, %v170
  %v2417 = vmul.f32 %v2378, %v2413
  %v2418 = vmul.f32 %v2380, %v2414
  %v2419 = vmul.f32 %v2382, %v2415
  %v2420 = vmul.f32 %v2384, %v2416
  %v2421 = vadd.f32 %v866, %v2417
  %v2422 = vadd.f32 %v871, %v2418
  %v2423 = vadd.f32 %v876, %v2419
  %v2424 = vadd.f32 %v881, %v2420
  %v2425 = vtanh.pop %v2421
  %v2426 = vtanh.pop %v2422
  %v2427 = vtanh.pop %v2423
  %v2428 = vtanh.pop %v2424
  %v2429 = vsub.f32 1.0, %v2406
  %v2430 = vsub.f32 1.0, %v2408
  %v2431 = vsub.f32 1.0, %v2410
  %v2432 = vsub.f32 1.0, %v2412
  %v2433 = vmul.f32 %v2429, %v2425
  %v2434 = vmul.f32 %v2430, %v2426
  %v2435 = vmul.f32 %v2431, %v2427
  %v2436 = vmul.f32 %v2432, %v2428
  %v2437 = vmul.f32 %v2406, %v2211
  %v2438 = vmul.f32 %v2408, %v2212
  %v2439 = vmul.f32 %v2410, %v2213
  %v2440 = vmul.f32 %v2412, %v2214
  %v2441 = vadd.f32 %v2433, %v2437
  %v2442 = vadd.f32 %v2434, %v2438
  %v2443 = vadd.f32 %v2435, %v2439
  %v2444 = vadd.f32 %v2436, %v2440
  %v2445 = vmul.f32 %v2441, %v179
  %v2446 = vmul.f32 %v2442, %v184
  %v2447 = vmul.f32 %v2443, %v189
  %v2448 = vmul.f32 %v2444, %v194
  %v2449 = vsel %vm1528, %v2445, 0.0
  %v2450 = vsel %vm1528, %v2446, 0.0
  %v2451 = vadd.f32 %v2449, %v2450
  %v2452 = vsel %vm1528, %v2447, 0.0
  %v2453 = vadd.f32 %v2451, %v2452
  %v2454 = vsel %vm1528, %v2448, 0.0
  %v2455 = vadd.f32 %v2453, %v2454
  %v2456 = vrot.slane %v2455, 4
  %v2457 = vadd.f32 %v2455, %v2456
  %v2458 = vrot.slane %v2457, 2
  %v2459 = vadd.f32 %v2457, %v2458
  %v2460 = vrot.slane %v2459, 1
  %v2461 = vadd.f32 %v2459, %v2460
  %2462 = vmatprep.subr.mxu0 0.0
  %2463 = vmatpush1.msra.mxu0 %v2441
  %2464 = vmatprep.subr.mxu0 0.0
  %2465 = vmatpush1.msra.mxu0 %v2442
  %2466 = vmatprep.subr.mxu0 0.0
  %2467 = vmatpush1.msra.mxu0 %v2443
  %2468 = vmatprep.subr.mxu0 0.0
  %2469 = vmatpush1.msra.mxu0 %v2444
  %2470 = vmatprep.subr.mxu0 0.0
  %2471 = vmatpush1.msra.mxu0 0.0
  %2472 = vmatprep.subr.mxu0 0.0
  %2473 = vmatpush1.msra.mxu0 0.0
  %2474 = vmatprep.subr.mxu0 0.0
  %2475 = vmatpush1.msra.mxu0 0.0
  %2476 = vmatprep.subr.mxu0 0.0
  %2477 = vmatpush1.msra.mxu0 0.0
  %2478 = vmatprep.subr.mxu0 0.0
  %2479 = vmatpush1.msra.mxu0 0.0
  %2480 = vmatprep.subr.mxu0 0.0
  %2481 = vmatpush1.msra.mxu0 0.0
  %2482 = vmatprep.subr.mxu0 0.0
  %2483 = vmatpush1.msra.mxu0 0.0
  %2484 = vmatprep.subr.mxu0 0.0
  %2485 = vmatpush1.msra.mxu0 0.0
  %2486 = vmatprep.subr.mxu0 0.0
  %2487 = vmatpush1.msra.mxu0 0.0
  %2488 = vmatprep.subr.mxu0 0.0
  %2489 = vmatpush1.msra.mxu0 0.0
  %2490 = vmatprep.subr.mxu0 0.0
  %2491 = vmatpush1.msra.mxu0 0.0
  %2492 = vmatprep.subr.mxu0 0.0
  %2493 = vmatpush1.msra.mxu0 0.0
  %2494 = vmatprep.subr.mxu0 0.0
  %2495 = vmatpush1.msra.mxu0 0.0
  %2496 = vmatprep.subr.mxu0 0.0
  %2497 = vmatpush1.msra.mxu0 0.0
  %2498 = vmatprep.subr.mxu0 0.0
  %2499 = vmatpush1.msra.mxu0 0.0
  %2500 = vmatprep.subr.mxu0 0.0
  %2501 = vmatpush1.msra.mxu0 0.0
  %2502 = vmatprep.subr.mxu0 0.0
  %2503 = vmatpush1.msra.mxu0 0.0
  %2504 = vmatprep.subr.mxu0 0.0
  %2505 = vmatpush1.msra.mxu0 0.0
  %2506 = vmatprep.subr.mxu0 0.0
  %2507 = vmatpush1.msra.mxu0 0.0
  %2508 = vmatprep.subr.mxu0 0.0
  %2509 = vmatpush1.msra.mxu0 0.0
  %2510 = vmatprep.subr.mxu0 0.0
  %2511 = vmatpush1.msra.mxu0 0.0
  %2512 = vmatprep.subr.mxu0 0.0
  %2513 = vmatpush1.msra.mxu0 0.0
  %2514 = vmatprep.subr.mxu0 0.0
  %2515 = vmatpush1.msra.mxu0 0.0
  %2516 = vmatprep.subr.mxu0 0.0
  %2517 = vmatpush1.msra.mxu0 0.0
  %2518 = vmatprep.subr.mxu0 0.0
  %2519 = vmatpush1.msra.mxu0 0.0
  %2520 = vmatprep.subr.mxu0 0.0
  %2521 = vmatpush1.msra.mxu0 0.0
  %2522 = vmatprep.subr.mxu0 0.0
  %2523 = vmatpush1.msra.mxu0 0.0
  %2524 = vmatprep.subr.mxu0 0.0
  %2525 = vmatpush1.msra.mxu0 0.0
  %2526 = vmatprep.mubr.f32.mxu0 0.0
  %2527 = vmatmul.mubr.f32.gmra.mrb[0].mxu0 %v1276
  %v2528 = vpop.f32.mrb[0].mxu0
  %v2529 = vadd.f32 0.0, %v2528
  %v2530 = vpop.f32.mrb[0].mxu0
  %2531 = vmatprep.mubr.f32.mxu0 0.0
  %2532 = vmatmul.mubr.f32.gmra.mrb[0].mxu0 %v1279
  %v2533 = vpop.f32.mrb[0].mxu0
  %v2534 = vadd.f32 0.0, %v2533
  %v2535 = vpop.f32.mrb[0].mxu0
  %2536 = vmatprep.mubr.f32.mxu0 0.0
  %2537 = vmatmul.mubr.f32.gmra.mrb[0].mxu0 %v1282
  %v2538 = vpop.f32.mrb[0].mxu0
  %v2539 = vadd.f32 0.0, %v2538
  %v2540 = vpop.f32.mrb[0].mxu0
  %2541 = vmatprep.mubr.f32.mxu0 0.0
  %2542 = vmatmul.mubr.f32.gmra.mrb[0].mxu0 %v1285
  %v2543 = vpop.f32.mrb[0].mxu0
  %v2544 = vadd.f32 0.0, %v2543
  %v2545 = vpop.f32.mrb[0].mxu0
  %2546 = vmatprep.mubr.f32.mxu0 0.0
  %2547 = vmatmul.mubr.f32.gmra.mrb[0].mxu0 %v1288
  %v2548 = vpop.f32.mrb[0].mxu0
  %v2549 = vadd.f32 0.0, %v2548
  %v2550 = vpop.f32.mrb[0].mxu0
  %2551 = vmatprep.mubr.f32.mxu0 0.0
  %2552 = vmatmul.mubr.f32.gmra.mrb[0].mxu0 %v1291
  %v2553 = vpop.f32.mrb[0].mxu0
  %v2554 = vadd.f32 0.0, %v2553
  %v2555 = vpop.f32.mrb[0].mxu0
  %2556 = vmatprep.mubr.f32.mxu0 0.0
  %2557 = vmatmul.mubr.f32.gmra.mrb[0].mxu0 %v1294
  %v2558 = vpop.f32.mrb[0].mxu0
  %v2559 = vadd.f32 0.0, %v2558
  %v2560 = vpop.f32.mrb[0].mxu0
  %2561 = vmatprep.mubr.f32.mxu0 0.0
  %2562 = vmatmul.mubr.f32.gmra.mrb[0].mxu0 %v1297
  %v2563 = vpop.f32.mrb[0].mxu0
  %v2564 = vadd.f32 0.0, %v2563
  %v2565 = vpop.f32.mrb[0].mxu0
  %2566 = vmatprep.mubr.f32.mxu0 0.0
  %2567 = vmatmul.mubr.f32.gmra.mrb[0].mxu0 %v1300
  %v2568 = vpop.f32.mrb[0].mxu0
  %v2569 = vadd.f32 0.0, %v2568
  %v2570 = vpop.f32.mrb[0].mxu0
  %2571 = vmatprep.mubr.f32.mxu0 0.0
  %2572 = vmatmul.mubr.f32.gmra.mrb[0].mxu0 %v1303
  %v2573 = vpop.f32.mrb[0].mxu0
  %v2574 = vadd.f32 0.0, %v2573
  %v2575 = vpop.f32.mrb[0].mxu0
  %2576 = vmatprep.mubr.f32.mxu0 0.0
  %2577 = vmatmul.mubr.f32.gmra.mrb[0].mxu0 %v1306
  %v2578 = vpop.f32.mrb[0].mxu0
  %v2579 = vadd.f32 0.0, %v2578
  %v2580 = vpop.f32.mrb[0].mxu0
  %2581 = vmatprep.mubr.f32.mxu0 0.0
  %2582 = vmatmul.mubr.f32.gmra.mrb[0].mxu0 %v1309
  %v2583 = vpop.f32.mrb[0].mxu0
  %v2584 = vadd.f32 0.0, %v2583
  %v2585 = vpop.f32.mrb[0].mxu0
  %2586 = vdwg.mxu0
  %v2587 = vadd.f32 %v956, %v2529
  %v2588 = vadd.f32 %v961, %v2534
  %v2589 = vadd.f32 %v966, %v2539
  %v2590 = vadd.f32 %v971, %v2544
  %v2591 = vxor.u32 %v2587, 2147483648
  %v2592 = vxor.u32 %v2588, 2147483648
  %v2593 = vxor.u32 %v2589, 2147483648
  %v2594 = vxor.u32 %v2590, 2147483648
  %v2595 = vmul.f32 %v2591, 1.442695
  %v2596 = vpow.pop %v2595
  %v2597 = vmul.f32 %v2592, 1.442695
  %v2598 = vpow.pop %v2597
  %v2599 = vmul.f32 %v2593, 1.442695
  %v2600 = vpow.pop %v2599
  %v2601 = vmul.f32 %v2594, 1.442695
  %v2602 = vpow.pop %v2601
  %v2603 = vadd.f32 %v2596, 1.0
  %v2604 = vadd.f32 %v2598, 1.0
  %v2605 = vadd.f32 %v2600, 1.0
  %v2606 = vadd.f32 %v2602, 1.0
  %v2607 = vrcp.pop %v2603
  %v2608 = vmul.f32 1.0, %v2607
  %v2609 = vrcp.pop %v2604
  %v2610 = vmul.f32 1.0, %v2609
  %v2611 = vrcp.pop %v2605
  %v2612 = vmul.f32 1.0, %v2611
  %v2613 = vrcp.pop %v2606
  %v2614 = vmul.f32 1.0, %v2613
  %v2615 = vadd.f32 %v976, %v2549
  %v2616 = vadd.f32 %v981, %v2554
  %v2617 = vadd.f32 %v986, %v2559
  %v2618 = vadd.f32 %v991, %v2564
  %v2619 = vxor.u32 %v2615, 2147483648
  %v2620 = vxor.u32 %v2616, 2147483648
  %v2621 = vxor.u32 %v2617, 2147483648
  %v2622 = vxor.u32 %v2618, 2147483648
  %v2623 = vmul.f32 %v2619, 1.442695
  %v2624 = vpow.pop %v2623
  %v2625 = vmul.f32 %v2620, 1.442695
  %v2626 = vpow.pop %v2625
  %v2627 = vmul.f32 %v2621, 1.442695
  %v2628 = vpow.pop %v2627
  %v2629 = vmul.f32 %v2622, 1.442695
  %v2630 = vpow.pop %v2629
  %v2631 = vadd.f32 %v2624, 1.0
  %v2632 = vadd.f32 %v2626, 1.0
  %v2633 = vadd.f32 %v2628, 1.0
  %v2634 = vadd.f32 %v2630, 1.0
  %v2635 = vrcp.pop %v2631
  %v2636 = vmul.f32 1.0, %v2635
  %v2637 = vrcp.pop %v2632
  %v2638 = vmul.f32 1.0, %v2637
  %v2639 = vrcp.pop %v2633
  %v2640 = vmul.f32 1.0, %v2639
  %v2641 = vrcp.pop %v2634
  %v2642 = vmul.f32 1.0, %v2641
  %v2643 = vadd.f32 %v2569, %v155
  %v2644 = vadd.f32 %v2574, %v160
  %v2645 = vadd.f32 %v2579, %v165
  %v2646 = vadd.f32 %v2584, %v170
  %v2647 = vmul.f32 %v2608, %v2643
  %v2648 = vmul.f32 %v2610, %v2644
  %v2649 = vmul.f32 %v2612, %v2645
  %v2650 = vmul.f32 %v2614, %v2646
  %v2651 = vadd.f32 %v996, %v2647
  %v2652 = vadd.f32 %v1001, %v2648
  %v2653 = vadd.f32 %v1006, %v2649
  %v2654 = vadd.f32 %v1011, %v2650
  %v2655 = vtanh.pop %v2651
  %v2656 = vtanh.pop %v2652
  %v2657 = vtanh.pop %v2653
  %v2658 = vtanh.pop %v2654
  %v2659 = vsub.f32 1.0, %v2636
  %v2660 = vsub.f32 1.0, %v2638
  %v2661 = vsub.f32 1.0, %v2640
  %v2662 = vsub.f32 1.0, %v2642
  %v2663 = vmul.f32 %v2659, %v2655
  %v2664 = vmul.f32 %v2660, %v2656
  %v2665 = vmul.f32 %v2661, %v2657
  %v2666 = vmul.f32 %v2662, %v2658
  %v2667 = vmul.f32 %v2636, %v2441
  %v2668 = vmul.f32 %v2638, %v2442
  %v2669 = vmul.f32 %v2640, %v2443
  %v2670 = vmul.f32 %v2642, %v2444
  %v2671 = vadd.f32 %v2663, %v2667
  %v2672 = vadd.f32 %v2664, %v2668
  %v2673 = vadd.f32 %v2665, %v2669
  %v2674 = vadd.f32 %v2666, %v2670
  %v2675 = vmul.f32 %v2671, %v179
  %v2676 = vmul.f32 %v2672, %v184
  %v2677 = vmul.f32 %v2673, %v189
  %v2678 = vmul.f32 %v2674, %v194
  %v2679 = vsel %vm1528, %v2675, 0.0
  %v2680 = vsel %vm1528, %v2676, 0.0
  %v2681 = vadd.f32 %v2679, %v2680
  %v2682 = vsel %vm1528, %v2677, 0.0
  %v2683 = vadd.f32 %v2681, %v2682
  %v2684 = vsel %vm1528, %v2678, 0.0
  %v2685 = vadd.f32 %v2683, %v2684
  %v2686 = vrot.slane %v2685, 4
  %v2687 = vadd.f32 %v2685, %v2686
  %v2688 = vrot.slane %v2687, 2
  %v2689 = vadd.f32 %v2687, %v2688
  %v2690 = vrot.slane %v2689, 1
  %v2691 = vadd.f32 %v2689, %v2690
  %2692 = vmatprep.subr.mxu0 0.0
  %2693 = vmatpush1.msra.mxu0 %v2671
  %2694 = vmatprep.subr.mxu0 0.0
  %2695 = vmatpush1.msra.mxu0 %v2672
  %2696 = vmatprep.subr.mxu0 0.0
  %2697 = vmatpush1.msra.mxu0 %v2673
  %2698 = vmatprep.subr.mxu0 0.0
  %2699 = vmatpush1.msra.mxu0 %v2674
  %2700 = vmatprep.subr.mxu0 0.0
  %2701 = vmatpush1.msra.mxu0 0.0
  %2702 = vmatprep.subr.mxu0 0.0
  %2703 = vmatpush1.msra.mxu0 0.0
  %2704 = vmatprep.subr.mxu0 0.0
  %2705 = vmatpush1.msra.mxu0 0.0
  %2706 = vmatprep.subr.mxu0 0.0
  %2707 = vmatpush1.msra.mxu0 0.0
  %2708 = vmatprep.subr.mxu0 0.0
  %2709 = vmatpush1.msra.mxu0 0.0
  %2710 = vmatprep.subr.mxu0 0.0
  %2711 = vmatpush1.msra.mxu0 0.0
  %2712 = vmatprep.subr.mxu0 0.0
  %2713 = vmatpush1.msra.mxu0 0.0
  %2714 = vmatprep.subr.mxu0 0.0
  %2715 = vmatpush1.msra.mxu0 0.0
  %2716 = vmatprep.subr.mxu0 0.0
  %2717 = vmatpush1.msra.mxu0 0.0
  %2718 = vmatprep.subr.mxu0 0.0
  %2719 = vmatpush1.msra.mxu0 0.0
  %2720 = vmatprep.subr.mxu0 0.0
  %2721 = vmatpush1.msra.mxu0 0.0
  %2722 = vmatprep.subr.mxu0 0.0
  %2723 = vmatpush1.msra.mxu0 0.0
  %2724 = vmatprep.subr.mxu0 0.0
  %2725 = vmatpush1.msra.mxu0 0.0
  %2726 = vmatprep.subr.mxu0 0.0
  %2727 = vmatpush1.msra.mxu0 0.0
  %2728 = vmatprep.subr.mxu0 0.0
  %2729 = vmatpush1.msra.mxu0 0.0
  %2730 = vmatprep.subr.mxu0 0.0
  %2731 = vmatpush1.msra.mxu0 0.0
  %2732 = vmatprep.subr.mxu0 0.0
  %2733 = vmatpush1.msra.mxu0 0.0
  %2734 = vmatprep.subr.mxu0 0.0
  %2735 = vmatpush1.msra.mxu0 0.0
  %2736 = vmatprep.subr.mxu0 0.0
  %2737 = vmatpush1.msra.mxu0 0.0
  %2738 = vmatprep.subr.mxu0 0.0
  %2739 = vmatpush1.msra.mxu0 0.0
  %2740 = vmatprep.subr.mxu0 0.0
  %2741 = vmatpush1.msra.mxu0 0.0
  %2742 = vmatprep.subr.mxu0 0.0
  %2743 = vmatpush1.msra.mxu0 0.0
  %2744 = vmatprep.subr.mxu0 0.0
  %2745 = vmatpush1.msra.mxu0 0.0
  %2746 = vmatprep.subr.mxu0 0.0
  %2747 = vmatpush1.msra.mxu0 0.0
  %2748 = vmatprep.subr.mxu0 0.0
  %2749 = vmatpush1.msra.mxu0 0.0
  %2750 = vmatprep.subr.mxu0 0.0
  %2751 = vmatpush1.msra.mxu0 0.0
  %2752 = vmatprep.subr.mxu0 0.0
  %2753 = vmatpush1.msra.mxu0 0.0
  %2754 = vmatprep.subr.mxu0 0.0
  %2755 = vmatpush1.msra.mxu0 0.0
  %2756 = vmatprep.mubr.f32.mxu0 0.0
  %2757 = vmatmul.mubr.f32.gmra.mrb[0].mxu0 %v1276
  %v2758 = vpop.f32.mrb[0].mxu0
  %v2759 = vadd.f32 0.0, %v2758
  %v2760 = vpop.f32.mrb[0].mxu0
  %2761 = vmatprep.mubr.f32.mxu0 0.0
  %2762 = vmatmul.mubr.f32.gmra.mrb[0].mxu0 %v1279
  %v2763 = vpop.f32.mrb[0].mxu0
  %v2764 = vadd.f32 0.0, %v2763
  %v2765 = vpop.f32.mrb[0].mxu0
  %2766 = vmatprep.mubr.f32.mxu0 0.0
  %2767 = vmatmul.mubr.f32.gmra.mrb[0].mxu0 %v1282
  %v2768 = vpop.f32.mrb[0].mxu0
  %v2769 = vadd.f32 0.0, %v2768
  %v2770 = vpop.f32.mrb[0].mxu0
  %2771 = vmatprep.mubr.f32.mxu0 0.0
  %2772 = vmatmul.mubr.f32.gmra.mrb[0].mxu0 %v1285
  %v2773 = vpop.f32.mrb[0].mxu0
  %v2774 = vadd.f32 0.0, %v2773
  %v2775 = vpop.f32.mrb[0].mxu0
  %2776 = vmatprep.mubr.f32.mxu0 0.0
  %2777 = vmatmul.mubr.f32.gmra.mrb[0].mxu0 %v1288
  %v2778 = vpop.f32.mrb[0].mxu0
  %v2779 = vadd.f32 0.0, %v2778
  %v2780 = vpop.f32.mrb[0].mxu0
  %2781 = vmatprep.mubr.f32.mxu0 0.0
  %2782 = vmatmul.mubr.f32.gmra.mrb[0].mxu0 %v1291
  %v2783 = vpop.f32.mrb[0].mxu0
  %v2784 = vadd.f32 0.0, %v2783
  %v2785 = vpop.f32.mrb[0].mxu0
  %2786 = vmatprep.mubr.f32.mxu0 0.0
  %2787 = vmatmul.mubr.f32.gmra.mrb[0].mxu0 %v1294
  %v2788 = vpop.f32.mrb[0].mxu0
  %v2789 = vadd.f32 0.0, %v2788
  %v2790 = vpop.f32.mrb[0].mxu0
  %2791 = vmatprep.mubr.f32.mxu0 0.0
  %2792 = vmatmul.mubr.f32.gmra.mrb[0].mxu0 %v1297
  %v2793 = vpop.f32.mrb[0].mxu0
  %v2794 = vadd.f32 0.0, %v2793
  %v2795 = vpop.f32.mrb[0].mxu0
  %2796 = vmatprep.mubr.f32.mxu0 0.0
  %2797 = vmatmul.mubr.f32.gmra.mrb[0].mxu0 %v1300
  %v2798 = vpop.f32.mrb[0].mxu0
  %v2799 = vadd.f32 0.0, %v2798
  %v2800 = vpop.f32.mrb[0].mxu0
  %2801 = vmatprep.mubr.f32.mxu0 0.0
  %2802 = vmatmul.mubr.f32.gmra.mrb[0].mxu0 %v1303
  %v2803 = vpop.f32.mrb[0].mxu0
  %v2804 = vadd.f32 0.0, %v2803
  %v2805 = vpop.f32.mrb[0].mxu0
  %2806 = vmatprep.mubr.f32.mxu0 0.0
  %2807 = vmatmul.mubr.f32.gmra.mrb[0].mxu0 %v1306
  %v2808 = vpop.f32.mrb[0].mxu0
  %v2809 = vadd.f32 0.0, %v2808
  %v2810 = vpop.f32.mrb[0].mxu0
  %2811 = vmatprep.mubr.f32.mxu0 0.0
  %2812 = vmatmul.mubr.f32.gmra.mrb[0].mxu0 %v1309
  %v2813 = vpop.f32.mrb[0].mxu0
  %v2814 = vadd.f32 0.0, %v2813
  %v2815 = vpop.f32.mrb[0].mxu0
  %2816 = vdwg.mxu0
  %v2817 = vadd.f32 %v1086, %v2759
  %v2818 = vadd.f32 %v1091, %v2764
  %v2819 = vadd.f32 %v1096, %v2769
  %v2820 = vadd.f32 %v1101, %v2774
  %v2821 = vxor.u32 %v2817, 2147483648
  %v2822 = vxor.u32 %v2818, 2147483648
  %v2823 = vxor.u32 %v2819, 2147483648
  %v2824 = vxor.u32 %v2820, 2147483648
  %v2825 = vmul.f32 %v2821, 1.442695
  %v2826 = vpow.pop %v2825
  %v2827 = vmul.f32 %v2822, 1.442695
  %v2828 = vpow.pop %v2827
  %v2829 = vmul.f32 %v2823, 1.442695
  %v2830 = vpow.pop %v2829
  %v2831 = vmul.f32 %v2824, 1.442695
  %v2832 = vpow.pop %v2831
  %v2833 = vadd.f32 %v2826, 1.0
  %v2834 = vadd.f32 %v2828, 1.0
  %v2835 = vadd.f32 %v2830, 1.0
  %v2836 = vadd.f32 %v2832, 1.0
  %v2837 = vrcp.pop %v2833
  %v2838 = vmul.f32 1.0, %v2837
  %v2839 = vrcp.pop %v2834
  %v2840 = vmul.f32 1.0, %v2839
  %v2841 = vrcp.pop %v2835
  %v2842 = vmul.f32 1.0, %v2841
  %v2843 = vrcp.pop %v2836
  %v2844 = vmul.f32 1.0, %v2843
  %v2845 = vadd.f32 %v1106, %v2779
  %v2846 = vadd.f32 %v1111, %v2784
  %v2847 = vadd.f32 %v1116, %v2789
  %v2848 = vadd.f32 %v1121, %v2794
  %v2849 = vxor.u32 %v2845, 2147483648
  %v2850 = vxor.u32 %v2846, 2147483648
  %v2851 = vxor.u32 %v2847, 2147483648
  %v2852 = vxor.u32 %v2848, 2147483648
  %v2853 = vmul.f32 %v2849, 1.442695
  %v2854 = vpow.pop %v2853
  %v2855 = vmul.f32 %v2850, 1.442695
  %v2856 = vpow.pop %v2855
  %v2857 = vmul.f32 %v2851, 1.442695
  %v2858 = vpow.pop %v2857
  %v2859 = vmul.f32 %v2852, 1.442695
  %v2860 = vpow.pop %v2859
  %v2861 = vadd.f32 %v2854, 1.0
  %v2862 = vadd.f32 %v2856, 1.0
  %v2863 = vadd.f32 %v2858, 1.0
  %v2864 = vadd.f32 %v2860, 1.0
  %v2865 = vrcp.pop %v2861
  %v2866 = vmul.f32 1.0, %v2865
  %v2867 = vrcp.pop %v2862
  %v2868 = vmul.f32 1.0, %v2867
  %v2869 = vrcp.pop %v2863
  %v2870 = vmul.f32 1.0, %v2869
  %v2871 = vrcp.pop %v2864
  %v2872 = vmul.f32 1.0, %v2871
  %v2873 = vadd.f32 %v2799, %v155
  %v2874 = vadd.f32 %v2804, %v160
  %v2875 = vadd.f32 %v2809, %v165
  %v2876 = vadd.f32 %v2814, %v170
  %v2877 = vmul.f32 %v2838, %v2873
  %v2878 = vmul.f32 %v2840, %v2874
  %v2879 = vmul.f32 %v2842, %v2875
  %v2880 = vmul.f32 %v2844, %v2876
  %v2881 = vadd.f32 %v1126, %v2877
  %v2882 = vadd.f32 %v1131, %v2878
  %v2883 = vadd.f32 %v1136, %v2879
  %v2884 = vadd.f32 %v1141, %v2880
  %v2885 = vtanh.pop %v2881
  %v2886 = vtanh.pop %v2882
  %v2887 = vtanh.pop %v2883
  %v2888 = vtanh.pop %v2884
  %v2889 = vsub.f32 1.0, %v2866
  %v2890 = vsub.f32 1.0, %v2868
  %v2891 = vsub.f32 1.0, %v2870
  %v2892 = vsub.f32 1.0, %v2872
  %v2893 = vmul.f32 %v2889, %v2885
  %v2894 = vmul.f32 %v2890, %v2886
  %v2895 = vmul.f32 %v2891, %v2887
  %v2896 = vmul.f32 %v2892, %v2888
  %v2897 = vmul.f32 %v2866, %v2671
  %v2898 = vmul.f32 %v2868, %v2672
  %v2899 = vmul.f32 %v2870, %v2673
  %v2900 = vmul.f32 %v2872, %v2674
  %v2901 = vadd.f32 %v2893, %v2897
  %v2902 = vadd.f32 %v2894, %v2898
  %v2903 = vadd.f32 %v2895, %v2899
  %v2904 = vadd.f32 %v2896, %v2900
  %v2905 = vmul.f32 %v2901, %v179
  %v2906 = vmul.f32 %v2902, %v184
  %v2907 = vmul.f32 %v2903, %v189
  %v2908 = vmul.f32 %v2904, %v194
  %v2909 = vsel %vm1528, %v2905, 0.0
  %v2910 = vsel %vm1528, %v2906, 0.0
  %v2911 = vadd.f32 %v2909, %v2910
  %v2912 = vsel %vm1528, %v2907, 0.0
  %v2913 = vadd.f32 %v2911, %v2912
  %v2914 = vsel %vm1528, %v2908, 0.0
  %v2915 = vadd.f32 %v2913, %v2914
  %v2916 = vrot.slane %v2915, 4
  %v2917 = vadd.f32 %v2915, %v2916
  %v2918 = vrot.slane %v2917, 2
  %v2919 = vadd.f32 %v2917, %v2918
  %v2920 = vrot.slane %v2919, 1
  %v2921 = vadd.f32 %v2919, %v2920
  %2922 = vmatprep.subr.mxu0 0.0
  %2923 = vmatpush1.msra.mxu0 %v2901
  %2924 = vmatprep.subr.mxu0 0.0
  %2925 = vmatpush1.msra.mxu0 %v2902
  %2926 = vmatprep.subr.mxu0 0.0
  %2927 = vmatpush1.msra.mxu0 %v2903
  %2928 = vmatprep.subr.mxu0 0.0
  %2929 = vmatpush1.msra.mxu0 %v2904
  %2930 = vmatprep.subr.mxu0 0.0
  %2931 = vmatpush1.msra.mxu0 0.0
  %2932 = vmatprep.subr.mxu0 0.0
  %2933 = vmatpush1.msra.mxu0 0.0
  %2934 = vmatprep.subr.mxu0 0.0
  %2935 = vmatpush1.msra.mxu0 0.0
  %2936 = vmatprep.subr.mxu0 0.0
  %2937 = vmatpush1.msra.mxu0 0.0
  %2938 = vmatprep.subr.mxu0 0.0
  %2939 = vmatpush1.msra.mxu0 0.0
  %2940 = vmatprep.subr.mxu0 0.0
  %2941 = vmatpush1.msra.mxu0 0.0
  %2942 = vmatprep.subr.mxu0 0.0
  %2943 = vmatpush1.msra.mxu0 0.0
  %2944 = vmatprep.subr.mxu0 0.0
  %2945 = vmatpush1.msra.mxu0 0.0
  %2946 = vmatprep.subr.mxu0 0.0
  %2947 = vmatpush1.msra.mxu0 0.0
  %2948 = vmatprep.subr.mxu0 0.0
  %2949 = vmatpush1.msra.mxu0 0.0
  %2950 = vmatprep.subr.mxu0 0.0
  %2951 = vmatpush1.msra.mxu0 0.0
  %2952 = vmatprep.subr.mxu0 0.0
  %2953 = vmatpush1.msra.mxu0 0.0
  %2954 = vmatprep.subr.mxu0 0.0
  %2955 = vmatpush1.msra.mxu0 0.0
  %2956 = vmatprep.subr.mxu0 0.0
  %2957 = vmatpush1.msra.mxu0 0.0
  %2958 = vmatprep.subr.mxu0 0.0
  %2959 = vmatpush1.msra.mxu0 0.0
  %2960 = vmatprep.subr.mxu0 0.0
  %2961 = vmatpush1.msra.mxu0 0.0
  %2962 = vmatprep.subr.mxu0 0.0
  %2963 = vmatpush1.msra.mxu0 0.0
  %2964 = vmatprep.subr.mxu0 0.0
  %2965 = vmatpush1.msra.mxu0 0.0
  %2966 = vmatprep.subr.mxu0 0.0
  %2967 = vmatpush1.msra.mxu0 0.0
  %2968 = vmatprep.subr.mxu0 0.0
  %2969 = vmatpush1.msra.mxu0 0.0
  %2970 = vmatprep.subr.mxu0 0.0
  %2971 = vmatpush1.msra.mxu0 0.0
  %2972 = vmatprep.subr.mxu0 0.0
  %2973 = vmatpush1.msra.mxu0 0.0
  %2974 = vmatprep.subr.mxu0 0.0
  %2975 = vmatpush1.msra.mxu0 0.0
  %2976 = vmatprep.subr.mxu0 0.0
  %2977 = vmatpush1.msra.mxu0 0.0
  %2978 = vmatprep.subr.mxu0 0.0
  %2979 = vmatpush1.msra.mxu0 0.0
  %2980 = vmatprep.subr.mxu0 0.0
  %2981 = vmatpush1.msra.mxu0 0.0
  %2982 = vmatprep.subr.mxu0 0.0
  %2983 = vmatpush1.msra.mxu0 0.0
  %2984 = vmatprep.subr.mxu0 0.0
  %2985 = vmatpush1.msra.mxu0 0.0
  %2986 = vmatprep.mubr.f32.mxu0 0.0
  %2987 = vmatmul.mubr.f32.gmra.mrb[0].mxu0 %v1276
  %v2988 = vpop.f32.mrb[0].mxu0
  %v2989 = vadd.f32 0.0, %v2988
  %v2990 = vpop.f32.mrb[0].mxu0
  %2991 = vmatprep.mubr.f32.mxu0 0.0
  %2992 = vmatmul.mubr.f32.gmra.mrb[0].mxu0 %v1279
  %v2993 = vpop.f32.mrb[0].mxu0
  %v2994 = vadd.f32 0.0, %v2993
  %v2995 = vpop.f32.mrb[0].mxu0
  %2996 = vmatprep.mubr.f32.mxu0 0.0
  %2997 = vmatmul.mubr.f32.gmra.mrb[0].mxu0 %v1282
  %v2998 = vpop.f32.mrb[0].mxu0
  %v2999 = vadd.f32 0.0, %v2998
  %v3000 = vpop.f32.mrb[0].mxu0
  %3001 = vmatprep.mubr.f32.mxu0 0.0
  %3002 = vmatmul.mubr.f32.gmra.mrb[0].mxu0 %v1285
  %v3003 = vpop.f32.mrb[0].mxu0
  %v3004 = vadd.f32 0.0, %v3003
  %v3005 = vpop.f32.mrb[0].mxu0
  %3006 = vmatprep.mubr.f32.mxu0 0.0
  %3007 = vmatmul.mubr.f32.gmra.mrb[0].mxu0 %v1288
  %v3008 = vpop.f32.mrb[0].mxu0
  %v3009 = vadd.f32 0.0, %v3008
  %v3010 = vpop.f32.mrb[0].mxu0
  %3011 = vmatprep.mubr.f32.mxu0 0.0
  %3012 = vmatmul.mubr.f32.gmra.mrb[0].mxu0 %v1291
  %v3013 = vpop.f32.mrb[0].mxu0
  %v3014 = vadd.f32 0.0, %v3013
  %v3015 = vpop.f32.mrb[0].mxu0
  %3016 = vmatprep.mubr.f32.mxu0 0.0
  %3017 = vmatmul.mubr.f32.gmra.mrb[0].mxu0 %v1294
  %v3018 = vpop.f32.mrb[0].mxu0
  %v3019 = vadd.f32 0.0, %v3018
  %v3020 = vpop.f32.mrb[0].mxu0
  %3021 = vmatprep.mubr.f32.mxu0 0.0
  %3022 = vmatmul.mubr.f32.gmra.mrb[0].mxu0 %v1297
  %v3023 = vpop.f32.mrb[0].mxu0
  %v3024 = vadd.f32 0.0, %v3023
  %v3025 = vpop.f32.mrb[0].mxu0
  %3026 = vmatprep.mubr.f32.mxu0 0.0
  %3027 = vmatmul.mubr.f32.gmra.mrb[0].mxu0 %v1300
  %v3028 = vpop.f32.mrb[0].mxu0
  %v3029 = vadd.f32 0.0, %v3028
  %v3030 = vpop.f32.mrb[0].mxu0
  %3031 = vmatprep.mubr.f32.mxu0 0.0
  %3032 = vmatmul.mubr.f32.gmra.mrb[0].mxu0 %v1303
  %v3033 = vpop.f32.mrb[0].mxu0
  %v3034 = vadd.f32 0.0, %v3033
  %v3035 = vpop.f32.mrb[0].mxu0
  %3036 = vmatprep.mubr.f32.mxu0 0.0
  %3037 = vmatmul.mubr.f32.gmra.mrb[0].mxu0 %v1306
  %v3038 = vpop.f32.mrb[0].mxu0
  %v3039 = vadd.f32 0.0, %v3038
  %v3040 = vpop.f32.mrb[0].mxu0
  %3041 = vmatprep.mubr.f32.mxu0 0.0
  %3042 = vmatmul.mubr.f32.gmra.mrb[0].mxu0 %v1309
  %v3043 = vpop.f32.mrb[0].mxu0
  %v3044 = vadd.f32 0.0, %v3043
  %v3045 = vpop.f32.mrb[0].mxu0
  %3046 = vdwg.mxu0
  %v3047 = vadd.f32 %v1216, %v2989
  %v3048 = vadd.f32 %v1221, %v2994
  %v3049 = vadd.f32 %v1226, %v2999
  %v3050 = vadd.f32 %v1231, %v3004
  %v3051 = vxor.u32 %v3047, 2147483648
  %v3052 = vxor.u32 %v3048, 2147483648
  %v3053 = vxor.u32 %v3049, 2147483648
  %v3054 = vxor.u32 %v3050, 2147483648
  %v3055 = vmul.f32 %v3051, 1.442695
  %v3056 = vpow.pop %v3055
  %v3057 = vmul.f32 %v3052, 1.442695
  %v3058 = vpow.pop %v3057
  %v3059 = vmul.f32 %v3053, 1.442695
  %v3060 = vpow.pop %v3059
  %v3061 = vmul.f32 %v3054, 1.442695
  %v3062 = vpow.pop %v3061
  %v3063 = vadd.f32 %v3056, 1.0
  %v3064 = vadd.f32 %v3058, 1.0
  %v3065 = vadd.f32 %v3060, 1.0
  %v3066 = vadd.f32 %v3062, 1.0
  %v3067 = vrcp.pop %v3063
  %v3068 = vmul.f32 1.0, %v3067
  %v3069 = vrcp.pop %v3064
  %v3070 = vmul.f32 1.0, %v3069
  %v3071 = vrcp.pop %v3065
  %v3072 = vmul.f32 1.0, %v3071
  %v3073 = vrcp.pop %v3066
  %v3074 = vmul.f32 1.0, %v3073
  %v3075 = vadd.f32 %v1236, %v3009
  %v3076 = vadd.f32 %v1241, %v3014
  %v3077 = vadd.f32 %v1246, %v3019
  %v3078 = vadd.f32 %v1251, %v3024
  %v3079 = vxor.u32 %v3075, 2147483648
  %v3080 = vxor.u32 %v3076, 2147483648
  %v3081 = vxor.u32 %v3077, 2147483648
  %v3082 = vxor.u32 %v3078, 2147483648
  %v3083 = vmul.f32 %v3079, 1.442695
  %v3084 = vpow.pop %v3083
  %v3085 = vmul.f32 %v3080, 1.442695
  %v3086 = vpow.pop %v3085
  %v3087 = vmul.f32 %v3081, 1.442695
  %v3088 = vpow.pop %v3087
  %v3089 = vmul.f32 %v3082, 1.442695
  %v3090 = vpow.pop %v3089
  %v3091 = vadd.f32 %v3084, 1.0
  %v3092 = vadd.f32 %v3086, 1.0
  %v3093 = vadd.f32 %v3088, 1.0
  %v3094 = vadd.f32 %v3090, 1.0
  %v3095 = vrcp.pop %v3091
  %v3096 = vmul.f32 1.0, %v3095
  %v3097 = vrcp.pop %v3092
  %v3098 = vmul.f32 1.0, %v3097
  %v3099 = vrcp.pop %v3093
  %v3100 = vmul.f32 1.0, %v3099
  %v3101 = vrcp.pop %v3094
  %v3102 = vmul.f32 1.0, %v3101
  %v3103 = vadd.f32 %v3029, %v155
  %v3104 = vadd.f32 %v3034, %v160
  %v3105 = vadd.f32 %v3039, %v165
  %v3106 = vadd.f32 %v3044, %v170
  %v3107 = vmul.f32 %v3068, %v3103
  %v3108 = vmul.f32 %v3070, %v3104
  %v3109 = vmul.f32 %v3072, %v3105
  %v3110 = vmul.f32 %v3074, %v3106
  %v3111 = vadd.f32 %v1256, %v3107
  %v3112 = vadd.f32 %v1261, %v3108
  %v3113 = vadd.f32 %v1266, %v3109
  %v3114 = vadd.f32 %v1271, %v3110
  %v3115 = vtanh.pop %v3111
  %v3116 = vtanh.pop %v3112
  %v3117 = vtanh.pop %v3113
  %v3118 = vtanh.pop %v3114
  %v3119 = vsub.f32 1.0, %v3096
  %v3120 = vsub.f32 1.0, %v3098
  %v3121 = vsub.f32 1.0, %v3100
  %v3122 = vsub.f32 1.0, %v3102
  %v3123 = vmul.f32 %v3119, %v3115
  %v3124 = vmul.f32 %v3120, %v3116
  %v3125 = vmul.f32 %v3121, %v3117
  %v3126 = vmul.f32 %v3122, %v3118
  %v3127 = vmul.f32 %v3096, %v2901
  %v3128 = vmul.f32 %v3098, %v2902
  %v3129 = vmul.f32 %v3100, %v2903
  %v3130 = vmul.f32 %v3102, %v2904
  %v3131 = vadd.f32 %v3123, %v3127
  %v3132 = vadd.f32 %v3124, %v3128
  %v3133 = vadd.f32 %v3125, %v3129
  %v3134 = vadd.f32 %v3126, %v3130
  %v3135 = vmul.f32 %v3131, %v179
  %v3136 = vmul.f32 %v3132, %v184
  %v3137 = vmul.f32 %v3133, %v189
  %v3138 = vmul.f32 %v3134, %v194
  %v3139 = vsel %vm1528, %v3135, 0.0
  %v3140 = vsel %vm1528, %v3136, 0.0
  %v3141 = vadd.f32 %v3139, %v3140
  %v3142 = vsel %vm1528, %v3137, 0.0
  %v3143 = vadd.f32 %v3141, %v3142
  %v3144 = vsel %vm1528, %v3138, 0.0
  %v3145 = vadd.f32 %v3143, %v3144
  %v3146 = vrot.slane %v3145, 4
  %v3147 = vadd.f32 %v3145, %v3146
  %v3148 = vrot.slane %v3147, 2
  %v3149 = vadd.f32 %v3147, %v3148
  %v3150 = vrot.slane %v3149, 1
  %v3151 = vadd.f32 %v3149, %v3150
  %vm3152 = vcmask 1040384
  %v3153 = vsel %vm3152, %v1541, %v1771
  %vm3154 = vcmask 1041408
  %v3155 = vsel %vm3154, %v3153, %v2001
  %vm3156 = vcmask 1042432
  %v3157 = vsel %vm3156, %v3155, %v2231
  %v3158 = vsel %vm235, %v3157, %v2461
  %vm3159 = vcmask 1044480
  %v3160 = vsel %vm3159, %v3158, %v2691
  %vm3161 = vcmask 1045504
  %v3162 = vsel %vm3161, %v3160, %v2921
  %vm3163 = vcmask 1046528
  %v3164 = vsel %vm3163, %v3162, %v3151
  %v3165 = vstv %s196
  %v3166 = vadd.f32 %v3164, %v3165
  %3167 = vst.msk [vmem:[%s15] sm:$0xff] %vm1528, %v3166
  %v3168 = vld [vmem:[%s1] sm:$0xff]
  %vm3169 = vcmp.gt.f32.partialorder %v3168, 0.0
  %v3170 = vsel %vm3169, %v3166, -1e+30
  %v3171 = vsel %vm1528, %v3170, -inf
  %v3172 = vrot.slane %v3171, 4
  %v3173 = vmax.f32 %v3171, %v3172
  %v3174 = vrot.slane %v3173, 2
  %v3175 = vmax.f32 %v3173, %v3174
  %v3176 = vrot.slane %v3175, 1
  %v3177 = vmax.f32 %v3175, %v3176
  %v3178 = vsub.f32 %v3170, %v3177
  %v3179 = vmul.f32 %v3178, 1.442695
  %v3180 = vpow.pop %v3179
  %v3181 = vsel %vm1528, %v3180, 0.0
  %v3182 = vrot.slane %v3181, 4
  %v3183 = vadd.f32 %v3181, %v3182
  %v3184 = vrot.slane %v3183, 2
  %v3185 = vadd.f32 %v3183, %v3184
  %v3186 = vrot.slane %v3185, 1
  %v3187 = vadd.f32 %v3185, %v3186
  %v3188 = vrcp.pop %v3187
  %v3189 = vmul.f32 %v3180, %v3188
  %3190 = vst.msk [vmem:[%s16] sm:$0xff] %vm1528, %v3189
  %v3191 = vlaneseq
  %v3192 = vshrl.u32 %v3191, 7
  %v3193 = vsub.s32 0, %v3192
  %v3194 = vrot.slane %v3189, %v3193
  %v3195 = vmul.f32 %v3194, %v1520
  %v3196 = vmul.f32 %v3194, %v1521
  %v3197 = vmul.f32 %v3194, %v1522
  %v3198 = vmul.f32 %v3194, %v1523
  %v3199 = vadd.f32 %v3195, 0.0
  %v3200 = vadd.f32 %v3196, 0.0
  %v3201 = vadd.f32 %v3197, 0.0
  %v3202 = vadd.f32 %v3198, 0.0
  %v3203 = vlaneseq
  %v3204 = vshrl.u32 %v3203, 7
  %v3205 = vsub.s32 1, %v3204
  %v3206 = vrot.slane %v3189, %v3205
  %v3207 = vmul.f32 %v3206, %v1751
  %v3208 = vmul.f32 %v3206, %v1752
  %v3209 = vmul.f32 %v3206, %v1753
  %v3210 = vmul.f32 %v3206, %v1754
  %v3211 = vadd.f32 %v3199, %v3207
  %v3212 = vadd.f32 %v3200, %v3208
  %v3213 = vadd.f32 %v3201, %v3209
  %v3214 = vadd.f32 %v3202, %v3210
  %v3215 = vlaneseq
  %v3216 = vshrl.u32 %v3215, 7
  %v3217 = vsub.s32 2, %v3216
  %v3218 = vrot.slane %v3189, %v3217
  %v3219 = vmul.f32 %v3218, %v1981
  %v3220 = vmul.f32 %v3218, %v1982
  %v3221 = vmul.f32 %v3218, %v1983
  %v3222 = vmul.f32 %v3218, %v1984
  %v3223 = vadd.f32 %v3211, %v3219
  %v3224 = vadd.f32 %v3212, %v3220
  %v3225 = vadd.f32 %v3213, %v3221
  %v3226 = vadd.f32 %v3214, %v3222
  %v3227 = vlaneseq
  %v3228 = vshrl.u32 %v3227, 7
  %v3229 = vsub.s32 3, %v3228
  %v3230 = vrot.slane %v3189, %v3229
  %v3231 = vmul.f32 %v3230, %v2211
  %v3232 = vmul.f32 %v3230, %v2212
  %v3233 = vmul.f32 %v3230, %v2213
  %v3234 = vmul.f32 %v3230, %v2214
  %v3235 = vadd.f32 %v3223, %v3231
  %v3236 = vadd.f32 %v3224, %v3232
  %v3237 = vadd.f32 %v3225, %v3233
  %v3238 = vadd.f32 %v3226, %v3234
  %v3239 = vlaneseq
  %v3240 = vshrl.u32 %v3239, 7
  %v3241 = vsub.s32 4, %v3240
  %v3242 = vrot.slane %v3189, %v3241
  %v3243 = vmul.f32 %v3242, %v2441
  %v3244 = vmul.f32 %v3242, %v2442
  %v3245 = vmul.f32 %v3242, %v2443
  %v3246 = vmul.f32 %v3242, %v2444
  %v3247 = vadd.f32 %v3235, %v3243
  %v3248 = vadd.f32 %v3236, %v3244
  %v3249 = vadd.f32 %v3237, %v3245
  %v3250 = vadd.f32 %v3238, %v3246
  %v3251 = vlaneseq
  %v3252 = vshrl.u32 %v3251, 7
  %v3253 = vsub.s32 5, %v3252
  %v3254 = vrot.slane %v3189, %v3253
  %v3255 = vmul.f32 %v3254, %v2671
  %v3256 = vmul.f32 %v3254, %v2672
  %v3257 = vmul.f32 %v3254, %v2673
  %v3258 = vmul.f32 %v3254, %v2674
  %v3259 = vadd.f32 %v3247, %v3255
  %v3260 = vadd.f32 %v3248, %v3256
  %v3261 = vadd.f32 %v3249, %v3257
  %v3262 = vadd.f32 %v3250, %v3258
  %v3263 = vlaneseq
  %v3264 = vshrl.u32 %v3263, 7
  %v3265 = vsub.s32 6, %v3264
  %v3266 = vrot.slane %v3189, %v3265
  %v3267 = vmul.f32 %v3266, %v2901
  %v3268 = vmul.f32 %v3266, %v2902
  %v3269 = vmul.f32 %v3266, %v2903
  %v3270 = vmul.f32 %v3266, %v2904
  %v3271 = vadd.f32 %v3259, %v3267
  %v3272 = vadd.f32 %v3260, %v3268
  %v3273 = vadd.f32 %v3261, %v3269
  %v3274 = vadd.f32 %v3262, %v3270
  %v3275 = vlaneseq
  %v3276 = vshrl.u32 %v3275, 7
  %v3277 = vsub.s32 7, %v3276
  %v3278 = vrot.slane %v3189, %v3277
  %v3279 = vmul.f32 %v3278, %v3131
  %v3280 = vmul.f32 %v3278, %v3132
  %v3281 = vmul.f32 %v3278, %v3133
  %v3282 = vmul.f32 %v3278, %v3134
  %v3283 = vadd.f32 %v3271, %v3279
  %v3284 = vadd.f32 %v3272, %v3280
  %v3285 = vadd.f32 %v3273, %v3281
  %v3286 = vadd.f32 %v3274, %v3282
  %v3287 = vld [vmem:[%s8] sm:$0xff]
  %v3288 = vld [vmem:[%s8 + $0x8] sm:$0xff]
  %v3289 = vld [vmem:[%s8 + $0x10] sm:$0xff]
  %v3290 = vld [vmem:[%s8 + $0x18] sm:$0xff]
  %v3291 = vld [vmem:[%s8 + $0x20] sm:$0xff]
  %v3292 = vld [vmem:[%s8 + $0x28] sm:$0xff]
  %v3293 = vld [vmem:[%s8 + $0x30] sm:$0xff]
  %v3294 = vld [vmem:[%s8 + $0x38] sm:$0xff]
  %v3295 = vld [vmem:[%s8 + $0x40] sm:$0xff]
  %v3296 = vld [vmem:[%s8 + $0x48] sm:$0xff]
  %v3297 = vld [vmem:[%s8 + $0x50] sm:$0xff]
  %v3298 = vld [vmem:[%s8 + $0x58] sm:$0xff]
  %3300 = vset.pattern.permute.xlu0 0
  %3301 = vperm.xlu0 %3300, %v3287
  %v3302 = vpop.permute.xlu0 %3301
  %3305 = vset.pattern.permute.xlu0 0
  %3306 = vperm.xlu0 %3305, %v3288
  %v3307 = vpop.permute.xlu0 %3306
  %3310 = vset.pattern.permute.xlu0 0
  %3311 = vperm.xlu0 %3310, %v3289
  %v3312 = vpop.permute.xlu0 %3311
  %3315 = vset.pattern.permute.xlu0 0
  %3316 = vperm.xlu0 %3315, %v3290
  %v3317 = vpop.permute.xlu0 %3316
  %3320 = vset.pattern.permute.xlu0 0
  %3321 = vperm.xlu0 %3320, %v3291
  %v3322 = vpop.permute.xlu0 %3321
  %3325 = vset.pattern.permute.xlu0 0
  %3326 = vperm.xlu0 %3325, %v3292
  %v3327 = vpop.permute.xlu0 %3326
  %3330 = vset.pattern.permute.xlu0 0
  %3331 = vperm.xlu0 %3330, %v3293
  %v3332 = vpop.permute.xlu0 %3331
  %3335 = vset.pattern.permute.xlu0 0
  %3336 = vperm.xlu0 %3335, %v3294
  %v3337 = vpop.permute.xlu0 %3336
  %3340 = vset.pattern.permute.xlu0 0
  %3341 = vperm.xlu0 %3340, %v3295
  %v3342 = vpop.permute.xlu0 %3341
  %3345 = vset.pattern.permute.xlu0 0
  %3346 = vperm.xlu0 %3345, %v3296
  %v3347 = vpop.permute.xlu0 %3346
  %3350 = vset.pattern.permute.xlu0 0
  %3351 = vperm.xlu0 %3350, %v3297
  %v3352 = vpop.permute.xlu0 %3351
  %3355 = vset.pattern.permute.xlu0 0
  %3356 = vperm.xlu0 %3355, %v3298
  %v3357 = vpop.permute.xlu0 %3356
  %v3359 = vld [vmem:[%s9] sm:$0xff]
  %v3360 = vld [vmem:[%s9 + $0x8] sm:$0xff]
  %v3361 = vld [vmem:[%s9 + $0x10] sm:$0xff]
  %v3362 = vld [vmem:[%s9 + $0x18] sm:$0xff]
  %v3363 = vld [vmem:[%s9 + $0x20] sm:$0xff]
  %v3364 = vld [vmem:[%s9 + $0x28] sm:$0xff]
  %v3365 = vld [vmem:[%s9 + $0x30] sm:$0xff]
  %v3366 = vld [vmem:[%s9 + $0x38] sm:$0xff]
  %v3367 = vld [vmem:[%s9 + $0x40] sm:$0xff]
  %v3368 = vld [vmem:[%s9 + $0x48] sm:$0xff]
  %v3369 = vld [vmem:[%s9 + $0x50] sm:$0xff]
  %v3370 = vld [vmem:[%s9 + $0x58] sm:$0xff]
  %v3371 = vld [vmem:[%s10] sm:$0xff]
  %v3372 = vld [vmem:[%s10 + $0x8] sm:$0xff]
  %v3373 = vld [vmem:[%s10 + $0x10] sm:$0xff]
  %v3374 = vld [vmem:[%s10 + $0x18] sm:$0xff]
  %v3375 = vld [vmem:[%s10 + $0x20] sm:$0xff]
  %v3376 = vld [vmem:[%s10 + $0x28] sm:$0xff]
  %v3377 = vld [vmem:[%s10 + $0x30] sm:$0xff]
  %v3378 = vld [vmem:[%s10 + $0x38] sm:$0xff]
  %v3379 = vld [vmem:[%s10 + $0x40] sm:$0xff]
  %v3380 = vld [vmem:[%s10 + $0x48] sm:$0xff]
  %v3381 = vld [vmem:[%s10 + $0x50] sm:$0xff]
  %v3382 = vld [vmem:[%s10 + $0x58] sm:$0xff]
  %3384 = vset.pattern.permute.xlu0 0
  %3385 = vperm.xlu0 %3384, %v3371
  %v3386 = vpop.permute.xlu0 %3385
  %3389 = vset.pattern.permute.xlu0 0
  %3390 = vperm.xlu0 %3389, %v3372
  %v3391 = vpop.permute.xlu0 %3390
  %3394 = vset.pattern.permute.xlu0 0
  %3395 = vperm.xlu0 %3394, %v3373
  %v3396 = vpop.permute.xlu0 %3395
  %3399 = vset.pattern.permute.xlu0 0
  %3400 = vperm.xlu0 %3399, %v3374
  %v3401 = vpop.permute.xlu0 %3400
  %3404 = vset.pattern.permute.xlu0 0
  %3405 = vperm.xlu0 %3404, %v3375
  %v3406 = vpop.permute.xlu0 %3405
  %3409 = vset.pattern.permute.xlu0 0
  %3410 = vperm.xlu0 %3409, %v3376
  %v3411 = vpop.permute.xlu0 %3410
  %3414 = vset.pattern.permute.xlu0 0
  %3415 = vperm.xlu0 %3414, %v3377
  %v3416 = vpop.permute.xlu0 %3415
  %3419 = vset.pattern.permute.xlu0 0
  %3420 = vperm.xlu0 %3419, %v3378
  %v3421 = vpop.permute.xlu0 %3420
  %3424 = vset.pattern.permute.xlu0 0
  %3425 = vperm.xlu0 %3424, %v3379
  %v3426 = vpop.permute.xlu0 %3425
  %3429 = vset.pattern.permute.xlu0 0
  %3430 = vperm.xlu0 %3429, %v3380
  %v3431 = vpop.permute.xlu0 %3430
  %3434 = vset.pattern.permute.xlu0 0
  %3435 = vperm.xlu0 %3434, %v3381
  %v3436 = vpop.permute.xlu0 %3435
  %3439 = vset.pattern.permute.xlu0 0
  %3440 = vperm.xlu0 %3439, %v3382
  %v3441 = vpop.permute.xlu0 %3440
  %v3443 = vld [vmem:[%s11] sm:$0xff]
  %v3444 = vld [vmem:[%s11 + $0x8] sm:$0xff]
  %v3445 = vld [vmem:[%s11 + $0x10] sm:$0xff]
  %v3446 = vld [vmem:[%s11 + $0x18] sm:$0xff]
  %3448 = vset.pattern.permute.xlu0 0
  %3449 = vperm.xlu0 %3448, %v3443
  %v3450 = vpop.permute.xlu0 %3449
  %3453 = vset.pattern.permute.xlu0 0
  %3454 = vperm.xlu0 %3453, %v3444
  %v3455 = vpop.permute.xlu0 %3454
  %3458 = vset.pattern.permute.xlu0 0
  %3459 = vperm.xlu0 %3458, %v3445
  %v3460 = vpop.permute.xlu0 %3459
  %3463 = vset.pattern.permute.xlu0 0
  %3464 = vperm.xlu0 %3463, %v3446
  %v3465 = vpop.permute.xlu0 %3464
  %v3467 = vld [vmem:[%s12] sm:$0xff]
  %v3468 = vld [vmem:[%s12 + $0x8] sm:$0xff]
  %v3469 = vld [vmem:[%s12 + $0x10] sm:$0xff]
  %v3470 = vld [vmem:[%s12 + $0x18] sm:$0xff]
  %3472 = vset.pattern.permute.xlu0 0
  %3473 = vperm.xlu0 %3472, %v3467
  %v3474 = vpop.permute.xlu0 %3473
  %3477 = vset.pattern.permute.xlu0 0
  %3478 = vperm.xlu0 %3477, %v3468
  %v3479 = vpop.permute.xlu0 %3478
  %3482 = vset.pattern.permute.xlu0 0
  %3483 = vperm.xlu0 %3482, %v3469
  %v3484 = vpop.permute.xlu0 %3483
  %3487 = vset.pattern.permute.xlu0 0
  %3488 = vperm.xlu0 %3487, %v3470
  %v3489 = vpop.permute.xlu0 %3488
  %s3491 = sld [smem:[#allocation3]]
  %v3492 = vmul.f32 %v3302, 0.0
  %v3493 = vmul.f32 %v3307, 0.0
  %v3494 = vmul.f32 %v3312, 0.0
  %v3495 = vmul.f32 %v3317, 0.0
  %v3496 = vmul.f32 %v3322, 0.0
  %v3497 = vmul.f32 %v3327, 0.0
  %v3498 = vmul.f32 %v3332, 0.0
  %v3499 = vmul.f32 %v3337, 0.0
  %v3500 = vmul.f32 %v3342, 0.0
  %v3501 = vmul.f32 %v3347, 0.0
  %v3502 = vmul.f32 %v3352, 0.0
  %v3503 = vmul.f32 %v3357, 0.0
  %v3504 = vadd.f32 %v3492, %v3386
  %v3505 = vadd.f32 %v3493, %v3391
  %v3506 = vadd.f32 %v3494, %v3396
  %v3507 = vadd.f32 %v3495, %v3401
  %v3508 = vadd.f32 %v3496, %v3406
  %v3509 = vadd.f32 %v3497, %v3411
  %v3510 = vadd.f32 %v3498, %v3416
  %v3511 = vadd.f32 %v3499, %v3421
  %v3512 = vadd.f32 %v3500, %v3426
  %v3513 = vadd.f32 %v3501, %v3431
  %v3514 = vadd.f32 %v3502, %v3436
  %v3515 = vadd.f32 %v3503, %v3441
  %v3517 = vsel %vm1274, %v3359, 0
  %v3520 = vsel %vm1274, %v3360, 0
  %v3523 = vsel %vm1274, %v3361, 0
  %v3526 = vsel %vm1274, %v3362, 0
  %v3529 = vsel %vm1274, %v3363, 0
  %v3532 = vsel %vm1274, %v3364, 0
  %v3535 = vsel %vm1274, %v3365, 0
  %v3538 = vsel %vm1274, %v3366, 0
  %v3541 = vsel %vm1274, %v3367, 0
  %v3544 = vsel %vm1274, %v3368, 0
  %v3547 = vsel %vm1274, %v3369, 0
  %v3550 = vsel %vm1274, %v3370, 0
  %3552 = vmatprep.subr.mxu0 0.0
  %3553 = vmatpush1.msra.mxu0 %v3283
  %3554 = vmatprep.subr.mxu0 0.0
  %3555 = vmatpush1.msra.mxu0 %v3284
  %3556 = vmatprep.subr.mxu0 0.0
  %3557 = vmatpush1.msra.mxu0 %v3285
  %3558 = vmatprep.subr.mxu0 0.0
  %3559 = vmatpush1.msra.mxu0 %v3286
  %3560 = vmatprep.subr.mxu0 0.0
  %3561 = vmatpush1.msra.mxu0 0.0
  %3562 = vmatprep.subr.mxu0 0.0
  %3563 = vmatpush1.msra.mxu0 0.0
  %3564 = vmatprep.subr.mxu0 0.0
  %3565 = vmatpush1.msra.mxu0 0.0
  %3566 = vmatprep.subr.mxu0 0.0
  %3567 = vmatpush1.msra.mxu0 0.0
  %3568 = vmatprep.subr.mxu0 0.0
  %3569 = vmatpush1.msra.mxu0 0.0
  %3570 = vmatprep.subr.mxu0 0.0
  %3571 = vmatpush1.msra.mxu0 0.0
  %3572 = vmatprep.subr.mxu0 0.0
  %3573 = vmatpush1.msra.mxu0 0.0
  %3574 = vmatprep.subr.mxu0 0.0
  %3575 = vmatpush1.msra.mxu0 0.0
  %3576 = vmatprep.subr.mxu0 0.0
  %3577 = vmatpush1.msra.mxu0 0.0
  %3578 = vmatprep.subr.mxu0 0.0
  %3579 = vmatpush1.msra.mxu0 0.0
  %3580 = vmatprep.subr.mxu0 0.0
  %3581 = vmatpush1.msra.mxu0 0.0
  %3582 = vmatprep.subr.mxu0 0.0
  %3583 = vmatpush1.msra.mxu0 0.0
  %3584 = vmatprep.subr.mxu0 0.0
  %3585 = vmatpush1.msra.mxu0 0.0
  %3586 = vmatprep.subr.mxu0 0.0
  %3587 = vmatpush1.msra.mxu0 0.0
  %3588 = vmatprep.subr.mxu0 0.0
  %3589 = vmatpush1.msra.mxu0 0.0
  %3590 = vmatprep.subr.mxu0 0.0
  %3591 = vmatpush1.msra.mxu0 0.0
  %3592 = vmatprep.subr.mxu0 0.0
  %3593 = vmatpush1.msra.mxu0 0.0
  %3594 = vmatprep.subr.mxu0 0.0
  %3595 = vmatpush1.msra.mxu0 0.0
  %3596 = vmatprep.subr.mxu0 0.0
  %3597 = vmatpush1.msra.mxu0 0.0
  %3598 = vmatprep.subr.mxu0 0.0
  %3599 = vmatpush1.msra.mxu0 0.0
  %3600 = vmatprep.subr.mxu0 0.0
  %3601 = vmatpush1.msra.mxu0 0.0
  %3602 = vmatprep.subr.mxu0 0.0
  %3603 = vmatpush1.msra.mxu0 0.0
  %3604 = vmatprep.subr.mxu0 0.0
  %3605 = vmatpush1.msra.mxu0 0.0
  %3606 = vmatprep.subr.mxu0 0.0
  %3607 = vmatpush1.msra.mxu0 0.0
  %3608 = vmatprep.subr.mxu0 0.0
  %3609 = vmatpush1.msra.mxu0 0.0
  %3610 = vmatprep.subr.mxu0 0.0
  %3611 = vmatpush1.msra.mxu0 0.0
  %3612 = vmatprep.subr.mxu0 0.0
  %3613 = vmatpush1.msra.mxu0 0.0
  %3614 = vmatprep.subr.mxu0 0.0
  %3615 = vmatpush1.msra.mxu0 0.0
  %3616 = vmatprep.mubr.f32.mxu0 0.0
  %3617 = vmatmul.mubr.f32.gmra.mrb[0].mxu0 %v3517
  %v3618 = vpop.f32.mrb[0].mxu0
  %v3619 = vadd.f32 0.0, %v3618
  %v3620 = vpop.f32.mrb[0].mxu0
  %3621 = vmatprep.mubr.f32.mxu0 0.0
  %3622 = vmatmul.mubr.f32.gmra.mrb[0].mxu0 %v3520
  %v3623 = vpop.f32.mrb[0].mxu0
  %v3624 = vadd.f32 0.0, %v3623
  %v3625 = vpop.f32.mrb[0].mxu0
  %3626 = vmatprep.mubr.f32.mxu0 0.0
  %3627 = vmatmul.mubr.f32.gmra.mrb[0].mxu0 %v3523
  %v3628 = vpop.f32.mrb[0].mxu0
  %v3629 = vadd.f32 0.0, %v3628
  %v3630 = vpop.f32.mrb[0].mxu0
  %3631 = vmatprep.mubr.f32.mxu0 0.0
  %3632 = vmatmul.mubr.f32.gmra.mrb[0].mxu0 %v3526
  %v3633 = vpop.f32.mrb[0].mxu0
  %v3634 = vadd.f32 0.0, %v3633
  %v3635 = vpop.f32.mrb[0].mxu0
  %3636 = vmatprep.mubr.f32.mxu0 0.0
  %3637 = vmatmul.mubr.f32.gmra.mrb[0].mxu0 %v3529
  %v3638 = vpop.f32.mrb[0].mxu0
  %v3639 = vadd.f32 0.0, %v3638
  %v3640 = vpop.f32.mrb[0].mxu0
  %3641 = vmatprep.mubr.f32.mxu0 0.0
  %3642 = vmatmul.mubr.f32.gmra.mrb[0].mxu0 %v3532
  %v3643 = vpop.f32.mrb[0].mxu0
  %v3644 = vadd.f32 0.0, %v3643
  %v3645 = vpop.f32.mrb[0].mxu0
  %3646 = vmatprep.mubr.f32.mxu0 0.0
  %3647 = vmatmul.mubr.f32.gmra.mrb[0].mxu0 %v3535
  %v3648 = vpop.f32.mrb[0].mxu0
  %v3649 = vadd.f32 0.0, %v3648
  %v3650 = vpop.f32.mrb[0].mxu0
  %3651 = vmatprep.mubr.f32.mxu0 0.0
  %3652 = vmatmul.mubr.f32.gmra.mrb[0].mxu0 %v3538
  %v3653 = vpop.f32.mrb[0].mxu0
  %v3654 = vadd.f32 0.0, %v3653
  %v3655 = vpop.f32.mrb[0].mxu0
  %3656 = vmatprep.mubr.f32.mxu0 0.0
  %3657 = vmatmul.mubr.f32.gmra.mrb[0].mxu0 %v3541
  %v3658 = vpop.f32.mrb[0].mxu0
  %v3659 = vadd.f32 0.0, %v3658
  %v3660 = vpop.f32.mrb[0].mxu0
  %3661 = vmatprep.mubr.f32.mxu0 0.0
  %3662 = vmatmul.mubr.f32.gmra.mrb[0].mxu0 %v3544
  %v3663 = vpop.f32.mrb[0].mxu0
  %v3664 = vadd.f32 0.0, %v3663
  %v3665 = vpop.f32.mrb[0].mxu0
  %3666 = vmatprep.mubr.f32.mxu0 0.0
  %3667 = vmatmul.mubr.f32.gmra.mrb[0].mxu0 %v3547
  %v3668 = vpop.f32.mrb[0].mxu0
  %v3669 = vadd.f32 0.0, %v3668
  %v3670 = vpop.f32.mrb[0].mxu0
  %3671 = vmatprep.mubr.f32.mxu0 0.0
  %3672 = vmatmul.mubr.f32.gmra.mrb[0].mxu0 %v3550
  %v3673 = vpop.f32.mrb[0].mxu0
  %v3674 = vadd.f32 0.0, %v3673
  %v3675 = vpop.f32.mrb[0].mxu0
  %3676 = vdwg.mxu0
  %v3677 = vadd.f32 %v3504, %v3619
  %v3678 = vadd.f32 %v3505, %v3624
  %v3679 = vadd.f32 %v3506, %v3629
  %v3680 = vadd.f32 %v3507, %v3634
  %v3681 = vxor.u32 %v3677, 2147483648
  %v3682 = vxor.u32 %v3678, 2147483648
  %v3683 = vxor.u32 %v3679, 2147483648
  %v3684 = vxor.u32 %v3680, 2147483648
  %v3685 = vmul.f32 %v3681, 1.442695
  %v3686 = vpow.pop %v3685
  %v3687 = vmul.f32 %v3682, 1.442695
  %v3688 = vpow.pop %v3687
  %v3689 = vmul.f32 %v3683, 1.442695
  %v3690 = vpow.pop %v3689
  %v3691 = vmul.f32 %v3684, 1.442695
  %v3692 = vpow.pop %v3691
  %v3693 = vadd.f32 %v3686, 1.0
  %v3694 = vadd.f32 %v3688, 1.0
  %v3695 = vadd.f32 %v3690, 1.0
  %v3696 = vadd.f32 %v3692, 1.0
  %v3697 = vrcp.pop %v3693
  %v3698 = vmul.f32 1.0, %v3697
  %v3699 = vrcp.pop %v3694
  %v3700 = vmul.f32 1.0, %v3699
  %v3701 = vrcp.pop %v3695
  %v3702 = vmul.f32 1.0, %v3701
  %v3703 = vrcp.pop %v3696
  %v3704 = vmul.f32 1.0, %v3703
  %v3705 = vadd.f32 %v3508, %v3639
  %v3706 = vadd.f32 %v3509, %v3644
  %v3707 = vadd.f32 %v3510, %v3649
  %v3708 = vadd.f32 %v3511, %v3654
  %v3709 = vxor.u32 %v3705, 2147483648
  %v3710 = vxor.u32 %v3706, 2147483648
  %v3711 = vxor.u32 %v3707, 2147483648
  %v3712 = vxor.u32 %v3708, 2147483648
  %v3713 = vmul.f32 %v3709, 1.442695
  %v3714 = vpow.pop %v3713
  %v3715 = vmul.f32 %v3710, 1.442695
  %v3716 = vpow.pop %v3715
  %v3717 = vmul.f32 %v3711, 1.442695
  %v3718 = vpow.pop %v3717
  %v3719 = vmul.f32 %v3712, 1.442695
  %v3720 = vpow.pop %v3719
  %v3721 = vadd.f32 %v3714, 1.0
  %v3722 = vadd.f32 %v3716, 1.0
  %v3723 = vadd.f32 %v3718, 1.0
  %v3724 = vadd.f32 %v3720, 1.0
  %v3725 = vrcp.pop %v3721
  %v3726 = vmul.f32 1.0, %v3725
  %v3727 = vrcp.pop %v3722
  %v3728 = vmul.f32 1.0, %v3727
  %v3729 = vrcp.pop %v3723
  %v3730 = vmul.f32 1.0, %v3729
  %v3731 = vrcp.pop %v3724
  %v3732 = vmul.f32 1.0, %v3731
  %v3733 = vadd.f32 %v3659, %v3450
  %v3734 = vadd.f32 %v3664, %v3455
  %v3735 = vadd.f32 %v3669, %v3460
  %v3736 = vadd.f32 %v3674, %v3465
  %v3737 = vmul.f32 %v3698, %v3733
  %v3738 = vmul.f32 %v3700, %v3734
  %v3739 = vmul.f32 %v3702, %v3735
  %v3740 = vmul.f32 %v3704, %v3736
  %v3741 = vadd.f32 %v3512, %v3737
  %v3742 = vadd.f32 %v3513, %v3738
  %v3743 = vadd.f32 %v3514, %v3739
  %v3744 = vadd.f32 %v3515, %v3740
  %v3745 = vtanh.pop %v3741
  %v3746 = vtanh.pop %v3742
  %v3747 = vtanh.pop %v3743
  %v3748 = vtanh.pop %v3744
  %v3749 = vsub.f32 1.0, %v3726
  %v3750 = vsub.f32 1.0, %v3728
  %v3751 = vsub.f32 1.0, %v3730
  %v3752 = vsub.f32 1.0, %v3732
  %v3753 = vmul.f32 %v3749, %v3745
  %v3754 = vmul.f32 %v3750, %v3746
  %v3755 = vmul.f32 %v3751, %v3747
  %v3756 = vmul.f32 %v3752, %v3748
  %v3757 = vmul.f32 %v3726, %v3283
  %v3758 = vmul.f32 %v3728, %v3284
  %v3759 = vmul.f32 %v3730, %v3285
  %v3760 = vmul.f32 %v3732, %v3286
  %v3761 = vadd.f32 %v3753, %v3757
  %v3762 = vadd.f32 %v3754, %v3758
  %v3763 = vadd.f32 %v3755, %v3759
  %v3764 = vadd.f32 %v3756, %v3760
  %v3765 = vmul.f32 %v3761, %v3474
  %v3766 = vmul.f32 %v3762, %v3479
  %v3767 = vmul.f32 %v3763, %v3484
  %v3768 = vmul.f32 %v3764, %v3489
  %v3769 = vsel %vm1528, %v3765, 0.0
  %v3770 = vsel %vm1528, %v3766, 0.0
  %v3771 = vadd.f32 %v3769, %v3770
  %v3772 = vsel %vm1528, %v3767, 0.0
  %v3773 = vadd.f32 %v3771, %v3772
  %v3774 = vsel %vm1528, %v3768, 0.0
  %v3775 = vadd.f32 %v3773, %v3774
  %v3776 = vrot.slane %v3775, 4
  %v3777 = vadd.f32 %v3775, %v3776
  %v3778 = vrot.slane %v3777, 2
  %v3779 = vadd.f32 %v3777, %v3778
  %v3780 = vrot.slane %v3779, 1
  %v3781 = vadd.f32 %v3779, %v3780
  %v3782 = vstv %s3491
  %v3783 = vadd.f32 %v3781, %v3782
  %v3784 = vmul.f32 %v3302, %v3783
  %v3785 = vmul.f32 %v3307, %v3783
  %v3786 = vmul.f32 %v3312, %v3783
  %v3787 = vmul.f32 %v3317, %v3783
  %v3788 = vmul.f32 %v3322, %v3783
  %v3789 = vmul.f32 %v3327, %v3783
  %v3790 = vmul.f32 %v3332, %v3783
  %v3791 = vmul.f32 %v3337, %v3783
  %v3792 = vmul.f32 %v3342, %v3783
  %v3793 = vmul.f32 %v3347, %v3783
  %v3794 = vmul.f32 %v3352, %v3783
  %v3795 = vmul.f32 %v3357, %v3783
  %v3796 = vadd.f32 %v3784, %v3386
  %v3797 = vadd.f32 %v3785, %v3391
  %v3798 = vadd.f32 %v3786, %v3396
  %v3799 = vadd.f32 %v3787, %v3401
  %v3800 = vadd.f32 %v3788, %v3406
  %v3801 = vadd.f32 %v3789, %v3411
  %v3802 = vadd.f32 %v3790, %v3416
  %v3803 = vadd.f32 %v3791, %v3421
  %v3804 = vadd.f32 %v3792, %v3426
  %v3805 = vadd.f32 %v3793, %v3431
  %v3806 = vadd.f32 %v3794, %v3436
  %v3807 = vadd.f32 %v3795, %v3441
  %3808 = vmatprep.subr.mxu0 0.0
  %3809 = vmatpush1.msra.mxu0 %v3761
  %3810 = vmatprep.subr.mxu0 0.0
  %3811 = vmatpush1.msra.mxu0 %v3762
  %3812 = vmatprep.subr.mxu0 0.0
  %3813 = vmatpush1.msra.mxu0 %v3763
  %3814 = vmatprep.subr.mxu0 0.0
  %3815 = vmatpush1.msra.mxu0 %v3764
  %3816 = vmatprep.subr.mxu0 0.0
  %3817 = vmatpush1.msra.mxu0 0.0
  %3818 = vmatprep.subr.mxu0 0.0
  %3819 = vmatpush1.msra.mxu0 0.0
  %3820 = vmatprep.subr.mxu0 0.0
  %3821 = vmatpush1.msra.mxu0 0.0
  %3822 = vmatprep.subr.mxu0 0.0
  %3823 = vmatpush1.msra.mxu0 0.0
  %3824 = vmatprep.subr.mxu0 0.0
  %3825 = vmatpush1.msra.mxu0 0.0
  %3826 = vmatprep.subr.mxu0 0.0
  %3827 = vmatpush1.msra.mxu0 0.0
  %3828 = vmatprep.subr.mxu0 0.0
  %3829 = vmatpush1.msra.mxu0 0.0
  %3830 = vmatprep.subr.mxu0 0.0
  %3831 = vmatpush1.msra.mxu0 0.0
  %3832 = vmatprep.subr.mxu0 0.0
  %3833 = vmatpush1.msra.mxu0 0.0
  %3834 = vmatprep.subr.mxu0 0.0
  %3835 = vmatpush1.msra.mxu0 0.0
  %3836 = vmatprep.subr.mxu0 0.0
  %3837 = vmatpush1.msra.mxu0 0.0
  %3838 = vmatprep.subr.mxu0 0.0
  %3839 = vmatpush1.msra.mxu0 0.0
  %3840 = vmatprep.subr.mxu0 0.0
  %3841 = vmatpush1.msra.mxu0 0.0
  %3842 = vmatprep.subr.mxu0 0.0
  %3843 = vmatpush1.msra.mxu0 0.0
  %3844 = vmatprep.subr.mxu0 0.0
  %3845 = vmatpush1.msra.mxu0 0.0
  %3846 = vmatprep.subr.mxu0 0.0
  %3847 = vmatpush1.msra.mxu0 0.0
  %3848 = vmatprep.subr.mxu0 0.0
  %3849 = vmatpush1.msra.mxu0 0.0
  %3850 = vmatprep.subr.mxu0 0.0
  %3851 = vmatpush1.msra.mxu0 0.0
  %3852 = vmatprep.subr.mxu0 0.0
  %3853 = vmatpush1.msra.mxu0 0.0
  %3854 = vmatprep.subr.mxu0 0.0
  %3855 = vmatpush1.msra.mxu0 0.0
  %3856 = vmatprep.subr.mxu0 0.0
  %3857 = vmatpush1.msra.mxu0 0.0
  %3858 = vmatprep.subr.mxu0 0.0
  %3859 = vmatpush1.msra.mxu0 0.0
  %3860 = vmatprep.subr.mxu0 0.0
  %3861 = vmatpush1.msra.mxu0 0.0
  %3862 = vmatprep.subr.mxu0 0.0
  %3863 = vmatpush1.msra.mxu0 0.0
  %3864 = vmatprep.subr.mxu0 0.0
  %3865 = vmatpush1.msra.mxu0 0.0
  %3866 = vmatprep.subr.mxu0 0.0
  %3867 = vmatpush1.msra.mxu0 0.0
  %3868 = vmatprep.subr.mxu0 0.0
  %3869 = vmatpush1.msra.mxu0 0.0
  %3870 = vmatprep.subr.mxu0 0.0
  %3871 = vmatpush1.msra.mxu0 0.0
  %3872 = vmatprep.mubr.f32.mxu0 0.0
  %3873 = vmatmul.mubr.f32.gmra.mrb[0].mxu0 %v3517
  %v3874 = vpop.f32.mrb[0].mxu0
  %v3875 = vadd.f32 0.0, %v3874
  %v3876 = vpop.f32.mrb[0].mxu0
  %3877 = vmatprep.mubr.f32.mxu0 0.0
  %3878 = vmatmul.mubr.f32.gmra.mrb[0].mxu0 %v3520
  %v3879 = vpop.f32.mrb[0].mxu0
  %v3880 = vadd.f32 0.0, %v3879
  %v3881 = vpop.f32.mrb[0].mxu0
  %3882 = vmatprep.mubr.f32.mxu0 0.0
  %3883 = vmatmul.mubr.f32.gmra.mrb[0].mxu0 %v3523
  %v3884 = vpop.f32.mrb[0].mxu0
  %v3885 = vadd.f32 0.0, %v3884
  %v3886 = vpop.f32.mrb[0].mxu0
  %3887 = vmatprep.mubr.f32.mxu0 0.0
  %3888 = vmatmul.mubr.f32.gmra.mrb[0].mxu0 %v3526
  %v3889 = vpop.f32.mrb[0].mxu0
  %v3890 = vadd.f32 0.0, %v3889
  %v3891 = vpop.f32.mrb[0].mxu0
  %3892 = vmatprep.mubr.f32.mxu0 0.0
  %3893 = vmatmul.mubr.f32.gmra.mrb[0].mxu0 %v3529
  %v3894 = vpop.f32.mrb[0].mxu0
  %v3895 = vadd.f32 0.0, %v3894
  %v3896 = vpop.f32.mrb[0].mxu0
  %3897 = vmatprep.mubr.f32.mxu0 0.0
  %3898 = vmatmul.mubr.f32.gmra.mrb[0].mxu0 %v3532
  %v3899 = vpop.f32.mrb[0].mxu0
  %v3900 = vadd.f32 0.0, %v3899
  %v3901 = vpop.f32.mrb[0].mxu0
  %3902 = vmatprep.mubr.f32.mxu0 0.0
  %3903 = vmatmul.mubr.f32.gmra.mrb[0].mxu0 %v3535
  %v3904 = vpop.f32.mrb[0].mxu0
  %v3905 = vadd.f32 0.0, %v3904
  %v3906 = vpop.f32.mrb[0].mxu0
  %3907 = vmatprep.mubr.f32.mxu0 0.0
  %3908 = vmatmul.mubr.f32.gmra.mrb[0].mxu0 %v3538
  %v3909 = vpop.f32.mrb[0].mxu0
  %v3910 = vadd.f32 0.0, %v3909
  %v3911 = vpop.f32.mrb[0].mxu0
  %3912 = vmatprep.mubr.f32.mxu0 0.0
  %3913 = vmatmul.mubr.f32.gmra.mrb[0].mxu0 %v3541
  %v3914 = vpop.f32.mrb[0].mxu0
  %v3915 = vadd.f32 0.0, %v3914
  %v3916 = vpop.f32.mrb[0].mxu0
  %3917 = vmatprep.mubr.f32.mxu0 0.0
  %3918 = vmatmul.mubr.f32.gmra.mrb[0].mxu0 %v3544
  %v3919 = vpop.f32.mrb[0].mxu0
  %v3920 = vadd.f32 0.0, %v3919
  %v3921 = vpop.f32.mrb[0].mxu0
  %3922 = vmatprep.mubr.f32.mxu0 0.0
  %3923 = vmatmul.mubr.f32.gmra.mrb[0].mxu0 %v3547
  %v3924 = vpop.f32.mrb[0].mxu0
  %v3925 = vadd.f32 0.0, %v3924
  %v3926 = vpop.f32.mrb[0].mxu0
  %3927 = vmatprep.mubr.f32.mxu0 0.0
  %3928 = vmatmul.mubr.f32.gmra.mrb[0].mxu0 %v3550
  %v3929 = vpop.f32.mrb[0].mxu0
  %v3930 = vadd.f32 0.0, %v3929
  %v3931 = vpop.f32.mrb[0].mxu0
  %3932 = vdwg.mxu0
  %v3933 = vadd.f32 %v3796, %v3875
  %v3934 = vadd.f32 %v3797, %v3880
  %v3935 = vadd.f32 %v3798, %v3885
  %v3936 = vadd.f32 %v3799, %v3890
  %v3937 = vxor.u32 %v3933, 2147483648
  %v3938 = vxor.u32 %v3934, 2147483648
  %v3939 = vxor.u32 %v3935, 2147483648
  %v3940 = vxor.u32 %v3936, 2147483648
  %v3941 = vmul.f32 %v3937, 1.442695
  %v3942 = vpow.pop %v3941
  %v3943 = vmul.f32 %v3938, 1.442695
  %v3944 = vpow.pop %v3943
  %v3945 = vmul.f32 %v3939, 1.442695
  %v3946 = vpow.pop %v3945
  %v3947 = vmul.f32 %v3940, 1.442695
  %v3948 = vpow.pop %v3947
  %v3949 = vadd.f32 %v3942, 1.0
  %v3950 = vadd.f32 %v3944, 1.0
  %v3951 = vadd.f32 %v3946, 1.0
  %v3952 = vadd.f32 %v3948, 1.0
  %v3953 = vrcp.pop %v3949
  %v3954 = vmul.f32 1.0, %v3953
  %v3955 = vrcp.pop %v3950
  %v3956 = vmul.f32 1.0, %v3955
  %v3957 = vrcp.pop %v3951
  %v3958 = vmul.f32 1.0, %v3957
  %v3959 = vrcp.pop %v3952
  %v3960 = vmul.f32 1.0, %v3959
  %v3961 = vadd.f32 %v3800, %v3895
  %v3962 = vadd.f32 %v3801, %v3900
  %v3963 = vadd.f32 %v3802, %v3905
  %v3964 = vadd.f32 %v3803, %v3910
  %v3965 = vxor.u32 %v3961, 2147483648
  %v3966 = vxor.u32 %v3962, 2147483648
  %v3967 = vxor.u32 %v3963, 2147483648
  %v3968 = vxor.u32 %v3964, 2147483648
  %v3969 = vmul.f32 %v3965, 1.442695
  %v3970 = vpow.pop %v3969
  %v3971 = vmul.f32 %v3966, 1.442695
  %v3972 = vpow.pop %v3971
  %v3973 = vmul.f32 %v3967, 1.442695
  %v3974 = vpow.pop %v3973
  %v3975 = vmul.f32 %v3968, 1.442695
  %v3976 = vpow.pop %v3975
  %v3977 = vadd.f32 %v3970, 1.0
  %v3978 = vadd.f32 %v3972, 1.0
  %v3979 = vadd.f32 %v3974, 1.0
  %v3980 = vadd.f32 %v3976, 1.0
  %v3981 = vrcp.pop %v3977
  %v3982 = vmul.f32 1.0, %v3981
  %v3983 = vrcp.pop %v3978
  %v3984 = vmul.f32 1.0, %v3983
  %v3985 = vrcp.pop %v3979
  %v3986 = vmul.f32 1.0, %v3985
  %v3987 = vrcp.pop %v3980
  %v3988 = vmul.f32 1.0, %v3987
  %v3989 = vadd.f32 %v3915, %v3450
  %v3990 = vadd.f32 %v3920, %v3455
  %v3991 = vadd.f32 %v3925, %v3460
  %v3992 = vadd.f32 %v3930, %v3465
  %v3993 = vmul.f32 %v3954, %v3989
  %v3994 = vmul.f32 %v3956, %v3990
  %v3995 = vmul.f32 %v3958, %v3991
  %v3996 = vmul.f32 %v3960, %v3992
  %v3997 = vadd.f32 %v3804, %v3993
  %v3998 = vadd.f32 %v3805, %v3994
  %v3999 = vadd.f32 %v3806, %v3995
  %v4000 = vadd.f32 %v3807, %v3996
  %v4001 = vtanh.pop %v3997
  %v4002 = vtanh.pop %v3998
  %v4003 = vtanh.pop %v3999
  %v4004 = vtanh.pop %v4000
  %v4005 = vsub.f32 1.0, %v3982
  %v4006 = vsub.f32 1.0, %v3984
  %v4007 = vsub.f32 1.0, %v3986
  %v4008 = vsub.f32 1.0, %v3988
  %v4009 = vmul.f32 %v4005, %v4001
  %v4010 = vmul.f32 %v4006, %v4002
  %v4011 = vmul.f32 %v4007, %v4003
  %v4012 = vmul.f32 %v4008, %v4004
  %v4013 = vmul.f32 %v3982, %v3761
  %v4014 = vmul.f32 %v3984, %v3762
  %v4015 = vmul.f32 %v3986, %v3763
  %v4016 = vmul.f32 %v3988, %v3764
  %v4017 = vadd.f32 %v4009, %v4013
  %v4018 = vadd.f32 %v4010, %v4014
  %v4019 = vadd.f32 %v4011, %v4015
  %v4020 = vadd.f32 %v4012, %v4016
  %v4021 = vmul.f32 %v4017, %v3474
  %v4022 = vmul.f32 %v4018, %v3479
  %v4023 = vmul.f32 %v4019, %v3484
  %v4024 = vmul.f32 %v4020, %v3489
  %v4025 = vsel %vm1528, %v4021, 0.0
  %v4026 = vsel %vm1528, %v4022, 0.0
  %v4027 = vadd.f32 %v4025, %v4026
  %v4028 = vsel %vm1528, %v4023, 0.0
  %v4029 = vadd.f32 %v4027, %v4028
  %v4030 = vsel %vm1528, %v4024, 0.0
  %v4031 = vadd.f32 %v4029, %v4030
  %v4032 = vrot.slane %v4031, 4
  %v4033 = vadd.f32 %v4031, %v4032
  %v4034 = vrot.slane %v4033, 2
  %v4035 = vadd.f32 %v4033, %v4034
  %v4036 = vrot.slane %v4035, 1
  %v4037 = vadd.f32 %v4035, %v4036
  %v4038 = vadd.f32 %v4037, %v3782
  %v4039 = vmul.f32 %v3302, %v4038
  %v4040 = vmul.f32 %v3307, %v4038
  %v4041 = vmul.f32 %v3312, %v4038
  %v4042 = vmul.f32 %v3317, %v4038
  %v4043 = vmul.f32 %v3322, %v4038
  %v4044 = vmul.f32 %v3327, %v4038
  %v4045 = vmul.f32 %v3332, %v4038
  %v4046 = vmul.f32 %v3337, %v4038
  %v4047 = vmul.f32 %v3342, %v4038
  %v4048 = vmul.f32 %v3347, %v4038
  %v4049 = vmul.f32 %v3352, %v4038
  %v4050 = vmul.f32 %v3357, %v4038
  %v4051 = vadd.f32 %v4039, %v3386
  %v4052 = vadd.f32 %v4040, %v3391
  %v4053 = vadd.f32 %v4041, %v3396
  %v4054 = vadd.f32 %v4042, %v3401
  %v4055 = vadd.f32 %v4043, %v3406
  %v4056 = vadd.f32 %v4044, %v3411
  %v4057 = vadd.f32 %v4045, %v3416
  %v4058 = vadd.f32 %v4046, %v3421
  %v4059 = vadd.f32 %v4047, %v3426
  %v4060 = vadd.f32 %v4048, %v3431
  %v4061 = vadd.f32 %v4049, %v3436
  %v4062 = vadd.f32 %v4050, %v3441
  %4063 = vmatprep.subr.mxu0 0.0
  %4064 = vmatpush1.msra.mxu0 %v4017
  %4065 = vmatprep.subr.mxu0 0.0
  %4066 = vmatpush1.msra.mxu0 %v4018
  %4067 = vmatprep.subr.mxu0 0.0
  %4068 = vmatpush1.msra.mxu0 %v4019
  %4069 = vmatprep.subr.mxu0 0.0
  %4070 = vmatpush1.msra.mxu0 %v4020
  %4071 = vmatprep.subr.mxu0 0.0
  %4072 = vmatpush1.msra.mxu0 0.0
  %4073 = vmatprep.subr.mxu0 0.0
  %4074 = vmatpush1.msra.mxu0 0.0
  %4075 = vmatprep.subr.mxu0 0.0
  %4076 = vmatpush1.msra.mxu0 0.0
  %4077 = vmatprep.subr.mxu0 0.0
  %4078 = vmatpush1.msra.mxu0 0.0
  %4079 = vmatprep.subr.mxu0 0.0
  %4080 = vmatpush1.msra.mxu0 0.0
  %4081 = vmatprep.subr.mxu0 0.0
  %4082 = vmatpush1.msra.mxu0 0.0
  %4083 = vmatprep.subr.mxu0 0.0
  %4084 = vmatpush1.msra.mxu0 0.0
  %4085 = vmatprep.subr.mxu0 0.0
  %4086 = vmatpush1.msra.mxu0 0.0
  %4087 = vmatprep.subr.mxu0 0.0
  %4088 = vmatpush1.msra.mxu0 0.0
  %4089 = vmatprep.subr.mxu0 0.0
  %4090 = vmatpush1.msra.mxu0 0.0
  %4091 = vmatprep.subr.mxu0 0.0
  %4092 = vmatpush1.msra.mxu0 0.0
  %4093 = vmatprep.subr.mxu0 0.0
  %4094 = vmatpush1.msra.mxu0 0.0
  %4095 = vmatprep.subr.mxu0 0.0
  %4096 = vmatpush1.msra.mxu0 0.0
  %4097 = vmatprep.subr.mxu0 0.0
  %4098 = vmatpush1.msra.mxu0 0.0
  %4099 = vmatprep.subr.mxu0 0.0
  %4100 = vmatpush1.msra.mxu0 0.0
  %4101 = vmatprep.subr.mxu0 0.0
  %4102 = vmatpush1.msra.mxu0 0.0
  %4103 = vmatprep.subr.mxu0 0.0
  %4104 = vmatpush1.msra.mxu0 0.0
  %4105 = vmatprep.subr.mxu0 0.0
  %4106 = vmatpush1.msra.mxu0 0.0
  %4107 = vmatprep.subr.mxu0 0.0
  %4108 = vmatpush1.msra.mxu0 0.0
  %4109 = vmatprep.subr.mxu0 0.0
  %4110 = vmatpush1.msra.mxu0 0.0
  %4111 = vmatprep.subr.mxu0 0.0
  %4112 = vmatpush1.msra.mxu0 0.0
  %4113 = vmatprep.subr.mxu0 0.0
  %4114 = vmatpush1.msra.mxu0 0.0
  %4115 = vmatprep.subr.mxu0 0.0
  %4116 = vmatpush1.msra.mxu0 0.0
  %4117 = vmatprep.subr.mxu0 0.0
  %4118 = vmatpush1.msra.mxu0 0.0
  %4119 = vmatprep.subr.mxu0 0.0
  %4120 = vmatpush1.msra.mxu0 0.0
  %4121 = vmatprep.subr.mxu0 0.0
  %4122 = vmatpush1.msra.mxu0 0.0
  %4123 = vmatprep.subr.mxu0 0.0
  %4124 = vmatpush1.msra.mxu0 0.0
  %4125 = vmatprep.subr.mxu0 0.0
  %4126 = vmatpush1.msra.mxu0 0.0
  %4127 = vmatprep.mubr.f32.mxu0 0.0
  %4128 = vmatmul.mubr.f32.gmra.mrb[0].mxu0 %v3517
  %v4129 = vpop.f32.mrb[0].mxu0
  %v4130 = vadd.f32 0.0, %v4129
  %v4131 = vpop.f32.mrb[0].mxu0
  %4132 = vmatprep.mubr.f32.mxu0 0.0
  %4133 = vmatmul.mubr.f32.gmra.mrb[0].mxu0 %v3520
  %v4134 = vpop.f32.mrb[0].mxu0
  %v4135 = vadd.f32 0.0, %v4134
  %v4136 = vpop.f32.mrb[0].mxu0
  %4137 = vmatprep.mubr.f32.mxu0 0.0
  %4138 = vmatmul.mubr.f32.gmra.mrb[0].mxu0 %v3523
  %v4139 = vpop.f32.mrb[0].mxu0
  %v4140 = vadd.f32 0.0, %v4139
  %v4141 = vpop.f32.mrb[0].mxu0
  %4142 = vmatprep.mubr.f32.mxu0 0.0
  %4143 = vmatmul.mubr.f32.gmra.mrb[0].mxu0 %v3526
  %v4144 = vpop.f32.mrb[0].mxu0
  %v4145 = vadd.f32 0.0, %v4144
  %v4146 = vpop.f32.mrb[0].mxu0
  %4147 = vmatprep.mubr.f32.mxu0 0.0
  %4148 = vmatmul.mubr.f32.gmra.mrb[0].mxu0 %v3529
  %v4149 = vpop.f32.mrb[0].mxu0
  %v4150 = vadd.f32 0.0, %v4149
  %v4151 = vpop.f32.mrb[0].mxu0
  %4152 = vmatprep.mubr.f32.mxu0 0.0
  %4153 = vmatmul.mubr.f32.gmra.mrb[0].mxu0 %v3532
  %v4154 = vpop.f32.mrb[0].mxu0
  %v4155 = vadd.f32 0.0, %v4154
  %v4156 = vpop.f32.mrb[0].mxu0
  %4157 = vmatprep.mubr.f32.mxu0 0.0
  %4158 = vmatmul.mubr.f32.gmra.mrb[0].mxu0 %v3535
  %v4159 = vpop.f32.mrb[0].mxu0
  %v4160 = vadd.f32 0.0, %v4159
  %v4161 = vpop.f32.mrb[0].mxu0
  %4162 = vmatprep.mubr.f32.mxu0 0.0
  %4163 = vmatmul.mubr.f32.gmra.mrb[0].mxu0 %v3538
  %v4164 = vpop.f32.mrb[0].mxu0
  %v4165 = vadd.f32 0.0, %v4164
  %v4166 = vpop.f32.mrb[0].mxu0
  %4167 = vmatprep.mubr.f32.mxu0 0.0
  %4168 = vmatmul.mubr.f32.gmra.mrb[0].mxu0 %v3541
  %v4169 = vpop.f32.mrb[0].mxu0
  %v4170 = vadd.f32 0.0, %v4169
  %v4171 = vpop.f32.mrb[0].mxu0
  %4172 = vmatprep.mubr.f32.mxu0 0.0
  %4173 = vmatmul.mubr.f32.gmra.mrb[0].mxu0 %v3544
  %v4174 = vpop.f32.mrb[0].mxu0
  %v4175 = vadd.f32 0.0, %v4174
  %v4176 = vpop.f32.mrb[0].mxu0
  %4177 = vmatprep.mubr.f32.mxu0 0.0
  %4178 = vmatmul.mubr.f32.gmra.mrb[0].mxu0 %v3547
  %v4179 = vpop.f32.mrb[0].mxu0
  %v4180 = vadd.f32 0.0, %v4179
  %v4181 = vpop.f32.mrb[0].mxu0
  %4182 = vmatprep.mubr.f32.mxu0 0.0
  %4183 = vmatmul.mubr.f32.gmra.mrb[0].mxu0 %v3550
  %v4184 = vpop.f32.mrb[0].mxu0
  %v4185 = vadd.f32 0.0, %v4184
  %v4186 = vpop.f32.mrb[0].mxu0
  %4187 = vdwg.mxu0
  %v4188 = vadd.f32 %v4051, %v4130
  %v4189 = vadd.f32 %v4052, %v4135
  %v4190 = vadd.f32 %v4053, %v4140
  %v4191 = vadd.f32 %v4054, %v4145
  %v4192 = vxor.u32 %v4188, 2147483648
  %v4193 = vxor.u32 %v4189, 2147483648
  %v4194 = vxor.u32 %v4190, 2147483648
  %v4195 = vxor.u32 %v4191, 2147483648
  %v4196 = vmul.f32 %v4192, 1.442695
  %v4197 = vpow.pop %v4196
  %v4198 = vmul.f32 %v4193, 1.442695
  %v4199 = vpow.pop %v4198
  %v4200 = vmul.f32 %v4194, 1.442695
  %v4201 = vpow.pop %v4200
  %v4202 = vmul.f32 %v4195, 1.442695
  %v4203 = vpow.pop %v4202
  %v4204 = vadd.f32 %v4197, 1.0
  %v4205 = vadd.f32 %v4199, 1.0
  %v4206 = vadd.f32 %v4201, 1.0
  %v4207 = vadd.f32 %v4203, 1.0
  %v4208 = vrcp.pop %v4204
  %v4209 = vmul.f32 1.0, %v4208
  %v4210 = vrcp.pop %v4205
  %v4211 = vmul.f32 1.0, %v4210
  %v4212 = vrcp.pop %v4206
  %v4213 = vmul.f32 1.0, %v4212
  %v4214 = vrcp.pop %v4207
  %v4215 = vmul.f32 1.0, %v4214
  %v4216 = vadd.f32 %v4055, %v4150
  %v4217 = vadd.f32 %v4056, %v4155
  %v4218 = vadd.f32 %v4057, %v4160
  %v4219 = vadd.f32 %v4058, %v4165
  %v4220 = vxor.u32 %v4216, 2147483648
  %v4221 = vxor.u32 %v4217, 2147483648
  %v4222 = vxor.u32 %v4218, 2147483648
  %v4223 = vxor.u32 %v4219, 2147483648
  %v4224 = vmul.f32 %v4220, 1.442695
  %v4225 = vpow.pop %v4224
  %v4226 = vmul.f32 %v4221, 1.442695
  %v4227 = vpow.pop %v4226
  %v4228 = vmul.f32 %v4222, 1.442695
  %v4229 = vpow.pop %v4228
  %v4230 = vmul.f32 %v4223, 1.442695
  %v4231 = vpow.pop %v4230
  %v4232 = vadd.f32 %v4225, 1.0
  %v4233 = vadd.f32 %v4227, 1.0
  %v4234 = vadd.f32 %v4229, 1.0
  %v4235 = vadd.f32 %v4231, 1.0
  %v4236 = vrcp.pop %v4232
  %v4237 = vmul.f32 1.0, %v4236
  %v4238 = vrcp.pop %v4233
  %v4239 = vmul.f32 1.0, %v4238
  %v4240 = vrcp.pop %v4234
  %v4241 = vmul.f32 1.0, %v4240
  %v4242 = vrcp.pop %v4235
  %v4243 = vmul.f32 1.0, %v4242
  %v4244 = vadd.f32 %v4170, %v3450
  %v4245 = vadd.f32 %v4175, %v3455
  %v4246 = vadd.f32 %v4180, %v3460
  %v4247 = vadd.f32 %v4185, %v3465
  %v4248 = vmul.f32 %v4209, %v4244
  %v4249 = vmul.f32 %v4211, %v4245
  %v4250 = vmul.f32 %v4213, %v4246
  %v4251 = vmul.f32 %v4215, %v4247
  %v4252 = vadd.f32 %v4059, %v4248
  %v4253 = vadd.f32 %v4060, %v4249
  %v4254 = vadd.f32 %v4061, %v4250
  %v4255 = vadd.f32 %v4062, %v4251
  %v4256 = vtanh.pop %v4252
  %v4257 = vtanh.pop %v4253
  %v4258 = vtanh.pop %v4254
  %v4259 = vtanh.pop %v4255
  %v4260 = vsub.f32 1.0, %v4237
  %v4261 = vsub.f32 1.0, %v4239
  %v4262 = vsub.f32 1.0, %v4241
  %v4263 = vsub.f32 1.0, %v4243
  %v4264 = vmul.f32 %v4260, %v4256
  %v4265 = vmul.f32 %v4261, %v4257
  %v4266 = vmul.f32 %v4262, %v4258
  %v4267 = vmul.f32 %v4263, %v4259
  %v4268 = vmul.f32 %v4237, %v4017
  %v4269 = vmul.f32 %v4239, %v4018
  %v4270 = vmul.f32 %v4241, %v4019
  %v4271 = vmul.f32 %v4243, %v4020
  %v4272 = vadd.f32 %v4264, %v4268
  %v4273 = vadd.f32 %v4265, %v4269
  %v4274 = vadd.f32 %v4266, %v4270
  %v4275 = vadd.f32 %v4267, %v4271
  %v4276 = vmul.f32 %v4272, %v3474
  %v4277 = vmul.f32 %v4273, %v3479
  %v4278 = vmul.f32 %v4274, %v3484
  %v4279 = vmul.f32 %v4275, %v3489
  %v4280 = vsel %vm1528, %v4276, 0.0
  %v4281 = vsel %vm1528, %v4277, 0.0
  %v4282 = vadd.f32 %v4280, %v4281
  %v4283 = vsel %vm1528, %v4278, 0.0
  %v4284 = vadd.f32 %v4282, %v4283
  %v4285 = vsel %vm1528, %v4279, 0.0
  %v4286 = vadd.f32 %v4284, %v4285
  %v4287 = vrot.slane %v4286, 4
  %v4288 = vadd.f32 %v4286, %v4287
  %v4289 = vrot.slane %v4288, 2
  %v4290 = vadd.f32 %v4288, %v4289
  %v4291 = vrot.slane %v4290, 1
  %v4292 = vadd.f32 %v4290, %v4291
  %v4293 = vadd.f32 %v4292, %v3782
  %v4294 = vmul.f32 %v3302, %v4293
  %v4295 = vmul.f32 %v3307, %v4293
  %v4296 = vmul.f32 %v3312, %v4293
  %v4297 = vmul.f32 %v3317, %v4293
  %v4298 = vmul.f32 %v3322, %v4293
  %v4299 = vmul.f32 %v3327, %v4293
  %v4300 = vmul.f32 %v3332, %v4293
  %v4301 = vmul.f32 %v3337, %v4293
  %v4302 = vmul.f32 %v3342, %v4293
  %v4303 = vmul.f32 %v3347, %v4293
  %v4304 = vmul.f32 %v3352, %v4293
  %v4305 = vmul.f32 %v3357, %v4293
  %v4306 = vadd.f32 %v4294, %v3386
  %v4307 = vadd.f32 %v4295, %v3391
  %v4308 = vadd.f32 %v4296, %v3396
  %v4309 = vadd.f32 %v4297, %v3401
  %v4310 = vadd.f32 %v4298, %v3406
  %v4311 = vadd.f32 %v4299, %v3411
  %v4312 = vadd.f32 %v4300, %v3416
  %v4313 = vadd.f32 %v4301, %v3421
  %v4314 = vadd.f32 %v4302, %v3426
  %v4315 = vadd.f32 %v4303, %v3431
  %v4316 = vadd.f32 %v4304, %v3436
  %v4317 = vadd.f32 %v4305, %v3441
  %4318 = vmatprep.subr.mxu0 0.0
  %4319 = vmatpush1.msra.mxu0 %v4272
  %4320 = vmatprep.subr.mxu0 0.0
  %4321 = vmatpush1.msra.mxu0 %v4273
  %4322 = vmatprep.subr.mxu0 0.0
  %4323 = vmatpush1.msra.mxu0 %v4274
  %4324 = vmatprep.subr.mxu0 0.0
  %4325 = vmatpush1.msra.mxu0 %v4275
  %4326 = vmatprep.subr.mxu0 0.0
  %4327 = vmatpush1.msra.mxu0 0.0
  %4328 = vmatprep.subr.mxu0 0.0
  %4329 = vmatpush1.msra.mxu0 0.0
  %4330 = vmatprep.subr.mxu0 0.0
  %4331 = vmatpush1.msra.mxu0 0.0
  %4332 = vmatprep.subr.mxu0 0.0
  %4333 = vmatpush1.msra.mxu0 0.0
  %4334 = vmatprep.subr.mxu0 0.0
  %4335 = vmatpush1.msra.mxu0 0.0
  %4336 = vmatprep.subr.mxu0 0.0
  %4337 = vmatpush1.msra.mxu0 0.0
  %4338 = vmatprep.subr.mxu0 0.0
  %4339 = vmatpush1.msra.mxu0 0.0
  %4340 = vmatprep.subr.mxu0 0.0
  %4341 = vmatpush1.msra.mxu0 0.0
  %4342 = vmatprep.subr.mxu0 0.0
  %4343 = vmatpush1.msra.mxu0 0.0
  %4344 = vmatprep.subr.mxu0 0.0
  %4345 = vmatpush1.msra.mxu0 0.0
  %4346 = vmatprep.subr.mxu0 0.0
  %4347 = vmatpush1.msra.mxu0 0.0
  %4348 = vmatprep.subr.mxu0 0.0
  %4349 = vmatpush1.msra.mxu0 0.0
  %4350 = vmatprep.subr.mxu0 0.0
  %4351 = vmatpush1.msra.mxu0 0.0
  %4352 = vmatprep.subr.mxu0 0.0
  %4353 = vmatpush1.msra.mxu0 0.0
  %4354 = vmatprep.subr.mxu0 0.0
  %4355 = vmatpush1.msra.mxu0 0.0
  %4356 = vmatprep.subr.mxu0 0.0
  %4357 = vmatpush1.msra.mxu0 0.0
  %4358 = vmatprep.subr.mxu0 0.0
  %4359 = vmatpush1.msra.mxu0 0.0
  %4360 = vmatprep.subr.mxu0 0.0
  %4361 = vmatpush1.msra.mxu0 0.0
  %4362 = vmatprep.subr.mxu0 0.0
  %4363 = vmatpush1.msra.mxu0 0.0
  %4364 = vmatprep.subr.mxu0 0.0
  %4365 = vmatpush1.msra.mxu0 0.0
  %4366 = vmatprep.subr.mxu0 0.0
  %4367 = vmatpush1.msra.mxu0 0.0
  %4368 = vmatprep.subr.mxu0 0.0
  %4369 = vmatpush1.msra.mxu0 0.0
  %4370 = vmatprep.subr.mxu0 0.0
  %4371 = vmatpush1.msra.mxu0 0.0
  %4372 = vmatprep.subr.mxu0 0.0
  %4373 = vmatpush1.msra.mxu0 0.0
  %4374 = vmatprep.subr.mxu0 0.0
  %4375 = vmatpush1.msra.mxu0 0.0
  %4376 = vmatprep.subr.mxu0 0.0
  %4377 = vmatpush1.msra.mxu0 0.0
  %4378 = vmatprep.subr.mxu0 0.0
  %4379 = vmatpush1.msra.mxu0 0.0
  %4380 = vmatprep.subr.mxu0 0.0
  %4381 = vmatpush1.msra.mxu0 0.0
  %4382 = vmatprep.mubr.f32.mxu0 0.0
  %4383 = vmatmul.mubr.f32.gmra.mrb[0].mxu0 %v3517
  %v4384 = vpop.f32.mrb[0].mxu0
  %v4385 = vadd.f32 0.0, %v4384
  %v4386 = vpop.f32.mrb[0].mxu0
  %4387 = vmatprep.mubr.f32.mxu0 0.0
  %4388 = vmatmul.mubr.f32.gmra.mrb[0].mxu0 %v3520
  %v4389 = vpop.f32.mrb[0].mxu0
  %v4390 = vadd.f32 0.0, %v4389
  %v4391 = vpop.f32.mrb[0].mxu0
  %4392 = vmatprep.mubr.f32.mxu0 0.0
  %4393 = vmatmul.mubr.f32.gmra.mrb[0].mxu0 %v3523
  %v4394 = vpop.f32.mrb[0].mxu0
  %v4395 = vadd.f32 0.0, %v4394
  %v4396 = vpop.f32.mrb[0].mxu0
  %4397 = vmatprep.mubr.f32.mxu0 0.0
  %4398 = vmatmul.mubr.f32.gmra.mrb[0].mxu0 %v3526
  %v4399 = vpop.f32.mrb[0].mxu0
  %v4400 = vadd.f32 0.0, %v4399
  %v4401 = vpop.f32.mrb[0].mxu0
  %4402 = vmatprep.mubr.f32.mxu0 0.0
  %4403 = vmatmul.mubr.f32.gmra.mrb[0].mxu0 %v3529
  %v4404 = vpop.f32.mrb[0].mxu0
  %v4405 = vadd.f32 0.0, %v4404
  %v4406 = vpop.f32.mrb[0].mxu0
  %4407 = vmatprep.mubr.f32.mxu0 0.0
  %4408 = vmatmul.mubr.f32.gmra.mrb[0].mxu0 %v3532
  %v4409 = vpop.f32.mrb[0].mxu0
  %v4410 = vadd.f32 0.0, %v4409
  %v4411 = vpop.f32.mrb[0].mxu0
  %4412 = vmatprep.mubr.f32.mxu0 0.0
  %4413 = vmatmul.mubr.f32.gmra.mrb[0].mxu0 %v3535
  %v4414 = vpop.f32.mrb[0].mxu0
  %v4415 = vadd.f32 0.0, %v4414
  %v4416 = vpop.f32.mrb[0].mxu0
  %4417 = vmatprep.mubr.f32.mxu0 0.0
  %4418 = vmatmul.mubr.f32.gmra.mrb[0].mxu0 %v3538
  %v4419 = vpop.f32.mrb[0].mxu0
  %v4420 = vadd.f32 0.0, %v4419
  %v4421 = vpop.f32.mrb[0].mxu0
  %4422 = vmatprep.mubr.f32.mxu0 0.0
  %4423 = vmatmul.mubr.f32.gmra.mrb[0].mxu0 %v3541
  %v4424 = vpop.f32.mrb[0].mxu0
  %v4425 = vadd.f32 0.0, %v4424
  %v4426 = vpop.f32.mrb[0].mxu0
  %4427 = vmatprep.mubr.f32.mxu0 0.0
  %4428 = vmatmul.mubr.f32.gmra.mrb[0].mxu0 %v3544
  %v4429 = vpop.f32.mrb[0].mxu0
  %v4430 = vadd.f32 0.0, %v4429
  %v4431 = vpop.f32.mrb[0].mxu0
  %4432 = vmatprep.mubr.f32.mxu0 0.0
  %4433 = vmatmul.mubr.f32.gmra.mrb[0].mxu0 %v3547
  %v4434 = vpop.f32.mrb[0].mxu0
  %v4435 = vadd.f32 0.0, %v4434
  %v4436 = vpop.f32.mrb[0].mxu0
  %4437 = vmatprep.mubr.f32.mxu0 0.0
  %4438 = vmatmul.mubr.f32.gmra.mrb[0].mxu0 %v3550
  %v4439 = vpop.f32.mrb[0].mxu0
  %v4440 = vadd.f32 0.0, %v4439
  %v4441 = vpop.f32.mrb[0].mxu0
  %4442 = vdwg.mxu0
  %v4443 = vadd.f32 %v4306, %v4385
  %v4444 = vadd.f32 %v4307, %v4390
  %v4445 = vadd.f32 %v4308, %v4395
  %v4446 = vadd.f32 %v4309, %v4400
  %v4447 = vxor.u32 %v4443, 2147483648
  %v4448 = vxor.u32 %v4444, 2147483648
  %v4449 = vxor.u32 %v4445, 2147483648
  %v4450 = vxor.u32 %v4446, 2147483648
  %v4451 = vmul.f32 %v4447, 1.442695
  %v4452 = vpow.pop %v4451
  %v4453 = vmul.f32 %v4448, 1.442695
  %v4454 = vpow.pop %v4453
  %v4455 = vmul.f32 %v4449, 1.442695
  %v4456 = vpow.pop %v4455
  %v4457 = vmul.f32 %v4450, 1.442695
  %v4458 = vpow.pop %v4457
  %v4459 = vadd.f32 %v4452, 1.0
  %v4460 = vadd.f32 %v4454, 1.0
  %v4461 = vadd.f32 %v4456, 1.0
  %v4462 = vadd.f32 %v4458, 1.0
  %v4463 = vrcp.pop %v4459
  %v4464 = vmul.f32 1.0, %v4463
  %v4465 = vrcp.pop %v4460
  %v4466 = vmul.f32 1.0, %v4465
  %v4467 = vrcp.pop %v4461
  %v4468 = vmul.f32 1.0, %v4467
  %v4469 = vrcp.pop %v4462
  %v4470 = vmul.f32 1.0, %v4469
  %v4471 = vadd.f32 %v4310, %v4405
  %v4472 = vadd.f32 %v4311, %v4410
  %v4473 = vadd.f32 %v4312, %v4415
  %v4474 = vadd.f32 %v4313, %v4420
  %v4475 = vxor.u32 %v4471, 2147483648
  %v4476 = vxor.u32 %v4472, 2147483648
  %v4477 = vxor.u32 %v4473, 2147483648
  %v4478 = vxor.u32 %v4474, 2147483648
  %v4479 = vmul.f32 %v4475, 1.442695
  %v4480 = vpow.pop %v4479
  %v4481 = vmul.f32 %v4476, 1.442695
  %v4482 = vpow.pop %v4481
  %v4483 = vmul.f32 %v4477, 1.442695
  %v4484 = vpow.pop %v4483
  %v4485 = vmul.f32 %v4478, 1.442695
  %v4486 = vpow.pop %v4485
  %v4487 = vadd.f32 %v4480, 1.0
  %v4488 = vadd.f32 %v4482, 1.0
  %v4489 = vadd.f32 %v4484, 1.0
  %v4490 = vadd.f32 %v4486, 1.0
  %v4491 = vrcp.pop %v4487
  %v4492 = vmul.f32 1.0, %v4491
  %v4493 = vrcp.pop %v4488
  %v4494 = vmul.f32 1.0, %v4493
  %v4495 = vrcp.pop %v4489
  %v4496 = vmul.f32 1.0, %v4495
  %v4497 = vrcp.pop %v4490
  %v4498 = vmul.f32 1.0, %v4497
  %v4499 = vadd.f32 %v4425, %v3450
  %v4500 = vadd.f32 %v4430, %v3455
  %v4501 = vadd.f32 %v4435, %v3460
  %v4502 = vadd.f32 %v4440, %v3465
  %v4503 = vmul.f32 %v4464, %v4499
  %v4504 = vmul.f32 %v4466, %v4500
  %v4505 = vmul.f32 %v4468, %v4501
  %v4506 = vmul.f32 %v4470, %v4502
  %v4507 = vadd.f32 %v4314, %v4503
  %v4508 = vadd.f32 %v4315, %v4504
  %v4509 = vadd.f32 %v4316, %v4505
  %v4510 = vadd.f32 %v4317, %v4506
  %v4511 = vtanh.pop %v4507
  %v4512 = vtanh.pop %v4508
  %v4513 = vtanh.pop %v4509
  %v4514 = vtanh.pop %v4510
  %v4515 = vsub.f32 1.0, %v4492
  %v4516 = vsub.f32 1.0, %v4494
  %v4517 = vsub.f32 1.0, %v4496
  %v4518 = vsub.f32 1.0, %v4498
  %v4519 = vmul.f32 %v4515, %v4511
  %v4520 = vmul.f32 %v4516, %v4512
  %v4521 = vmul.f32 %v4517, %v4513
  %v4522 = vmul.f32 %v4518, %v4514
  %v4523 = vmul.f32 %v4492, %v4272
  %v4524 = vmul.f32 %v4494, %v4273
  %v4525 = vmul.f32 %v4496, %v4274
  %v4526 = vmul.f32 %v4498, %v4275
  %v4527 = vadd.f32 %v4519, %v4523
  %v4528 = vadd.f32 %v4520, %v4524
  %v4529 = vadd.f32 %v4521, %v4525
  %v4530 = vadd.f32 %v4522, %v4526
  %v4531 = vmul.f32 %v4527, %v3474
  %v4532 = vmul.f32 %v4528, %v3479
  %v4533 = vmul.f32 %v4529, %v3484
  %v4534 = vmul.f32 %v4530, %v3489
  %v4535 = vsel %vm1528, %v4531, 0.0
  %v4536 = vsel %vm1528, %v4532, 0.0
  %v4537 = vadd.f32 %v4535, %v4536
  %v4538 = vsel %vm1528, %v4533, 0.0
  %v4539 = vadd.f32 %v4537, %v4538
  %v4540 = vsel %vm1528, %v4534, 0.0
  %v4541 = vadd.f32 %v4539, %v4540
  %v4542 = vrot.slane %v4541, 4
  %v4543 = vadd.f32 %v4541, %v4542
  %v4544 = vrot.slane %v4543, 2
  %v4545 = vadd.f32 %v4543, %v4544
  %v4546 = vrot.slane %v4545, 1
  %v4547 = vadd.f32 %v4545, %v4546
  %v4548 = vadd.f32 %v4547, %v3782
  %v4549 = vsel %vm3152, %v3783, %v4038
  %v4550 = vsel %vm3154, %v4549, %v4293
  %v4551 = vsel %vm3156, %v4550, %v4548
  %vm4552 = vcmask 11264
  %4553 = vst.msk [vmem:[%s14] sm:$0xf] %vm4552, %v4551
  // Predicated region
  $region58: #{tpu_custom_call.1} parent=0 // pred_check
    _
  $region59: #{tpu_custom_call.1} parent=0 // pred_check_branch
    %4555 = sbr.rel (0) target = $region61
  $region60: #{tpu_custom_call.1} parent=0 // pred_region
    _
  $region61: #{tpu_custom_call.1} parent=0 // pred_fallthru
    _
  // Predicated region
  $region62: #{tpu_custom_call.1} parent=0 // pred_check
    _
  $region63: #{tpu_custom_call.1} parent=0 // pred_check_branch
    %4557 = sbr.rel (0) target = $region65
  $region64: #{tpu_custom_call.1} parent=0 // pred_region
    _
  $region65: #{tpu_custom_call.1} parent=0 // pred_fallthru
    _
  // Predicated region
  $region66: #{tpu_custom_call.1} parent=0 // pred_check
    _
  $region67: #{tpu_custom_call.1} parent=0 // pred_check_branch
    %4559 = sbr.rel (0) target = $region69
  $region68: #{tpu_custom_call.1} parent=0 // pred_region
    _
  $region69: #{tpu_custom_call.1} parent=0 // pred_fallthru
    _
  // Predicated region
  $region70: #{tpu_custom_call.1} parent=0 // pred_check
    _
  $region71: #{tpu_custom_call.1} parent=0 // pred_check_branch
    %4561 = sbr.rel (0) target = $region73
  $region72: #{tpu_custom_call.1} parent=0 // pred_region
    _
  $region73: #{tpu_custom_call.1} parent=0 // pred_fallthru
    _
  // Predicated region
  $region74: #{tpu_custom_call.1} parent=0 // pred_check
    _
  $region75: #{tpu_custom_call.1} parent=0 // pred_check_branch
    %4563 = sbr.rel (0) target = $region77
  $region76: #{tpu_custom_call.1} parent=0 // pred_region
    _
  $region77: #{tpu_custom_call.1} parent=0 // pred_fallthru
    _
  // Predicated region
  $region78: #{tpu_custom_call.1} parent=0 // pred_check
    _
  $region79: #{tpu_custom_call.1} parent=0 // pred_check_branch
    %4565 = sbr.rel (0) target = $region81
  $region80: #{tpu_custom_call.1} parent=0 // pred_region
    _
  $region81: #{tpu_custom_call.1} parent=0 // pred_fallthru
    _

</llo_original>
